<compile_context>
chip_gen: v7x
topology: tpu7x:2x2x1
jax: 0.10.0
libtpu: 0.0.40
codegen_flags: <defaults>
</compile_context>

<pallas_src>
import functools

import jax
import jax.numpy as jnp
import numpy as np
from jax.experimental import pallas as pl
from jax.experimental.pallas import tpu as pltpu


def _ppeg_kernel(xp_ref, w_ref, b_ref, out_ref, *, TH, W, K):
    """One (batch, row-tile, channel-tile) block.

    xp_ref : (TH+K-1, W+K-1, CT)  halo/zero padded input window (native dtype)
    w_ref  : (K*K, 1, CT)         folded depthwise weights, tap-major (fp32)
    b_ref  : (1, CT)              summed bias (fp32)
    out_ref: (TH, W, CT)          output tile (native dtype)
    """
    CT = out_ref.shape[-1]
    xp = xp_ref[...].astype(jnp.float32)          # fp32 accumulate path

    # Accumulator starts at the bias (saves a final add / extra output pass).
    acc = jnp.broadcast_to(b_ref[...], (TH, W, CT))

    for dx in range(K):
        # One W-axis (sublane) shift per dx — 7 total instead of 42 misaligned
        # slices.  (pltpu.roll on the XLU slot is an alternative; plain slice
        # kept for portability.)
        x_dx = xp[:, dx:dx + W, :]                # (TH+K-1, W, CT)
        for dy in range(K):
            # Slice along the outermost H axis only: no lane/sublane movement.
            acc = acc + x_dx[dy:dy + TH, :, :] * w_ref[dy * K + dx]

    out_ref[...] = acc.astype(out_ref.dtype)


def ppeg_forward(x, w7, b7, w5, b5, w3, b3):
    """PPEG.forward (conv_1d=False, bias=True), eval semantics."""
    B, N, C = x.shape
    H = W = int(np.ceil(np.sqrt(N)))
    add_length = H * W - N
    x_ext = jnp.concatenate([x, x[:, :add_length, :]], axis=1) if add_length > 0 else x
    if H < 7:
        H = W = 7
        zero_pad = H * W - (N + add_length)
        x_ext = jnp.concatenate(
            [x_ext, jnp.zeros((B, zero_pad, C), x.dtype)], axis=1)
        add_length += zero_pad

    # token index hw = h*W + w  ->  NHWC image (channels last / lane-dense),
    # kept in the input's native dtype.
    img = x_ext.reshape(B, H, W, C)

    K = 7
    P = K // 2
    Wp = W + 2 * P

    # ---- Fold 7x7 + 5x5 + 3x3 depthwise convs + identity into one 7x7 conv.
    w7c = w7[:, 0].astype(jnp.float32)                               # (C, 7, 7)
    w5c = jnp.pad(w5[:, 0].astype(jnp.float32), ((0, 0), (1, 1), (1, 1)))
    w3c = jnp.pad(w3[:, 0].astype(jnp.float32), ((0, 0), (2, 2), (2, 2)))
    ident = jnp.zeros((K, K), jnp.float32).at[P, P].set(1.0)
    w_eff = w7c + w5c + w3c + ident[None]                            # (C, 7, 7)
    w_eff = jnp.transpose(w_eff, (1, 2, 0)).reshape(K * K, 1, C)     # tap-major
    bias_tot = (b7 + b5 + b3).reshape(1, C).astype(jnp.float32)

    # ---- Tiling choices.
    TH = H if H <= 32 else 16                      # row tile (demo: whole image)
    nH = (H + TH - 1) // TH
    H_pad = nH * TH
    CT = 128 if (C % 128 == 0) else C              # lane-dense channel tile
    nC = C // CT

    # Zero-pad once (rows also padded up to the row-tile multiple); halo row
    # slabs are stacked along a new tile axis so plain Blocked BlockSpecs can
    # pipeline them (overlapping windows can't be expressed by blocked maps).
    xp = jnp.pad(img, ((0, 0), (P, H_pad - H + P), (P, P), (0, 0)))
    if nH == 1:
        halos = xp[:, None]                                          # (B,1,H+6,Wp,C)
    else:
        halos = jnp.stack(
            [xp[:, r * TH: r * TH + TH + 2 * P] for r in range(nH)],
            axis=1)                                                   # (B,nH,TH+6,Wp,C)

    kernel = functools.partial(_ppeg_kernel, TH=TH, W=W, K=K)

    out_img = pl.pallas_call(
        kernel,
        out_shape=jax.ShapeDtypeStruct((B, H_pad, W, C), x.dtype),
        grid=(B, nH, nC),
        in_specs=[
            pl.BlockSpec((None, None, TH + 2 * P, Wp, CT),
                         lambda b, r, c: (b, r, 0, 0, c)),
            pl.BlockSpec((K * K, 1, CT), lambda b, r, c: (0, 0, c)),
            pl.BlockSpec((1, CT), lambda b, r, c: (0, c)),
        ],
        out_specs=pl.BlockSpec((None, TH, W, CT), lambda b, r, c: (b, r, 0, c)),
        compiler_params=pltpu.CompilerParams(
            dimension_semantics=("parallel", "parallel", "parallel"),
            vmem_limit_bytes=48 * 1024 * 1024),
    )(halos, w_eff, bias_tot)

    out = out_img[:, :H].reshape(B, H * W, C)
    if add_length > 0:
        out = out[:, :-add_length]
    return out


def _ppeg_reference(x, w7, b7, w5, b5, w3, b3):
    """Plain-JAX mirror of the PyTorch forward, using lax depthwise convs."""
    B, N, C = x.shape
    H = W = int(np.ceil(np.sqrt(N)))
    add_length = H * W - N
    x_ext = jnp.concatenate([x, x[:, :add_length, :]], axis=1) if add_length > 0 else x
    if H < 7:
        H = W = 7
        zero_pad = H * W - (N + add_length)
        x_ext = jnp.concatenate(
            [x_ext, jnp.zeros((B, zero_pad, C), x.dtype)], axis=1)
        add_length += zero_pad
    cnn_feat = jnp.transpose(x_ext, (0, 2, 1)).reshape(B, C, H, W)

    def dwconv(img, w, b, k):
        out = jax.lax.conv_general_dilated(
            img, w, (1, 1), ((k // 2, k // 2), (k // 2, k // 2)),
            feature_group_count=C,
            dimension_numbers=('NCHW', 'OIHW', 'NCHW'),
            precision=jax.lax.Precision.HIGHEST)
        return out + b[None, :, None, None]

    y = (dwconv(cnn_feat, w7, b7, 7) + cnn_feat
         + dwconv(cnn_feat, w5, b5, 5) + dwconv(cnn_feat, w3, b3, 3))
    y = jnp.transpose(y.reshape(B, C, H * W), (0, 2, 1))
    if add_length > 0:
        y = y[:, :-add_length]
    return y


if __name__ == "__main__":
    C = 128   # lane-dense channel count (module default is dim=512)

    # Case 1: N=60 -> H=W=8, wrap-around padding of 4 tokens.
    # Case 2: N=20 -> H bumped to 7 (H<7 branch), wrap + zero padding (29 tokens).
    for (B, N) in [(2, 60), (2, 20)]:
        key = jax.random.PRNGKey(0)
        ks = jax.random.split(key, 7)
        x = jax.random.normal(ks[0], (B, N, C), dtype=jnp.float32)
        w7 = 0.1 * jax.random.normal(ks[1], (C, 1, 7, 7), dtype=jnp.float32)
        b7 = 0.05 * jax.random.normal(ks[2], (C,), dtype=jnp.float32)
        w5 = 0.1 * jax.random.normal(ks[3], (C, 1, 5, 5), dtype=jnp.float32)
        b5 = 0.05 * jax.random.normal(ks[4], (C,), dtype=jnp.float32)
        w3 = 0.1 * jax.random.normal(ks[5], (C, 1, 3, 3), dtype=jnp.float32)
        b3 = 0.05 * jax.random.normal(ks[6], (C,), dtype=jnp.float32)

        out = jax.block_until_ready(ppeg_forward(x, w7, b7, w5, b5, w3, b3))
        ref = jax.block_until_ready(_ppeg_reference(x, w7, b7, w5, b5, w3, b3))

        assert out.shape == (B, N, C)
        if not np.allclose(np.asarray(out), np.asarray(ref), rtol=2e-3, atol=2e-3):
            diff = float(np.max(np.abs(np.asarray(out) - np.asarray(ref))))
            raise AssertionError(f"kernel/reference mismatch (N={N}), max|diff|={diff}")

    print("KERNEL_OK")
</pallas_src>

<mosaic_0001>
module attributes {stable_mosaic.version = 11 : i64} {
  func.func @_ppeg_kernel(%arg0: i32, %arg1: i32, %arg2: i32, %arg3: memref<1x1x14x14x128xf32, #tpu.memory_space<vmem>>, %arg4: memref<49x1x128xf32, #tpu.memory_space<vmem>>, %arg5: memref<1x128xf32, #tpu.memory_space<vmem>>, %arg6: memref<1x8x8x128xf32, #tpu.memory_space<vmem>>) attributes {dimension_semantics = [#tpu.dimension_semantics<parallel>, #tpu.dimension_semantics<parallel>, #tpu.dimension_semantics<parallel>], iteration_bounds = array<i64: 2, 1, 1>, scalar_prefetch = 0 : i64, scratch_operands = 0 : i64, tpu.core_type = #tpu.core_type<tc>, window_params = [{transform_indices = @transform_0, window_bounds = array<i64: 1, 1, 14, 14, 128>}, {transform_indices = @transform_1, window_bounds = array<i64: 49, 1, 128>}, {transform_indices = @transform_2, window_bounds = array<i64: 1, 128>}, {transform_indices = @transform_3, window_bounds = array<i64: 1, 8, 8, 128>}]} {
    %c0 = arith.constant 0 : index
    %c0_0 = arith.constant 0 : index
    %c0_1 = arith.constant 0 : index
    %c0_2 = arith.constant 0 : index
    %c0_3 = arith.constant 0 : index
    %0 = vector.load %arg3[%c0, %c0_0, %c0_1, %c0_2, %c0_3] : memref<1x1x14x14x128xf32, #tpu.memory_space<vmem>>, vector<1x1x14x14x128xf32>
    %1 = vector.shape_cast %0 : vector<1x1x14x14x128xf32> to vector<14x14x128xf32>
    %c0_4 = arith.constant 0 : index
    %c0_5 = arith.constant 0 : index
    %2 = vector.load %arg5[%c0_4, %c0_5] : memref<1x128xf32, #tpu.memory_space<vmem>>, vector<1x128xf32>
    %3 = vector.shape_cast %2 : vector<1x128xf32> to vector<1x1x128xf32>
    %4 = vector.broadcast %3 : vector<1x1x128xf32> to vector<8x8x128xf32>
    %5 = vector.extract_strided_slice %1 {offsets = [0, 0, 0], sizes = [14, 8, 128], strides = [1, 1, 1]} : vector<14x14x128xf32> to vector<14x8x128xf32>
    %6 = vector.extract_strided_slice %5 {offsets = [0, 0, 0], sizes = [8, 8, 128], strides = [1, 1, 1]} : vector<14x8x128xf32> to vector<8x8x128xf32>
    %c0_6 = arith.constant 0 : index
    %c0_7 = arith.constant 0 : index
    %c0_8 = arith.constant 0 : index
    %7 = vector.load %arg4[%c0_6, %c0_7, %c0_8] : memref<49x1x128xf32, #tpu.memory_space<vmem>>, vector<1x1x128xf32>
    %8 = vector.shape_cast %7 : vector<1x1x128xf32> to vector<1x128xf32>
    %9 = vector.shape_cast %8 : vector<1x128xf32> to vector<1x1x128xf32>
    %10 = vector.broadcast %9 : vector<1x1x128xf32> to vector<8x8x128xf32>
    %11 = arith.mulf %6, %10 : vector<8x8x128xf32>
    %12 = arith.addf %4, %11 : vector<8x8x128xf32>
    %13 = vector.extract_strided_slice %5 {offsets = [1, 0, 0], sizes = [8, 8, 128], strides = [1, 1, 1]} : vector<14x8x128xf32> to vector<8x8x128xf32>
    %c7 = arith.constant 7 : index
    %c0_9 = arith.constant 0 : index
    %c0_10 = arith.constant 0 : index
    %14 = vector.load %arg4[%c7, %c0_9, %c0_10] : memref<49x1x128xf32, #tpu.memory_space<vmem>>, vector<1x1x128xf32>
    %15 = vector.shape_cast %14 : vector<1x1x128xf32> to vector<1x128xf32>
    %16 = vector.shape_cast %15 : vector<1x128xf32> to vector<1x1x128xf32>
    %17 = vector.broadcast %16 : vector<1x1x128xf32> to vector<8x8x128xf32>
    %18 = arith.mulf %13, %17 : vector<8x8x128xf32>
    %19 = arith.addf %12, %18 : vector<8x8x128xf32>
    %20 = vector.extract_strided_slice %5 {offsets = [2, 0, 0], sizes = [8, 8, 128], strides = [1, 1, 1]} : vector<14x8x128xf32> to vector<8x8x128xf32>
    %c14 = arith.constant 14 : index
    %c0_11 = arith.constant 0 : index
    %c0_12 = arith.constant 0 : index
    %21 = vector.load %arg4[%c14, %c0_11, %c0_12] : memref<49x1x128xf32, #tpu.memory_space<vmem>>, vector<1x1x128xf32>
    %22 = vector.shape_cast %21 : vector<1x1x128xf32> to vector<1x128xf32>
    %23 = vector.shape_cast %22 : vector<1x128xf32> to vector<1x1x128xf32>
    %24 = vector.broadcast %23 : vector<1x1x128xf32> to vector<8x8x128xf32>
    %25 = arith.mulf %20, %24 : vector<8x8x128xf32>
    %26 = arith.addf %19, %25 : vector<8x8x128xf32>
    %27 = vector.extract_strided_slice %5 {offsets = [3, 0, 0], sizes = [8, 8, 128], strides = [1, 1, 1]} : vector<14x8x128xf32> to vector<8x8x128xf32>
    %c21 = arith.constant 21 : index
    %c0_13 = arith.constant 0 : index
    %c0_14 = arith.constant 0 : index
    %28 = vector.load %arg4[%c21, %c0_13, %c0_14] : memref<49x1x128xf32, #tpu.memory_space<vmem>>, vector<1x1x128xf32>
    %29 = vector.shape_cast %28 : vector<1x1x128xf32> to vector<1x128xf32>
    %30 = vector.shape_cast %29 : vector<1x128xf32> to vector<1x1x128xf32>
    %31 = vector.broadcast %30 : vector<1x1x128xf32> to vector<8x8x128xf32>
    %32 = arith.mulf %27, %31 : vector<8x8x128xf32>
    %33 = arith.addf %26, %32 : vector<8x8x128xf32>
    %34 = vector.extract_strided_slice %5 {offsets = [4, 0, 0], sizes = [8, 8, 128], strides = [1, 1, 1]} : vector<14x8x128xf32> to vector<8x8x128xf32>
    %c28 = arith.constant 28 : index
    %c0_15 = arith.constant 0 : index
    %c0_16 = arith.constant 0 : index
    %35 = vector.load %arg4[%c28, %c0_15, %c0_16] : memref<49x1x128xf32, #tpu.memory_space<vmem>>, vector<1x1x128xf32>
    %36 = vector.shape_cast %35 : vector<1x1x128xf32> to vector<1x128xf32>
    %37 = vector.shape_cast %36 : vector<1x128xf32> to vector<1x1x128xf32>
    %38 = vector.broadcast %37 : vector<1x1x128xf32> to vector<8x8x128xf32>
    %39 = arith.mulf %34, %38 : vector<8x8x128xf32>
    %40 = arith.addf %33, %39 : vector<8x8x128xf32>
    %41 = vector.extract_strided_slice %5 {offsets = [5, 0, 0], sizes = [8, 8, 128], strides = [1, 1, 1]} : vector<14x8x128xf32> to vector<8x8x128xf32>
    %c35 = arith.constant 35 : index
    %c0_17 = arith.constant 0 : index
    %c0_18 = arith.constant 0 : index
    %42 = vector.load %arg4[%c35, %c0_17, %c0_18] : memref<49x1x128xf32, #tpu.memory_space<vmem>>, vector<1x1x128xf32>
    %43 = vector.shape_cast %42 : vector<1x1x128xf32> to vector<1x128xf32>
    %44 = vector.shape_cast %43 : vector<1x128xf32> to vector<1x1x128xf32>
    %45 = vector.broadcast %44 : vector<1x1x128xf32> to vector<8x8x128xf32>
    %46 = arith.mulf %41, %45 : vector<8x8x128xf32>
    %47 = arith.addf %40, %46 : vector<8x8x128xf32>
    %48 = vector.extract_strided_slice %5 {offsets = [6, 0, 0], sizes = [8, 8, 128], strides = [1, 1, 1]} : vector<14x8x128xf32> to vector<8x8x128xf32>
    %c42 = arith.constant 42 : index
    %c0_19 = arith.constant 0 : index
    %c0_20 = arith.constant 0 : index
    %49 = vector.load %arg4[%c42, %c0_19, %c0_20] : memref<49x1x128xf32, #tpu.memory_space<vmem>>, vector<1x1x128xf32>
    %50 = vector.shape_cast %49 : vector<1x1x128xf32> to vector<1x128xf32>
    %51 = vector.shape_cast %50 : vector<1x128xf32> to vector<1x1x128xf32>
    %52 = vector.broadcast %51 : vector<1x1x128xf32> to vector<8x8x128xf32>
    %53 = arith.mulf %48, %52 : vector<8x8x128xf32>
    %54 = arith.addf %47, %53 : vector<8x8x128xf32>
    %55 = vector.extract_strided_slice %1 {offsets = [0, 1, 0], sizes = [14, 8, 128], strides = [1, 1, 1]} : vector<14x14x128xf32> to vector<14x8x128xf32>
    %56 = vector.extract_strided_slice %55 {offsets = [0, 0, 0], sizes = [8, 8, 128], strides = [1, 1, 1]} : vector<14x8x128xf32> to vector<8x8x128xf32>
    %c1 = arith.constant 1 : index
    %c0_21 = arith.constant 0 : index
    %c0_22 = arith.constant 0 : index
    %57 = vector.load %arg4[%c1, %c0_21, %c0_22] : memref<49x1x128xf32, #tpu.memory_space<vmem>>, vector<1x1x128xf32>
    %58 = vector.shape_cast %57 : vector<1x1x128xf32> to vector<1x128xf32>
    %59 = vector.shape_cast %58 : vector<1x128xf32> to vector<1x1x128xf32>
    %60 = vector.broadcast %59 : vector<1x1x128xf32> to vector<8x8x128xf32>
    %61 = arith.mulf %56, %60 : vector<8x8x128xf32>
    %62 = arith.addf %54, %61 : vector<8x8x128xf32>
    %63 = vector.extract_strided_slice %55 {offsets = [1, 0, 0], sizes = [8, 8, 128], strides = [1, 1, 1]} : vector<14x8x128xf32> to vector<8x8x128xf32>
    %c8 = arith.constant 8 : index
    %c0_23 = arith.constant 0 : index
    %c0_24 = arith.constant 0 : index
    %64 = vector.load %arg4[%c8, %c0_23, %c0_24] : memref<49x1x128xf32, #tpu.memory_space<vmem>>, vector<1x1x128xf32>
    %65 = vector.shape_cast %64 : vector<1x1x128xf32> to vector<1x128xf32>
    %66 = vector.shape_cast %65 : vector<1x128xf32> to vector<1x1x128xf32>
    %67 = vector.broadcast %66 : vector<1x1x128xf32> to vector<8x8x128xf32>
    %68 = arith.mulf %63, %67 : vector<8x8x128xf32>
    %69 = arith.addf %62, %68 : vector<8x8x128xf32>
    %70 = vector.extract_strided_slice %55 {offsets = [2, 0, 0], sizes = [8, 8, 128], strides = [1, 1, 1]} : vector<14x8x128xf32> to vector<8x8x128xf32>
    %c15 = arith.constant 15 : index
    %c0_25 = arith.constant 0 : index
    %c0_26 = arith.constant 0 : index
    %71 = vector.load %arg4[%c15, %c0_25, %c0_26] : memref<49x1x128xf32, #tpu.memory_space<vmem>>, vector<1x1x128xf32>
    %72 = vector.shape_cast %71 : vector<1x1x128xf32> to vector<1x128xf32>
    %73 = vector.shape_cast %72 : vector<1x128xf32> to vector<1x1x128xf32>
    %74 = vector.broadcast %73 : vector<1x1x128xf32> to vector<8x8x128xf32>
    %75 = arith.mulf %70, %74 : vector<8x8x128xf32>
    %76 = arith.addf %69, %75 : vector<8x8x128xf32>
    %77 = vector.extract_strided_slice %55 {offsets = [3, 0, 0], sizes = [8, 8, 128], strides = [1, 1, 1]} : vector<14x8x128xf32> to vector<8x8x128xf32>
    %c22 = arith.constant 22 : index
    %c0_27 = arith.constant 0 : index
    %c0_28 = arith.constant 0 : index
    %78 = vector.load %arg4[%c22, %c0_27, %c0_28] : memref<49x1x128xf32, #tpu.memory_space<vmem>>, vector<1x1x128xf32>
    %79 = vector.shape_cast %78 : vector<1x1x128xf32> to vector<1x128xf32>
    %80 = vector.shape_cast %79 : vector<1x128xf32> to vector<1x1x128xf32>
    %81 = vector.broadcast %80 : vector<1x1x128xf32> to vector<8x8x128xf32>
    %82 = arith.mulf %77, %81 : vector<8x8x128xf32>
    %83 = arith.addf %76, %82 : vector<8x8x128xf32>
    %84 = vector.extract_strided_slice %55 {offsets = [4, 0, 0], sizes = [8, 8, 128], strides = [1, 1, 1]} : vector<14x8x128xf32> to vector<8x8x128xf32>
    %c29 = arith.constant 29 : index
    %c0_29 = arith.constant 0 : index
    %c0_30 = arith.constant 0 : index
    %85 = vector.load %arg4[%c29, %c0_29, %c0_30] : memref<49x1x128xf32, #tpu.memory_space<vmem>>, vector<1x1x128xf32>
    %86 = vector.shape_cast %85 : vector<1x1x128xf32> to vector<1x128xf32>
    %87 = vector.shape_cast %86 : vector<1x128xf32> to vector<1x1x128xf32>
    %88 = vector.broadcast %87 : vector<1x1x128xf32> to vector<8x8x128xf32>
    %89 = arith.mulf %84, %88 : vector<8x8x128xf32>
    %90 = arith.addf %83, %89 : vector<8x8x128xf32>
    %91 = vector.extract_strided_slice %55 {offsets = [5, 0, 0], sizes = [8, 8, 128], strides = [1, 1, 1]} : vector<14x8x128xf32> to vector<8x8x128xf32>
    %c36 = arith.constant 36 : index
    %c0_31 = arith.constant 0 : index
    %c0_32 = arith.constant 0 : index
    %92 = vector.load %arg4[%c36, %c0_31, %c0_32] : memref<49x1x128xf32, #tpu.memory_space<vmem>>, vector<1x1x128xf32>
    %93 = vector.shape_cast %92 : vector<1x1x128xf32> to vector<1x128xf32>
    %94 = vector.shape_cast %93 : vector<1x128xf32> to vector<1x1x128xf32>
    %95 = vector.broadcast %94 : vector<1x1x128xf32> to vector<8x8x128xf32>
    %96 = arith.mulf %91, %95 : vector<8x8x128xf32>
    %97 = arith.addf %90, %96 : vector<8x8x128xf32>
    %98 = vector.extract_strided_slice %55 {offsets = [6, 0, 0], sizes = [8, 8, 128], strides = [1, 1, 1]} : vector<14x8x128xf32> to vector<8x8x128xf32>
    %c43 = arith.constant 43 : index
    %c0_33 = arith.constant 0 : index
    %c0_34 = arith.constant 0 : index
    %99 = vector.load %arg4[%c43, %c0_33, %c0_34] : memref<49x1x128xf32, #tpu.memory_space<vmem>>, vector<1x1x128xf32>
    %100 = vector.shape_cast %99 : vector<1x1x128xf32> to vector<1x128xf32>
    %101 = vector.shape_cast %100 : vector<1x128xf32> to vector<1x1x128xf32>
    %102 = vector.broadcast %101 : vector<1x1x128xf32> to vector<8x8x128xf32>
    %103 = arith.mulf %98, %102 : vector<8x8x128xf32>
    %104 = arith.addf %97, %103 : vector<8x8x128xf32>
    %105 = vector.extract_strided_slice %1 {offsets = [0, 2, 0], sizes = [14, 8, 128], strides = [1, 1, 1]} : vector<14x14x128xf32> to vector<14x8x128xf32>
    %106 = vector.extract_strided_slice %105 {offsets = [0, 0, 0], sizes = [8, 8, 128], strides = [1, 1, 1]} : vector<14x8x128xf32> to vector<8x8x128xf32>
    %c2 = arith.constant 2 : index
    %c0_35 = arith.constant 0 : index
    %c0_36 = arith.constant 0 : index
    %107 = vector.load %arg4[%c2, %c0_35, %c0_36] : memref<49x1x128xf32, #tpu.memory_space<vmem>>, vector<1x1x128xf32>
    %108 = vector.shape_cast %107 : vector<1x1x128xf32> to vector<1x128xf32>
    %109 = vector.shape_cast %108 : vector<1x128xf32> to vector<1x1x128xf32>
    %110 = vector.broadcast %109 : vector<1x1x128xf32> to vector<8x8x128xf32>
    %111 = arith.mulf %106, %110 : vector<8x8x128xf32>
    %112 = arith.addf %104, %111 : vector<8x8x128xf32>
    %113 = vector.extract_strided_slice %105 {offsets = [1, 0, 0], sizes = [8, 8, 128], strides = [1, 1, 1]} : vector<14x8x128xf32> to vector<8x8x128xf32>
    %c9 = arith.constant 9 : index
    %c0_37 = arith.constant 0 : index
    %c0_38 = arith.constant 0 : index
    %114 = vector.load %arg4[%c9, %c0_37, %c0_38] : memref<49x1x128xf32, #tpu.memory_space<vmem>>, vector<1x1x128xf32>
    %115 = vector.shape_cast %114 : vector<1x1x128xf32> to vector<1x128xf32>
    %116 = vector.shape_cast %115 : vector<1x128xf32> to vector<1x1x128xf32>
    %117 = vector.broadcast %116 : vector<1x1x128xf32> to vector<8x8x128xf32>
    %118 = arith.mulf %113, %117 : vector<8x8x128xf32>
    %119 = arith.addf %112, %118 : vector<8x8x128xf32>
    %120 = vector.extract_strided_slice %105 {offsets = [2, 0, 0], sizes = [8, 8, 128], strides = [1, 1, 1]} : vector<14x8x128xf32> to vector<8x8x128xf32>
    %c16 = arith.constant 16 : index
    %c0_39 = arith.constant 0 : index
    %c0_40 = arith.constant 0 : index
    %121 = vector.load %arg4[%c16, %c0_39, %c0_40] : memref<49x1x128xf32, #tpu.memory_space<vmem>>, vector<1x1x128xf32>
    %122 = vector.shape_cast %121 : vector<1x1x128xf32> to vector<1x128xf32>
    %123 = vector.shape_cast %122 : vector<1x128xf32> to vector<1x1x128xf32>
    %124 = vector.broadcast %123 : vector<1x1x128xf32> to vector<8x8x128xf32>
    %125 = arith.mulf %120, %124 : vector<8x8x128xf32>
    %126 = arith.addf %119, %125 : vector<8x8x128xf32>
    %127 = vector.extract_strided_slice %105 {offsets = [3, 0, 0], sizes = [8, 8, 128], strides = [1, 1, 1]} : vector<14x8x128xf32> to vector<8x8x128xf32>
    %c23 = arith.constant 23 : index
    %c0_41 = arith.constant 0 : index
    %c0_42 = arith.constant 0 : index
    %128 = vector.load %arg4[%c23, %c0_41, %c0_42] : memref<49x1x128xf32, #tpu.memory_space<vmem>>, vector<1x1x128xf32>
    %129 = vector.shape_cast %128 : vector<1x1x128xf32> to vector<1x128xf32>
    %130 = vector.shape_cast %129 : vector<1x128xf32> to vector<1x1x128xf32>
    %131 = vector.broadcast %130 : vector<1x1x128xf32> to vector<8x8x128xf32>
    %132 = arith.mulf %127, %131 : vector<8x8x128xf32>
    %133 = arith.addf %126, %132 : vector<8x8x128xf32>
    %134 = vector.extract_strided_slice %105 {offsets = [4, 0, 0], sizes = [8, 8, 128], strides = [1, 1, 1]} : vector<14x8x128xf32> to vector<8x8x128xf32>
    %c30 = arith.constant 30 : index
    %c0_43 = arith.constant 0 : index
    %c0_44 = arith.constant 0 : index
    %135 = vector.load %arg4[%c30, %c0_43, %c0_44] : memref<49x1x128xf32, #tpu.memory_space<vmem>>, vector<1x1x128xf32>
    %136 = vector.shape_cast %135 : vector<1x1x128xf32> to vector<1x128xf32>
    %137 = vector.shape_cast %136 : vector<1x128xf32> to vector<1x1x128xf32>
    %138 = vector.broadcast %137 : vector<1x1x128xf32> to vector<8x8x128xf32>
    %139 = arith.mulf %134, %138 : vector<8x8x128xf32>
    %140 = arith.addf %133, %139 : vector<8x8x128xf32>
    %141 = vector.extract_strided_slice %105 {offsets = [5, 0, 0], sizes = [8, 8, 128], strides = [1, 1, 1]} : vector<14x8x128xf32> to vector<8x8x128xf32>
    %c37 = arith.constant 37 : index
    %c0_45 = arith.constant 0 : index
    %c0_46 = arith.constant 0 : index
    %142 = vector.load %arg4[%c37, %c0_45, %c0_46] : memref<49x1x128xf32, #tpu.memory_space<vmem>>, vector<1x1x128xf32>
    %143 = vector.shape_cast %142 : vector<1x1x128xf32> to vector<1x128xf32>
    %144 = vector.shape_cast %143 : vector<1x128xf32> to vector<1x1x128xf32>
    %145 = vector.broadcast %144 : vector<1x1x128xf32> to vector<8x8x128xf32>
    %146 = arith.mulf %141, %145 : vector<8x8x128xf32>
    %147 = arith.addf %140, %146 : vector<8x8x128xf32>
    %148 = vector.extract_strided_slice %105 {offsets = [6, 0, 0], sizes = [8, 8, 128], strides = [1, 1, 1]} : vector<14x8x128xf32> to vector<8x8x128xf32>
    %c44 = arith.constant 44 : index
    %c0_47 = arith.constant 0 : index
    %c0_48 = arith.constant 0 : index
    %149 = vector.load %arg4[%c44, %c0_47, %c0_48] : memref<49x1x128xf32, #tpu.memory_space<vmem>>, vector<1x1x128xf32>
    %150 = vector.shape_cast %149 : vector<1x1x128xf32> to vector<1x128xf32>
    %151 = vector.shape_cast %150 : vector<1x128xf32> to vector<1x1x128xf32>
    %152 = vector.broadcast %151 : vector<1x1x128xf32> to vector<8x8x128xf32>
    %153 = arith.mulf %148, %152 : vector<8x8x128xf32>
    %154 = arith.addf %147, %153 : vector<8x8x128xf32>
    %155 = vector.extract_strided_slice %1 {offsets = [0, 3, 0], sizes = [14, 8, 128], strides = [1, 1, 1]} : vector<14x14x128xf32> to vector<14x8x128xf32>
    %156 = vector.extract_strided_slice %155 {offsets = [0, 0, 0], sizes = [8, 8, 128], strides = [1, 1, 1]} : vector<14x8x128xf32> to vector<8x8x128xf32>
    %c3 = arith.constant 3 : index
    %c0_49 = arith.constant 0 : index
    %c0_50 = arith.constant 0 : index
    %157 = vector.load %arg4[%c3, %c0_49, %c0_50] : memref<49x1x128xf32, #tpu.memory_space<vmem>>, vector<1x1x128xf32>
    %158 = vector.shape_cast %157 : vector<1x1x128xf32> to vector<1x128xf32>
    %159 = vector.shape_cast %158 : vector<1x128xf32> to vector<1x1x128xf32>
    %160 = vector.broadcast %159 : vector<1x1x128xf32> to vector<8x8x128xf32>
    %161 = arith.mulf %156, %160 : vector<8x8x128xf32>
    %162 = arith.addf %154, %161 : vector<8x8x128xf32>
    %163 = vector.extract_strided_slice %155 {offsets = [1, 0, 0], sizes = [8, 8, 128], strides = [1, 1, 1]} : vector<14x8x128xf32> to vector<8x8x128xf32>
    %c10 = arith.constant 10 : index
    %c0_51 = arith.constant 0 : index
    %c0_52 = arith.constant 0 : index
    %164 = vector.load %arg4[%c10, %c0_51, %c0_52] : memref<49x1x128xf32, #tpu.memory_space<vmem>>, vector<1x1x128xf32>
    %165 = vector.shape_cast %164 : vector<1x1x128xf32> to vector<1x128xf32>
    %166 = vector.shape_cast %165 : vector<1x128xf32> to vector<1x1x128xf32>
    %167 = vector.broadcast %166 : vector<1x1x128xf32> to vector<8x8x128xf32>
    %168 = arith.mulf %163, %167 : vector<8x8x128xf32>
    %169 = arith.addf %162, %168 : vector<8x8x128xf32>
    %170 = vector.extract_strided_slice %155 {offsets = [2, 0, 0], sizes = [8, 8, 128], strides = [1, 1, 1]} : vector<14x8x128xf32> to vector<8x8x128xf32>
    %c17 = arith.constant 17 : index
    %c0_53 = arith.constant 0 : index
    %c0_54 = arith.constant 0 : index
    %171 = vector.load %arg4[%c17, %c0_53, %c0_54] : memref<49x1x128xf32, #tpu.memory_space<vmem>>, vector<1x1x128xf32>
    %172 = vector.shape_cast %171 : vector<1x1x128xf32> to vector<1x128xf32>
    %173 = vector.shape_cast %172 : vector<1x128xf32> to vector<1x1x128xf32>
    %174 = vector.broadcast %173 : vector<1x1x128xf32> to vector<8x8x128xf32>
    %175 = arith.mulf %170, %174 : vector<8x8x128xf32>
    %176 = arith.addf %169, %175 : vector<8x8x128xf32>
    %177 = vector.extract_strided_slice %155 {offsets = [3, 0, 0], sizes = [8, 8, 128], strides = [1, 1, 1]} : vector<14x8x128xf32> to vector<8x8x128xf32>
    %c24 = arith.constant 24 : index
    %c0_55 = arith.constant 0 : index
    %c0_56 = arith.constant 0 : index
    %178 = vector.load %arg4[%c24, %c0_55, %c0_56] : memref<49x1x128xf32, #tpu.memory_space<vmem>>, vector<1x1x128xf32>
    %179 = vector.shape_cast %178 : vector<1x1x128xf32> to vector<1x128xf32>
    %180 = vector.shape_cast %179 : vector<1x128xf32> to vector<1x1x128xf32>
    %181 = vector.broadcast %180 : vector<1x1x128xf32> to vector<8x8x128xf32>
    %182 = arith.mulf %177, %181 : vector<8x8x128xf32>
    %183 = arith.addf %176, %182 : vector<8x8x128xf32>
    %184 = vector.extract_strided_slice %155 {offsets = [4, 0, 0], sizes = [8, 8, 128], strides = [1, 1, 1]} : vector<14x8x128xf32> to vector<8x8x128xf32>
    %c31 = arith.constant 31 : index
    %c0_57 = arith.constant 0 : index
    %c0_58 = arith.constant 0 : index
    %185 = vector.load %arg4[%c31, %c0_57, %c0_58] : memref<49x1x128xf32, #tpu.memory_space<vmem>>, vector<1x1x128xf32>
    %186 = vector.shape_cast %185 : vector<1x1x128xf32> to vector<1x128xf32>
    %187 = vector.shape_cast %186 : vector<1x128xf32> to vector<1x1x128xf32>
    %188 = vector.broadcast %187 : vector<1x1x128xf32> to vector<8x8x128xf32>
    %189 = arith.mulf %184, %188 : vector<8x8x128xf32>
    %190 = arith.addf %183, %189 : vector<8x8x128xf32>
    %191 = vector.extract_strided_slice %155 {offsets = [5, 0, 0], sizes = [8, 8, 128], strides = [1, 1, 1]} : vector<14x8x128xf32> to vector<8x8x128xf32>
    %c38 = arith.constant 38 : index
    %c0_59 = arith.constant 0 : index
    %c0_60 = arith.constant 0 : index
    %192 = vector.load %arg4[%c38, %c0_59, %c0_60] : memref<49x1x128xf32, #tpu.memory_space<vmem>>, vector<1x1x128xf32>
    %193 = vector.shape_cast %192 : vector<1x1x128xf32> to vector<1x128xf32>
    %194 = vector.shape_cast %193 : vector<1x128xf32> to vector<1x1x128xf32>
    %195 = vector.broadcast %194 : vector<1x1x128xf32> to vector<8x8x128xf32>
    %196 = arith.mulf %191, %195 : vector<8x8x128xf32>
    %197 = arith.addf %190, %196 : vector<8x8x128xf32>
    %198 = vector.extract_strided_slice %155 {offsets = [6, 0, 0], sizes = [8, 8, 128], strides = [1, 1, 1]} : vector<14x8x128xf32> to vector<8x8x128xf32>
    %c45 = arith.constant 45 : index
    %c0_61 = arith.constant 0 : index
    %c0_62 = arith.constant 0 : index
    %199 = vector.load %arg4[%c45, %c0_61, %c0_62] : memref<49x1x128xf32, #tpu.memory_space<vmem>>, vector<1x1x128xf32>
    %200 = vector.shape_cast %199 : vector<1x1x128xf32> to vector<1x128xf32>
    %201 = vector.shape_cast %200 : vector<1x128xf32> to vector<1x1x128xf32>
    %202 = vector.broadcast %201 : vector<1x1x128xf32> to vector<8x8x128xf32>
    %203 = arith.mulf %198, %202 : vector<8x8x128xf32>
    %204 = arith.addf %197, %203 : vector<8x8x128xf32>
    %205 = vector.extract_strided_slice %1 {offsets = [0, 4, 0], sizes = [14, 8, 128], strides = [1, 1, 1]} : vector<14x14x128xf32> to vector<14x8x128xf32>
    %206 = vector.extract_strided_slice %205 {offsets = [0, 0, 0], sizes = [8, 8, 128], strides = [1, 1, 1]} : vector<14x8x128xf32> to vector<8x8x128xf32>
    %c4 = arith.constant 4 : index
    %c0_63 = arith.constant 0 : index
    %c0_64 = arith.constant 0 : index
    %207 = vector.load %arg4[%c4, %c0_63, %c0_64] : memref<49x1x128xf32, #tpu.memory_space<vmem>>, vector<1x1x128xf32>
    %208 = vector.shape_cast %207 : vector<1x1x128xf32> to vector<1x128xf32>
    %209 = vector.shape_cast %208 : vector<1x128xf32> to vector<1x1x128xf32>
    %210 = vector.broadcast %209 : vector<1x1x128xf32> to vector<8x8x128xf32>
    %211 = arith.mulf %206, %210 : vector<8x8x128xf32>
    %212 = arith.addf %204, %211 : vector<8x8x128xf32>
    %213 = vector.extract_strided_slice %205 {offsets = [1, 0, 0], sizes = [8, 8, 128], strides = [1, 1, 1]} : vector<14x8x128xf32> to vector<8x8x128xf32>
    %c11 = arith.constant 11 : index
    %c0_65 = arith.constant 0 : index
    %c0_66 = arith.constant 0 : index
    %214 = vector.load %arg4[%c11, %c0_65, %c0_66] : memref<49x1x128xf32, #tpu.memory_space<vmem>>, vector<1x1x128xf32>
    %215 = vector.shape_cast %214 : vector<1x1x128xf32> to vector<1x128xf32>
    %216 = vector.shape_cast %215 : vector<1x128xf32> to vector<1x1x128xf32>
    %217 = vector.broadcast %216 : vector<1x1x128xf32> to vector<8x8x128xf32>
    %218 = arith.mulf %213, %217 : vector<8x8x128xf32>
    %219 = arith.addf %212, %218 : vector<8x8x128xf32>
    %220 = vector.extract_strided_slice %205 {offsets = [2, 0, 0], sizes = [8, 8, 128], strides = [1, 1, 1]} : vector<14x8x128xf32> to vector<8x8x128xf32>
    %c18 = arith.constant 18 : index
    %c0_67 = arith.constant 0 : index
    %c0_68 = arith.constant 0 : index
    %221 = vector.load %arg4[%c18, %c0_67, %c0_68] : memref<49x1x128xf32, #tpu.memory_space<vmem>>, vector<1x1x128xf32>
    %222 = vector.shape_cast %221 : vector<1x1x128xf32> to vector<1x128xf32>
    %223 = vector.shape_cast %222 : vector<1x128xf32> to vector<1x1x128xf32>
    %224 = vector.broadcast %223 : vector<1x1x128xf32> to vector<8x8x128xf32>
    %225 = arith.mulf %220, %224 : vector<8x8x128xf32>
    %226 = arith.addf %219, %225 : vector<8x8x128xf32>
    %227 = vector.extract_strided_slice %205 {offsets = [3, 0, 0], sizes = [8, 8, 128], strides = [1, 1, 1]} : vector<14x8x128xf32> to vector<8x8x128xf32>
    %c25 = arith.constant 25 : index
    %c0_69 = arith.constant 0 : index
    %c0_70 = arith.constant 0 : index
    %228 = vector.load %arg4[%c25, %c0_69, %c0_70] : memref<49x1x128xf32, #tpu.memory_space<vmem>>, vector<1x1x128xf32>
    %229 = vector.shape_cast %228 : vector<1x1x128xf32> to vector<1x128xf32>
    %230 = vector.shape_cast %229 : vector<1x128xf32> to vector<1x1x128xf32>
    %231 = vector.broadcast %230 : vector<1x1x128xf32> to vector<8x8x128xf32>
    %232 = arith.mulf %227, %231 : vector<8x8x128xf32>
    %233 = arith.addf %226, %232 : vector<8x8x128xf32>
    %234 = vector.extract_strided_slice %205 {offsets = [4, 0, 0], sizes = [8, 8, 128], strides = [1, 1, 1]} : vector<14x8x128xf32> to vector<8x8x128xf32>
    %c32 = arith.constant 32 : index
    %c0_71 = arith.constant 0 : index
    %c0_72 = arith.constant 0 : index
    %235 = vector.load %arg4[%c32, %c0_71, %c0_72] : memref<49x1x128xf32, #tpu.memory_space<vmem>>, vector<1x1x128xf32>
    %236 = vector.shape_cast %235 : vector<1x1x128xf32> to vector<1x128xf32>
    %237 = vector.shape_cast %236 : vector<1x128xf32> to vector<1x1x128xf32>
    %238 = vector.broadcast %237 : vector<1x1x128xf32> to vector<8x8x128xf32>
    %239 = arith.mulf %234, %238 : vector<8x8x128xf32>
    %240 = arith.addf %233, %239 : vector<8x8x128xf32>
    %241 = vector.extract_strided_slice %205 {offsets = [5, 0, 0], sizes = [8, 8, 128], strides = [1, 1, 1]} : vector<14x8x128xf32> to vector<8x8x128xf32>
    %c39 = arith.constant 39 : index
    %c0_73 = arith.constant 0 : index
    %c0_74 = arith.constant 0 : index
    %242 = vector.load %arg4[%c39, %c0_73, %c0_74] : memref<49x1x128xf32, #tpu.memory_space<vmem>>, vector<1x1x128xf32>
    %243 = vector.shape_cast %242 : vector<1x1x128xf32> to vector<1x128xf32>
    %244 = vector.shape_cast %243 : vector<1x128xf32> to vector<1x1x128xf32>
    %245 = vector.broadcast %244 : vector<1x1x128xf32> to vector<8x8x128xf32>
    %246 = arith.mulf %241, %245 : vector<8x8x128xf32>
    %247 = arith.addf %240, %246 : vector<8x8x128xf32>
    %248 = vector.extract_strided_slice %205 {offsets = [6, 0, 0], sizes = [8, 8, 128], strides = [1, 1, 1]} : vector<14x8x128xf32> to vector<8x8x128xf32>
    %c46 = arith.constant 46 : index
    %c0_75 = arith.constant 0 : index
    %c0_76 = arith.constant 0 : index
    %249 = vector.load %arg4[%c46, %c0_75, %c0_76] : memref<49x1x128xf32, #tpu.memory_space<vmem>>, vector<1x1x128xf32>
    %250 = vector.shape_cast %249 : vector<1x1x128xf32> to vector<1x128xf32>
    %251 = vector.shape_cast %250 : vector<1x128xf32> to vector<1x1x128xf32>
    %252 = vector.broadcast %251 : vector<1x1x128xf32> to vector<8x8x128xf32>
    %253 = arith.mulf %248, %252 : vector<8x8x128xf32>
    %254 = arith.addf %247, %253 : vector<8x8x128xf32>
    %255 = vector.extract_strided_slice %1 {offsets = [0, 5, 0], sizes = [14, 8, 128], strides = [1, 1, 1]} : vector<14x14x128xf32> to vector<14x8x128xf32>
    %256 = vector.extract_strided_slice %255 {offsets = [0, 0, 0], sizes = [8, 8, 128], strides = [1, 1, 1]} : vector<14x8x128xf32> to vector<8x8x128xf32>
    %c5 = arith.constant 5 : index
    %c0_77 = arith.constant 0 : index
    %c0_78 = arith.constant 0 : index
    %257 = vector.load %arg4[%c5, %c0_77, %c0_78] : memref<49x1x128xf32, #tpu.memory_space<vmem>>, vector<1x1x128xf32>
    %258 = vector.shape_cast %257 : vector<1x1x128xf32> to vector<1x128xf32>
    %259 = vector.shape_cast %258 : vector<1x128xf32> to vector<1x1x128xf32>
    %260 = vector.broadcast %259 : vector<1x1x128xf32> to vector<8x8x128xf32>
    %261 = arith.mulf %256, %260 : vector<8x8x128xf32>
    %262 = arith.addf %254, %261 : vector<8x8x128xf32>
    %263 = vector.extract_strided_slice %255 {offsets = [1, 0, 0], sizes = [8, 8, 128], strides = [1, 1, 1]} : vector<14x8x128xf32> to vector<8x8x128xf32>
    %c12 = arith.constant 12 : index
    %c0_79 = arith.constant 0 : index
    %c0_80 = arith.constant 0 : index
    %264 = vector.load %arg4[%c12, %c0_79, %c0_80] : memref<49x1x128xf32, #tpu.memory_space<vmem>>, vector<1x1x128xf32>
    %265 = vector.shape_cast %264 : vector<1x1x128xf32> to vector<1x128xf32>
    %266 = vector.shape_cast %265 : vector<1x128xf32> to vector<1x1x128xf32>
    %267 = vector.broadcast %266 : vector<1x1x128xf32> to vector<8x8x128xf32>
    %268 = arith.mulf %263, %267 : vector<8x8x128xf32>
    %269 = arith.addf %262, %268 : vector<8x8x128xf32>
    %270 = vector.extract_strided_slice %255 {offsets = [2, 0, 0], sizes = [8, 8, 128], strides = [1, 1, 1]} : vector<14x8x128xf32> to vector<8x8x128xf32>
    %c19 = arith.constant 19 : index
    %c0_81 = arith.constant 0 : index
    %c0_82 = arith.constant 0 : index
    %271 = vector.load %arg4[%c19, %c0_81, %c0_82] : memref<49x1x128xf32, #tpu.memory_space<vmem>>, vector<1x1x128xf32>
    %272 = vector.shape_cast %271 : vector<1x1x128xf32> to vector<1x128xf32>
    %273 = vector.shape_cast %272 : vector<1x128xf32> to vector<1x1x128xf32>
    %274 = vector.broadcast %273 : vector<1x1x128xf32> to vector<8x8x128xf32>
    %275 = arith.mulf %270, %274 : vector<8x8x128xf32>
    %276 = arith.addf %269, %275 : vector<8x8x128xf32>
    %277 = vector.extract_strided_slice %255 {offsets = [3, 0, 0], sizes = [8, 8, 128], strides = [1, 1, 1]} : vector<14x8x128xf32> to vector<8x8x128xf32>
    %c26 = arith.constant 26 : index
    %c0_83 = arith.constant 0 : index
    %c0_84 = arith.constant 0 : index
    %278 = vector.load %arg4[%c26, %c0_83, %c0_84] : memref<49x1x128xf32, #tpu.memory_space<vmem>>, vector<1x1x128xf32>
    %279 = vector.shape_cast %278 : vector<1x1x128xf32> to vector<1x128xf32>
    %280 = vector.shape_cast %279 : vector<1x128xf32> to vector<1x1x128xf32>
    %281 = vector.broadcast %280 : vector<1x1x128xf32> to vector<8x8x128xf32>
    %282 = arith.mulf %277, %281 : vector<8x8x128xf32>
    %283 = arith.addf %276, %282 : vector<8x8x128xf32>
    %284 = vector.extract_strided_slice %255 {offsets = [4, 0, 0], sizes = [8, 8, 128], strides = [1, 1, 1]} : vector<14x8x128xf32> to vector<8x8x128xf32>
    %c33 = arith.constant 33 : index
    %c0_85 = arith.constant 0 : index
    %c0_86 = arith.constant 0 : index
    %285 = vector.load %arg4[%c33, %c0_85, %c0_86] : memref<49x1x128xf32, #tpu.memory_space<vmem>>, vector<1x1x128xf32>
    %286 = vector.shape_cast %285 : vector<1x1x128xf32> to vector<1x128xf32>
    %287 = vector.shape_cast %286 : vector<1x128xf32> to vector<1x1x128xf32>
    %288 = vector.broadcast %287 : vector<1x1x128xf32> to vector<8x8x128xf32>
    %289 = arith.mulf %284, %288 : vector<8x8x128xf32>
    %290 = arith.addf %283, %289 : vector<8x8x128xf32>
    %291 = vector.extract_strided_slice %255 {offsets = [5, 0, 0], sizes = [8, 8, 128], strides = [1, 1, 1]} : vector<14x8x128xf32> to vector<8x8x128xf32>
    %c40 = arith.constant 40 : index
    %c0_87 = arith.constant 0 : index
    %c0_88 = arith.constant 0 : index
    %292 = vector.load %arg4[%c40, %c0_87, %c0_88] : memref<49x1x128xf32, #tpu.memory_space<vmem>>, vector<1x1x128xf32>
    %293 = vector.shape_cast %292 : vector<1x1x128xf32> to vector<1x128xf32>
    %294 = vector.shape_cast %293 : vector<1x128xf32> to vector<1x1x128xf32>
    %295 = vector.broadcast %294 : vector<1x1x128xf32> to vector<8x8x128xf32>
    %296 = arith.mulf %291, %295 : vector<8x8x128xf32>
    %297 = arith.addf %290, %296 : vector<8x8x128xf32>
    %298 = vector.extract_strided_slice %255 {offsets = [6, 0, 0], sizes = [8, 8, 128], strides = [1, 1, 1]} : vector<14x8x128xf32> to vector<8x8x128xf32>
    %c47 = arith.constant 47 : index
    %c0_89 = arith.constant 0 : index
    %c0_90 = arith.constant 0 : index
    %299 = vector.load %arg4[%c47, %c0_89, %c0_90] : memref<49x1x128xf32, #tpu.memory_space<vmem>>, vector<1x1x128xf32>
    %300 = vector.shape_cast %299 : vector<1x1x128xf32> to vector<1x128xf32>
    %301 = vector.shape_cast %300 : vector<1x128xf32> to vector<1x1x128xf32>
    %302 = vector.broadcast %301 : vector<1x1x128xf32> to vector<8x8x128xf32>
    %303 = arith.mulf %298, %302 : vector<8x8x128xf32>
    %304 = arith.addf %297, %303 : vector<8x8x128xf32>
    %305 = vector.extract_strided_slice %1 {offsets = [0, 6, 0], sizes = [14, 8, 128], strides = [1, 1, 1]} : vector<14x14x128xf32> to vector<14x8x128xf32>
    %306 = vector.extract_strided_slice %305 {offsets = [0, 0, 0], sizes = [8, 8, 128], strides = [1, 1, 1]} : vector<14x8x128xf32> to vector<8x8x128xf32>
    %c6 = arith.constant 6 : index
    %c0_91 = arith.constant 0 : index
    %c0_92 = arith.constant 0 : index
    %307 = vector.load %arg4[%c6, %c0_91, %c0_92] : memref<49x1x128xf32, #tpu.memory_space<vmem>>, vector<1x1x128xf32>
    %308 = vector.shape_cast %307 : vector<1x1x128xf32> to vector<1x128xf32>
    %309 = vector.shape_cast %308 : vector<1x128xf32> to vector<1x1x128xf32>
    %310 = vector.broadcast %309 : vector<1x1x128xf32> to vector<8x8x128xf32>
    %311 = arith.mulf %306, %310 : vector<8x8x128xf32>
    %312 = arith.addf %304, %311 : vector<8x8x128xf32>
    %313 = vector.extract_strided_slice %305 {offsets = [1, 0, 0], sizes = [8, 8, 128], strides = [1, 1, 1]} : vector<14x8x128xf32> to vector<8x8x128xf32>
    %c13 = arith.constant 13 : index
    %c0_93 = arith.constant 0 : index
    %c0_94 = arith.constant 0 : index
    %314 = vector.load %arg4[%c13, %c0_93, %c0_94] : memref<49x1x128xf32, #tpu.memory_space<vmem>>, vector<1x1x128xf32>
    %315 = vector.shape_cast %314 : vector<1x1x128xf32> to vector<1x128xf32>
    %316 = vector.shape_cast %315 : vector<1x128xf32> to vector<1x1x128xf32>
    %317 = vector.broadcast %316 : vector<1x1x128xf32> to vector<8x8x128xf32>
    %318 = arith.mulf %313, %317 : vector<8x8x128xf32>
    %319 = arith.addf %312, %318 : vector<8x8x128xf32>
    %320 = vector.extract_strided_slice %305 {offsets = [2, 0, 0], sizes = [8, 8, 128], strides = [1, 1, 1]} : vector<14x8x128xf32> to vector<8x8x128xf32>
    %c20 = arith.constant 20 : index
    %c0_95 = arith.constant 0 : index
    %c0_96 = arith.constant 0 : index
    %321 = vector.load %arg4[%c20, %c0_95, %c0_96] : memref<49x1x128xf32, #tpu.memory_space<vmem>>, vector<1x1x128xf32>
    %322 = vector.shape_cast %321 : vector<1x1x128xf32> to vector<1x128xf32>
    %323 = vector.shape_cast %322 : vector<1x128xf32> to vector<1x1x128xf32>
    %324 = vector.broadcast %323 : vector<1x1x128xf32> to vector<8x8x128xf32>
    %325 = arith.mulf %320, %324 : vector<8x8x128xf32>
    %326 = arith.addf %319, %325 : vector<8x8x128xf32>
    %327 = vector.extract_strided_slice %305 {offsets = [3, 0, 0], sizes = [8, 8, 128], strides = [1, 1, 1]} : vector<14x8x128xf32> to vector<8x8x128xf32>
    %c27 = arith.constant 27 : index
    %c0_97 = arith.constant 0 : index
    %c0_98 = arith.constant 0 : index
    %328 = vector.load %arg4[%c27, %c0_97, %c0_98] : memref<49x1x128xf32, #tpu.memory_space<vmem>>, vector<1x1x128xf32>
    %329 = vector.shape_cast %328 : vector<1x1x128xf32> to vector<1x128xf32>
    %330 = vector.shape_cast %329 : vector<1x128xf32> to vector<1x1x128xf32>
    %331 = vector.broadcast %330 : vector<1x1x128xf32> to vector<8x8x128xf32>
    %332 = arith.mulf %327, %331 : vector<8x8x128xf32>
    %333 = arith.addf %326, %332 : vector<8x8x128xf32>
    %334 = vector.extract_strided_slice %305 {offsets = [4, 0, 0], sizes = [8, 8, 128], strides = [1, 1, 1]} : vector<14x8x128xf32> to vector<8x8x128xf32>
    %c34 = arith.constant 34 : index
    %c0_99 = arith.constant 0 : index
    %c0_100 = arith.constant 0 : index
    %335 = vector.load %arg4[%c34, %c0_99, %c0_100] : memref<49x1x128xf32, #tpu.memory_space<vmem>>, vector<1x1x128xf32>
    %336 = vector.shape_cast %335 : vector<1x1x128xf32> to vector<1x128xf32>
    %337 = vector.shape_cast %336 : vector<1x128xf32> to vector<1x1x128xf32>
    %338 = vector.broadcast %337 : vector<1x1x128xf32> to vector<8x8x128xf32>
    %339 = arith.mulf %334, %338 : vector<8x8x128xf32>
    %340 = arith.addf %333, %339 : vector<8x8x128xf32>
    %341 = vector.extract_strided_slice %305 {offsets = [5, 0, 0], sizes = [8, 8, 128], strides = [1, 1, 1]} : vector<14x8x128xf32> to vector<8x8x128xf32>
    %c41 = arith.constant 41 : index
    %c0_101 = arith.constant 0 : index
    %c0_102 = arith.constant 0 : index
    %342 = vector.load %arg4[%c41, %c0_101, %c0_102] : memref<49x1x128xf32, #tpu.memory_space<vmem>>, vector<1x1x128xf32>
    %343 = vector.shape_cast %342 : vector<1x1x128xf32> to vector<1x128xf32>
    %344 = vector.shape_cast %343 : vector<1x128xf32> to vector<1x1x128xf32>
    %345 = vector.broadcast %344 : vector<1x1x128xf32> to vector<8x8x128xf32>
    %346 = arith.mulf %341, %345 : vector<8x8x128xf32>
    %347 = arith.addf %340, %346 : vector<8x8x128xf32>
    %348 = vector.extract_strided_slice %305 {offsets = [6, 0, 0], sizes = [8, 8, 128], strides = [1, 1, 1]} : vector<14x8x128xf32> to vector<8x8x128xf32>
    %c48 = arith.constant 48 : index
    %c0_103 = arith.constant 0 : index
    %c0_104 = arith.constant 0 : index
    %349 = vector.load %arg4[%c48, %c0_103, %c0_104] : memref<49x1x128xf32, #tpu.memory_space<vmem>>, vector<1x1x128xf32>
    %350 = vector.shape_cast %349 : vector<1x1x128xf32> to vector<1x128xf32>
    %351 = vector.shape_cast %350 : vector<1x128xf32> to vector<1x1x128xf32>
    %352 = vector.broadcast %351 : vector<1x1x128xf32> to vector<8x8x128xf32>
    %353 = arith.mulf %348, %352 : vector<8x8x128xf32>
    %354 = arith.addf %347, %353 : vector<8x8x128xf32>
    %c0_105 = arith.constant 0 : index
    %c0_106 = arith.constant 0 : index
    %c0_107 = arith.constant 0 : index
    %c0_108 = arith.constant 0 : index
    %355 = vector.load %arg6[%c0_105, %c0_106, %c0_107, %c0_108] : memref<1x8x8x128xf32, #tpu.memory_space<vmem>>, vector<1x8x8x128xf32>
    %356 = vector.shape_cast %355 : vector<1x8x8x128xf32> to vector<8x8x128xf32>
    %357 = vector.shape_cast %354 : vector<8x8x128xf32> to vector<1x8x8x128xf32>
    tpu.vector_store %arg6[%c0_105, %c0_106, %c0_107, %c0_108], %357 {strides = array<i32>} : memref<1x8x8x128xf32, #tpu.memory_space<vmem>>, vector<1x8x8x128xf32>,
    return
  }
  func.func @transform_0(%arg0: i32, %arg1: i32, %arg2: i32) -> (i32, i32, i32, i32, i32) {
    %c0_i32 = arith.constant 0 : i32
    %c0_i32_0 = arith.constant 0 : i32
    %c0_i32_1 = arith.constant 0 : i32
    return %arg0, %arg1, %c0_i32, %c0_i32_0, %arg2 : i32, i32, i32, i32, i32
  }
  func.func @transform_1(%arg0: i32, %arg1: i32, %arg2: i32) -> (i32, i32, i32) {
    %c0_i32 = arith.constant 0 : i32
    %c0_i32_0 = arith.constant 0 : i32
    %c0_i32_1 = arith.constant 0 : i32
    return %c0_i32, %c0_i32_0, %arg2 : i32, i32, i32
  }
  func.func @transform_2(%arg0: i32, %arg1: i32, %arg2: i32) -> (i32, i32) {
    %c0_i32 = arith.constant 0 : i32
    %c0_i32_0 = arith.constant 0 : i32
    return %c0_i32, %arg2 : i32, i32
  }
  func.func @transform_3(%arg0: i32, %arg1: i32, %arg2: i32) -> (i32, i32, i32, i32) {
    %c0_i32 = arith.constant 0 : i32
    %c0_i32_0 = arith.constant 0 : i32
    return %arg0, %arg1, %c0_i32, %arg2 : i32, i32, i32, i32
  }
}

</mosaic_0001>

<llo_original>
// kernel: tpu_custom_call.1
$region0: #{tpu_custom_call.1}
  #allocation0 [shape = 'u32[]', space=smem, size = 0x4, offset = 0x4, fixed_abs, tag = 'smem constant byte address 0x4 - core index']
  #allocation1 [shape = 'u32[144,128]{1,0:T(1,128)}', space=vmem, size = 0x12000, scoped, tag = 'internal scratch']
  %s0 = inlined_call_operand.vmem [shape: f32[2,1,14,14,128], index: 0, kind: input, shape index: {}]
  %s1 = inlined_call_operand.vmem [shape: f32[49,1,128], index: 1, kind: input, shape index: {}]
  %s2 = inlined_call_operand.vmem [shape: f32[1,128], index: 2, kind: input, shape index: {}]
  %s3 = inlined_call_operand.hbm [shape: f32[2,8,8,128], index: 3, kind: output, shape index: {}]
  %s4 = sld [smem:[#allocation0]]
  $region45: #{tpu_custom_call.1} parent=0
    _
  %s6 = ssub.s32 1, %s4
  %s7 = scalar_select 0, %s6, %s4
  $region1: #{tpu_custom_call.1} parent=0
    #allocation2 [shape = 'u8[65536]{0}', space=vmem, size = 0x10000, scoped, tag = 'output window, operand 0']
    #allocation3 [shape = 's32[2]{0}', space=sflag, size = 0x8, scoped, tag = 'scoped memory for tpu_custom_call.1']
    %8 = vsyncpa [#allocation3], 0
    %s9 = scalar_lea.sflag [#allocation3], 1
    %10 = vsyncpa %s9, 0
    loop: start=0, step=1, limit=4
    $region2: #{tpu_custom_call.1} parent=1 // loop_pre_header
      _
    $region3: #{tpu_custom_call.1} parent=1 // loop_header
      %s12 = sphi 0, %s16
      %p13 = scmp.ge.s32.totalorder %s12, 4
      %s19 = sphi 0, %s38
      %s20 = sphi 0, %s34
      %s21 = sphi 0, %s30
      %s22 = sphi 0, %s19
      %s23 = sphi 0, %s20
      %s24 = sphi 0, %s21
      %s25 = sphi 0, %s22
      %s26 = sphi 0, %s23
      %s27 = sphi 0, %s24
      %s45 = sphi 0, %s47
      %s48 = sphi 0, %s45
      %s49 = sphi 0, %s48
      %s65 = sphi 0, %s49
      %s71 = sphi 0, %s73
      %s74 = sphi 0, %s71
      %s75 = sphi 0, %s74
      %s91 = sphi 0, %s75
      %s97 = sphi 0, %s99
      %s100 = sphi 0, %s97
      %s101 = sphi 0, %s100
      %s117 = sphi 0, %s101
      %s127 = sphi 0, %s129
      %s130 = sphi 0, %s127
      %s131 = sphi 0, %s130
      %s147 = sphi 0, %s131
    $region4: #{tpu_custom_call.1} parent=1 // loop_header_branch
      %15 = sbr.rel (%p13) target = $region8
    $region5: #{tpu_custom_call.1} parent=1 // loop_body
      %s17 = ssub.s32 %s12, 1
      %s18 = ssub.s32 %s12, 2
      %s28 = sadd.s32 1, %s21
      %p29 = scmp.ge.s32.totalorder %s28, 1
      %s30 = scalar_select %p29, 0, %s28
      %s31 = sadd.s32 1, %s20
      %s32 = scalar_select %p29, %s31, %s20
      %p33 = scmp.ge.s32.totalorder %s32, 1
      %s34 = scalar_select %p33, 0, %s32
      %s35 = sadd.s32 1, %s19
      %s36 = scalar_select %p33, %s35, %s19
      %p37 = scmp.ge.s32.totalorder %s36, 2
      %s38 = scalar_select %p37, 0, %s36
      %s39 = ssub.s32 %s19, %s38
      %s40 = ssub.s32 %s20, %s34
      %s41 = sor.u32 %s39, %s40
      %s42 = ssub.s32 %s21, %s30
      %s43 = sor.u32 %s41, %s42
      %p44 = scmp.eq.s32.totalorder %s43, 0
      %s46 = sadd.s32 %s45, 1
      %s47 = scalar_select %p44, %s45, %s46
      %p50 = pneg %p44
      %p51 = scmp.eq.s32.totalorder %s12, 1
      %p52 = por %p50, %p51
      %p53 = scmp.ne.s32.totalorder %s45, %s48
      %p54 = scmp.eq.s32.totalorder %s12, 0
      %p55 = por %p53, %p54
      %p56 = scmp.ne.s32.totalorder %s45, %s48
      %p57 = scmp.eq.s32.totalorder %s17, 1
      %p58 = por %p56, %p57
      %p59 = scmp.ne.s32.totalorder %s48, %s49
      %p60 = scmp.eq.s32.totalorder %s17, 0
      %p61 = por %p59, %p60
      %p62 = scmp.ne.s32.totalorder %s48, %s49
      %p63 = scmp.eq.s32.totalorder %s18, 1
      %p64 = por %p62, %p63
      %p66 = scmp.ne.s32.totalorder %s49, %s65
      %p67 = scmp.eq.s32.totalorder %s18, 0
      %p68 = por %p66, %p67
      %s69 = ssub.s32 %s21, %s30
      %p70 = scmp.eq.s32.totalorder %s69, 0
      %s72 = sadd.s32 %s71, 1
      %s73 = scalar_select %p70, %s71, %s72
      %p76 = pneg %p70
      %p77 = scmp.eq.s32.totalorder %s12, 1
      %p78 = por %p76, %p77
      %p79 = scmp.ne.s32.totalorder %s71, %s74
      %p80 = scmp.eq.s32.totalorder %s12, 0
      %p81 = por %p79, %p80
      %p82 = scmp.ne.s32.totalorder %s71, %s74
      %p83 = scmp.eq.s32.totalorder %s17, 1
      %p84 = por %p82, %p83
      %p85 = scmp.ne.s32.totalorder %s74, %s75
      %p86 = scmp.eq.s32.totalorder %s17, 0
      %p87 = por %p85, %p86
      %p88 = scmp.ne.s32.totalorder %s74, %s75
      %p89 = scmp.eq.s32.totalorder %s18, 1
      %p90 = por %p88, %p89
      %p92 = scmp.ne.s32.totalorder %s75, %s91
      %p93 = scmp.eq.s32.totalorder %s18, 0
      %p94 = por %p92, %p93
      %s95 = ssub.s32 %s21, %s30
      %p96 = scmp.eq.s32.totalorder %s95, 0
      %s98 = sadd.s32 %s97, 1
      %s99 = scalar_select %p96, %s97, %s98
      %p102 = pneg %p96
      %p103 = scmp.eq.s32.totalorder %s12, 1
      %p104 = por %p102, %p103
      %p105 = scmp.ne.s32.totalorder %s97, %s100
      %p106 = scmp.eq.s32.totalorder %s12, 0
      %p107 = por %p105, %p106
      %p108 = scmp.ne.s32.totalorder %s97, %s100
      %p109 = scmp.eq.s32.totalorder %s17, 1
      %p110 = por %p108, %p109
      %p111 = scmp.ne.s32.totalorder %s100, %s101
      %p112 = scmp.eq.s32.totalorder %s17, 0
      %p113 = por %p111, %p112
      %p114 = scmp.ne.s32.totalorder %s100, %s101
      %p115 = scmp.eq.s32.totalorder %s18, 1
      %p116 = por %p114, %p115
      %p118 = scmp.ne.s32.totalorder %s101, %s117
      %p119 = scmp.eq.s32.totalorder %s18, 0
      %p120 = por %p118, %p119
      %s121 = ssub.s32 %s19, %s38
      %s122 = ssub.s32 %s20, %s34
      %s123 = sor.u32 %s121, %s122
      %s124 = ssub.s32 %s21, %s30
      %s125 = sor.u32 %s123, %s124
      %p126 = scmp.eq.s32.totalorder %s125, 0
      %s128 = sadd.s32 %s127, 1
      %s129 = scalar_select %p126, %s127, %s128
      %p132 = pneg %p126
      %p133 = scmp.eq.s32.totalorder %s12, 1
      %p134 = por %p132, %p133
      %p135 = scmp.ne.s32.totalorder %s127, %s130
      %p136 = scmp.eq.s32.totalorder %s12, 0
      %p137 = por %p135, %p136
      %p138 = scmp.ne.s32.totalorder %s127, %s130
      %p139 = scmp.eq.s32.totalorder %s17, 1
      %p140 = por %p138, %p139
      %p141 = scmp.ne.s32.totalorder %s130, %s131
      %p142 = scmp.eq.s32.totalorder %s17, 0
      %p143 = por %p141, %p142
      %p144 = scmp.ne.s32.totalorder %s130, %s131
      %p145 = scmp.eq.s32.totalorder %s18, 1
      %p146 = por %p144, %p145
      %p148 = scmp.ne.s32.totalorder %s131, %s147
      %p149 = scmp.eq.s32.totalorder %s18, 0
      %p150 = por %p148, %p149
      %p151 = scmp.le.s32.totalorder 1, %s12
      %p152 = scmp.lt.s32.totalorder %s12, 3
      %p153 = pnand %p151, %p152
      %p154 = pneg %p153
      // Predicated region
      $region9: #{tpu_custom_call.1} parent=5 // pred_check
        _
      $region10: #{tpu_custom_call.1} parent=5 // pred_check_branch
        %156 = sbr.rel (%p153) target = $region12
      $region11: #{tpu_custom_call.1} parent=5 // pred_region
        %s157 = ssub.s32 %s12, 1
        // Predicated region
        $region13: #{tpu_custom_call.1} parent=11 // pred_check
          %p158 = pneg %p87
        $region14: #{tpu_custom_call.1} parent=11 // pred_check_branch
          %160 = sbr.rel (%p158) target = $region16
        $region15: #{tpu_custom_call.1} parent=11 // pred_region
          %p161 = scmp.lt.s32.totalorder %s24, 0
          %s162 = scalar_select %p161, %s24, 0
          %s163 = scalar_lea.vmem %s1, %s162
        $region16: #{tpu_custom_call.1} parent=11 // pred_fallthru
          _
        // Predicated region
        $region17: #{tpu_custom_call.1} parent=11 // pred_check
          %p164 = pneg %p113
        $region18: #{tpu_custom_call.1} parent=11 // pred_check_branch
          %166 = sbr.rel (%p164) target = $region20
        $region19: #{tpu_custom_call.1} parent=11 // pred_region
          %p167 = scmp.lt.s32.totalorder %s24, 0
          %s168 = scalar_select %p167, %s24, 0
          %s169 = scalar_lea.vmem %s2, %s168
        $region20: #{tpu_custom_call.1} parent=11 // pred_fallthru
          _
      $region12: #{tpu_custom_call.1} parent=5 // pred_fallthru
        _
      %p170 = scmp.lt.s32.totalorder %s12, 2
      // Predicated region
      $region21: #{tpu_custom_call.1} parent=5 // pred_check
        %p171 = pneg %p170
      $region22: #{tpu_custom_call.1} parent=5 // pred_check_branch
        %173 = sbr.rel (%p171) target = $region24
      $region23: #{tpu_custom_call.1} parent=5 // pred_region
        // Predicated region
        $region25: #{tpu_custom_call.1} parent=23 // pred_check
          %p174 = pneg %p55
        $region26: #{tpu_custom_call.1} parent=23 // pred_check_branch
          %176 = sbr.rel (%p174) target = $region28
        $region27: #{tpu_custom_call.1} parent=23 // pred_region
          %p177 = scmp.lt.s32.totalorder %s19, 1
          %s178 = scalar_select %p177, %s19, 1
          %p179 = scmp.lt.s32.totalorder %s20, 0
          %s180 = scalar_select %p179, %s20, 0
          %p181 = scmp.lt.s32.totalorder %s21, 0
          %s182 = scalar_select %p181, %s21, 0
          %s183 = smul.addr %s180, 28
          %s184 = sadd.s32 %s182, %s183
          %s185 = smul.addr %s178, 28
          %s186 = sadd.s32 %s184, %s185
          %s187 = smul.addr %s186, 8
          %s188 = scalar_lea.vmem %s0, %s187
        $region28: #{tpu_custom_call.1} parent=23 // pred_fallthru
          _
      $region24: #{tpu_custom_call.1} parent=5 // pred_fallthru
        _
      %p189 = scmp.le.s32.totalorder 1, %s12
      %p190 = scmp.lt.s32.totalorder %s12, 3
      %p191 = pnand %p189, %p190
      %p192 = pneg %p191
      // Predicated region
      $region29: #{tpu_custom_call.1} parent=5 // pred_check
        _
      $region30: #{tpu_custom_call.1} parent=5 // pred_check_branch
        %194 = sbr.rel (%p191) target = $region32
      $region31: #{tpu_custom_call.1} parent=5 // pred_region
        %s195 = ssub.s32 %s12, 1
        %p196 = scmp.lt.s32.totalorder %s22, 1
        %s197 = scalar_select %p196, %s22, 1
        %p198 = scmp.lt.s32.totalorder %s23, 0
        %s199 = scalar_select %p198, %s23, 0
        %p200 = scmp.lt.s32.totalorder %s24, 0
        %s201 = scalar_select %p200, %s24, 0
        %s202 = smul.addr %s199, 28
        %s203 = sadd.s32 %s201, %s202
        %s204 = smul.addr %s197, 28
        %s205 = sadd.s32 %s203, %s204
        %s206 = smul.addr %s205, 8
        %s207 = scalar_lea.vmem %s0, %s206
        %p208 = pneg %p61
        %p209 = pneg %p58
        %p210 = scmp.lt.s32.totalorder %s24, 0
        %s211 = scalar_select %p210, %s24, 0
        %s212 = scalar_lea.vmem %s1, %s211
        %p213 = pneg %p87
        %p214 = pneg %p84
        %p215 = scmp.lt.s32.totalorder %s24, 0
        %s216 = scalar_select %p215, %s24, 0
        %s217 = scalar_lea.vmem %s2, %s216
        %p218 = pneg %p113
        %p219 = pneg %p110
        %p220 = pneg %p143
        %p221 = pneg %p140
        %s222 = sand.u32 %s130, 1
        %s223 = scalar_lea.sflag [#allocation3], %s222
        %s224 = sand.u32 %s130, 1
        %s225 = smul.addr %s224, 64
        %s226 = scalar_lea.vmem [#allocation2], %s225
        %p227 = scmp.lt.s32.totalorder %s22, 1
        %s228 = scalar_select %p227, %s22, 1
        %p229 = scmp.lt.s32.totalorder %s23, 0
        %s230 = scalar_select %p229, %s23, 0
        %p231 = scmp.lt.s32.totalorder %s24, 0
        %s232 = scalar_select %p231, %s24, 0
        %s233 = smul.addr %s230, 28
        %s234 = sadd.s32 %s232, %s233
        %s235 = smul.addr %s228, 28
        %s236 = sadd.s32 %s234, %s235
        %s237 = smul.addr %s236, 8
        %s238 = scalar_lea.vmem %s0, %s237
        %p239 = scmp.lt.s32.totalorder %s24, 0
        %s240 = scalar_select %p239, %s24, 0
        %s241 = scalar_lea.vmem %s1, %s240
        %p242 = scmp.lt.s32.totalorder %s24, 0
        %s243 = scalar_select %p242, %s24, 0
        %s244 = scalar_lea.vmem %s2, %s243
        %s245 = smul.u32 8, %s23
        %v246 = vld [vmem:[%s238] sm:$0xff]
        %v247 = vld [vmem:[%s238 + $0x8] sm:$0x3f]
        %v248 = vld [vmem:[%s238 + $0x10] sm:$0xff]
        %v249 = vld [vmem:[%s238 + $0x18] sm:$0x3f]
        %v250 = vld [vmem:[%s238 + $0x20] sm:$0xff]
        %v251 = vld [vmem:[%s238 + $0x28] sm:$0x3f]
        %v252 = vld [vmem:[%s238 + $0x30] sm:$0xff]
        %v253 = vld [vmem:[%s238 + $0x38] sm:$0x3f]
        %v254 = vld [vmem:[%s238 + $0x40] sm:$0xff]
        %v255 = vld [vmem:[%s238 + $0x48] sm:$0x3f]
        %v256 = vld [vmem:[%s238 + $0x50] sm:$0xff]
        %v257 = vld [vmem:[%s238 + $0x58] sm:$0x3f]
        %v258 = vld [vmem:[%s238 + $0x60] sm:$0xff]
        %v259 = vld [vmem:[%s238 + $0x68] sm:$0x3f]
        %v260 = vld [vmem:[%s238 + $0x70] sm:$0xff]
        %v261 = vld [vmem:[%s238 + $0x78] sm:$0x3f]
        %v262 = vld [vmem:[%s238 + $0x80] sm:$0xff]
        %v263 = vld [vmem:[%s238 + $0x88] sm:$0x3f]
        %v264 = vld [vmem:[%s238 + $0x90] sm:$0xff]
        %v265 = vld [vmem:[%s238 + $0x98] sm:$0x3f]
        %v266 = vld [vmem:[%s238 + $0xa0] sm:$0xff]
        %v267 = vld [vmem:[%s238 + $0xa8] sm:$0x3f]
        %v268 = vld [vmem:[%s238 + $0xb0] sm:$0xff]
        %v269 = vld [vmem:[%s238 + $0xb8] sm:$0x3f]
        %v270 = vld [vmem:[%s238 + $0xc0] sm:$0xff]
        %v271 = vld [vmem:[%s238 + $0xc8] sm:$0x3f]
        %v272 = vld [vmem:[%s238 + $0xd0] sm:$0xff]
        %v273 = vld [vmem:[%s238 + $0xd8] sm:$0x3f]
        %v274 = vld [vmem:[%s244] sm:$0x1]
        %v276 = vlaneseq
        %v277 = vshrl.u32 %v276, 7
        %v278 = vsub.s32 0, %v277
        %v279 = vrot.slane %v274, %v278
        %v281 = vld [vmem:[%s241] sm:$0x1]
        %v283 = vlaneseq
        %v284 = vshrl.u32 %v283, 7
        %v285 = vsub.s32 0, %v284
        %v286 = vrot.slane %v281, %v285
        %v288 = vmul.f32 %v246, %v286
        %v289 = vmul.f32 %v248, %v286
        %v290 = vmul.f32 %v250, %v286
        %v291 = vmul.f32 %v252, %v286
        %v292 = vmul.f32 %v254, %v286
        %v293 = vmul.f32 %v256, %v286
        %v294 = vmul.f32 %v258, %v286
        %v295 = vmul.f32 %v260, %v286
        %v296 = vadd.f32 %v279, %v288
        %v297 = vadd.f32 %v279, %v289
        %v298 = vadd.f32 %v279, %v290
        %v299 = vadd.f32 %v279, %v291
        %v300 = vadd.f32 %v279, %v292
        %v301 = vadd.f32 %v279, %v293
        %v302 = vadd.f32 %v279, %v294
        %v303 = vadd.f32 %v279, %v295
        %s304 = scalar_lea.vmem %s241, 7
        %v305 = vld [vmem:[%s304] sm:$0x1]
        %v307 = vlaneseq
        %v308 = vshrl.u32 %v307, 7
        %v309 = vsub.s32 0, %v308
        %v310 = vrot.slane %v305, %v309
        %v312 = vmul.f32 %v248, %v310
        %v313 = vmul.f32 %v250, %v310
        %v314 = vmul.f32 %v252, %v310
        %v315 = vmul.f32 %v254, %v310
        %v316 = vmul.f32 %v256, %v310
        %v317 = vmul.f32 %v258, %v310
        %v318 = vmul.f32 %v260, %v310
        %v319 = vmul.f32 %v262, %v310
        %v320 = vadd.f32 %v296, %v312
        %v321 = vadd.f32 %v297, %v313
        %v322 = vadd.f32 %v298, %v314
        %v323 = vadd.f32 %v299, %v315
        %v324 = vadd.f32 %v300, %v316
        %v325 = vadd.f32 %v301, %v317
        %v326 = vadd.f32 %v302, %v318
        %v327 = vadd.f32 %v303, %v319
        %s328 = scalar_lea.vmem %s241, 14
        %v329 = vld [vmem:[%s328] sm:$0x1]
        %v331 = vlaneseq
        %v332 = vshrl.u32 %v331, 7
        %v333 = vsub.s32 0, %v332
        %v334 = vrot.slane %v329, %v333
        %v336 = vmul.f32 %v250, %v334
        %v337 = vmul.f32 %v252, %v334
        %v338 = vmul.f32 %v254, %v334
        %v339 = vmul.f32 %v256, %v334
        %v340 = vmul.f32 %v258, %v334
        %v341 = vmul.f32 %v260, %v334
        %v342 = vmul.f32 %v262, %v334
        %v343 = vmul.f32 %v264, %v334
        %v344 = vadd.f32 %v320, %v336
        %v345 = vadd.f32 %v321, %v337
        %v346 = vadd.f32 %v322, %v338
        %v347 = vadd.f32 %v323, %v339
        %v348 = vadd.f32 %v324, %v340
        %v349 = vadd.f32 %v325, %v341
        %v350 = vadd.f32 %v326, %v342
        %v351 = vadd.f32 %v327, %v343
        %s352 = scalar_lea.vmem %s241, 21
        %v353 = vld [vmem:[%s352] sm:$0x1]
        %v355 = vlaneseq
        %v356 = vshrl.u32 %v355, 7
        %v357 = vsub.s32 0, %v356
        %v358 = vrot.slane %v353, %v357
        %v360 = vmul.f32 %v252, %v358
        %v361 = vmul.f32 %v254, %v358
        %v362 = vmul.f32 %v256, %v358
        %v363 = vmul.f32 %v258, %v358
        %v364 = vmul.f32 %v260, %v358
        %v365 = vmul.f32 %v262, %v358
        %v366 = vmul.f32 %v264, %v358
        %v367 = vmul.f32 %v266, %v358
        %v368 = vadd.f32 %v344, %v360
        %v369 = vadd.f32 %v345, %v361
        %v370 = vadd.f32 %v346, %v362
        %v371 = vadd.f32 %v347, %v363
        %v372 = vadd.f32 %v348, %v364
        %v373 = vadd.f32 %v349, %v365
        %v374 = vadd.f32 %v350, %v366
        %v375 = vadd.f32 %v351, %v367
        %s376 = scalar_lea.vmem %s241, 28
        %v377 = vld [vmem:[%s376] sm:$0x1]
        %v379 = vlaneseq
        %v380 = vshrl.u32 %v379, 7
        %v381 = vsub.s32 0, %v380
        %v382 = vrot.slane %v377, %v381
        %v384 = vmul.f32 %v254, %v382
        %v385 = vmul.f32 %v256, %v382
        %v386 = vmul.f32 %v258, %v382
        %v387 = vmul.f32 %v260, %v382
        %v388 = vmul.f32 %v262, %v382
        %v389 = vmul.f32 %v264, %v382
        %v390 = vmul.f32 %v266, %v382
        %v391 = vmul.f32 %v268, %v382
        %v392 = vadd.f32 %v368, %v384
        %v393 = vadd.f32 %v369, %v385
        %v394 = vadd.f32 %v370, %v386
        %v395 = vadd.f32 %v371, %v387
        %v396 = vadd.f32 %v372, %v388
        %v397 = vadd.f32 %v373, %v389
        %v398 = vadd.f32 %v374, %v390
        %v399 = vadd.f32 %v375, %v391
        %s400 = scalar_lea.vmem %s241, 35
        %v401 = vld [vmem:[%s400] sm:$0x1]
        %v403 = vlaneseq
        %v404 = vshrl.u32 %v403, 7
        %v405 = vsub.s32 0, %v404
        %v406 = vrot.slane %v401, %v405
        %v408 = vmul.f32 %v256, %v406
        %v409 = vmul.f32 %v258, %v406
        %v410 = vmul.f32 %v260, %v406
        %v411 = vmul.f32 %v262, %v406
        %v412 = vmul.f32 %v264, %v406
        %v413 = vmul.f32 %v266, %v406
        %v414 = vmul.f32 %v268, %v406
        %v415 = vmul.f32 %v270, %v406
        %v416 = vadd.f32 %v392, %v408
        %v417 = vadd.f32 %v393, %v409
        %v418 = vadd.f32 %v394, %v410
        %v419 = vadd.f32 %v395, %v411
        %v420 = vadd.f32 %v396, %v412
        %v421 = vadd.f32 %v397, %v413
        %v422 = vadd.f32 %v398, %v414
        %v423 = vadd.f32 %v399, %v415
        %s424 = scalar_lea.vmem %s241, 42
        %v425 = vld [vmem:[%s424] sm:$0x1]
        %v427 = vlaneseq
        %v428 = vshrl.u32 %v427, 7
        %v429 = vsub.s32 0, %v428
        %v430 = vrot.slane %v425, %v429
        %v432 = vmul.f32 %v258, %v430
        %v433 = vmul.f32 %v260, %v430
        %v434 = vmul.f32 %v262, %v430
        %v435 = vmul.f32 %v264, %v430
        %v436 = vmul.f32 %v266, %v430
        %v437 = vmul.f32 %v268, %v430
        %v438 = vmul.f32 %v270, %v430
        %v439 = vmul.f32 %v272, %v430
        %v440 = vadd.f32 %v416, %v432
        %v441 = vadd.f32 %v417, %v433
        %v442 = vadd.f32 %v418, %v434
        %v443 = vadd.f32 %v419, %v435
        %v444 = vadd.f32 %v420, %v436
        %v445 = vadd.f32 %v421, %v437
        %v446 = vadd.f32 %v422, %v438
        %v447 = vadd.f32 %v423, %v439
        %s448 = scalar_lea.vmem %s241, 1
        %v449 = vld [vmem:[%s448] sm:$0x1]
        %v451 = vlaneseq
        %v452 = vshrl.u32 %v451, 7
        %v453 = vsub.s32 0, %v452
        %v454 = vrot.slane %v449, %v453
        %v456 = vmul.f32 %v246, %v454
        %v457 = vmul.f32 %v247, %v454
        %v458 = vmul.f32 %v248, %v454
        %v459 = vmul.f32 %v249, %v454
        %v460 = vmul.f32 %v250, %v454
        %v461 = vmul.f32 %v251, %v454
        %v462 = vmul.f32 %v252, %v454
        %v463 = vmul.f32 %v253, %v454
        %v464 = vmul.f32 %v254, %v454
        %v465 = vmul.f32 %v255, %v454
        %v466 = vmul.f32 %v256, %v454
        %v467 = vmul.f32 %v257, %v454
        %v468 = vmul.f32 %v258, %v454
        %v469 = vmul.f32 %v259, %v454
        %v470 = vmul.f32 %v260, %v454
        %v471 = vmul.f32 %v261, %v454
        %vm488 = vcmask 1046528
        %v489 = vrot.slane %v456, 1
        %v490 = vrot.slane %v457, 1
        %v491 = vsel %vm488, %v489, %v490
        %v492 = vrot.slane %v458, 1
        %v493 = vrot.slane %v459, 1
        %v494 = vsel %vm488, %v492, %v493
        %v495 = vrot.slane %v460, 1
        %v496 = vrot.slane %v461, 1
        %v497 = vsel %vm488, %v495, %v496
        %v498 = vrot.slane %v462, 1
        %v499 = vrot.slane %v463, 1
        %v500 = vsel %vm488, %v498, %v499
        %v501 = vrot.slane %v464, 1
        %v502 = vrot.slane %v465, 1
        %v503 = vsel %vm488, %v501, %v502
        %v504 = vrot.slane %v466, 1
        %v505 = vrot.slane %v467, 1
        %v506 = vsel %vm488, %v504, %v505
        %v507 = vrot.slane %v468, 1
        %v508 = vrot.slane %v469, 1
        %v509 = vsel %vm488, %v507, %v508
        %v510 = vrot.slane %v470, 1
        %v511 = vrot.slane %v471, 1
        %v512 = vsel %vm488, %v510, %v511
        %v521 = vadd.f32 %v440, %v491
        %v522 = vadd.f32 %v441, %v494
        %v523 = vadd.f32 %v442, %v497
        %v524 = vadd.f32 %v443, %v500
        %v525 = vadd.f32 %v444, %v503
        %v526 = vadd.f32 %v445, %v506
        %v527 = vadd.f32 %v446, %v509
        %v528 = vadd.f32 %v447, %v512
        %s529 = scalar_lea.vmem %s241, 8
        %v530 = vld [vmem:[%s529] sm:$0x1]
        %v532 = vlaneseq
        %v533 = vshrl.u32 %v532, 7
        %v534 = vsub.s32 0, %v533
        %v535 = vrot.slane %v530, %v534
        %v537 = vmul.f32 %v248, %v535
        %v538 = vmul.f32 %v249, %v535
        %v539 = vmul.f32 %v250, %v535
        %v540 = vmul.f32 %v251, %v535
        %v541 = vmul.f32 %v252, %v535
        %v542 = vmul.f32 %v253, %v535
        %v543 = vmul.f32 %v254, %v535
        %v544 = vmul.f32 %v255, %v535
        %v545 = vmul.f32 %v256, %v535
        %v546 = vmul.f32 %v257, %v535
        %v547 = vmul.f32 %v258, %v535
        %v548 = vmul.f32 %v259, %v535
        %v549 = vmul.f32 %v260, %v535
        %v550 = vmul.f32 %v261, %v535
        %v551 = vmul.f32 %v262, %v535
        %v552 = vmul.f32 %v263, %v535
        %v569 = vrot.slane %v537, 1
        %v570 = vrot.slane %v538, 1
        %v571 = vsel %vm488, %v569, %v570
        %v572 = vrot.slane %v539, 1
        %v573 = vrot.slane %v540, 1
        %v574 = vsel %vm488, %v572, %v573
        %v575 = vrot.slane %v541, 1
        %v576 = vrot.slane %v542, 1
        %v577 = vsel %vm488, %v575, %v576
        %v578 = vrot.slane %v543, 1
        %v579 = vrot.slane %v544, 1
        %v580 = vsel %vm488, %v578, %v579
        %v581 = vrot.slane %v545, 1
        %v582 = vrot.slane %v546, 1
        %v583 = vsel %vm488, %v581, %v582
        %v584 = vrot.slane %v547, 1
        %v585 = vrot.slane %v548, 1
        %v586 = vsel %vm488, %v584, %v585
        %v587 = vrot.slane %v549, 1
        %v588 = vrot.slane %v550, 1
        %v589 = vsel %vm488, %v587, %v588
        %v590 = vrot.slane %v551, 1
        %v591 = vrot.slane %v552, 1
        %v592 = vsel %vm488, %v590, %v591
        %v601 = vadd.f32 %v521, %v571
        %v602 = vadd.f32 %v522, %v574
        %v603 = vadd.f32 %v523, %v577
        %v604 = vadd.f32 %v524, %v580
        %v605 = vadd.f32 %v525, %v583
        %v606 = vadd.f32 %v526, %v586
        %v607 = vadd.f32 %v527, %v589
        %v608 = vadd.f32 %v528, %v592
        %s609 = scalar_lea.vmem %s241, 15
        %v610 = vld [vmem:[%s609] sm:$0x1]
        %v612 = vlaneseq
        %v613 = vshrl.u32 %v612, 7
        %v614 = vsub.s32 0, %v613
        %v615 = vrot.slane %v610, %v614
        %v617 = vmul.f32 %v250, %v615
        %v618 = vmul.f32 %v251, %v615
        %v619 = vmul.f32 %v252, %v615
        %v620 = vmul.f32 %v253, %v615
        %v621 = vmul.f32 %v254, %v615
        %v622 = vmul.f32 %v255, %v615
        %v623 = vmul.f32 %v256, %v615
        %v624 = vmul.f32 %v257, %v615
        %v625 = vmul.f32 %v258, %v615
        %v626 = vmul.f32 %v259, %v615
        %v627 = vmul.f32 %v260, %v615
        %v628 = vmul.f32 %v261, %v615
        %v629 = vmul.f32 %v262, %v615
        %v630 = vmul.f32 %v263, %v615
        %v631 = vmul.f32 %v264, %v615
        %v632 = vmul.f32 %v265, %v615
        %v649 = vrot.slane %v617, 1
        %v650 = vrot.slane %v618, 1
        %v651 = vsel %vm488, %v649, %v650
        %v652 = vrot.slane %v619, 1
        %v653 = vrot.slane %v620, 1
        %v654 = vsel %vm488, %v652, %v653
        %v655 = vrot.slane %v621, 1
        %v656 = vrot.slane %v622, 1
        %v657 = vsel %vm488, %v655, %v656
        %v658 = vrot.slane %v623, 1
        %v659 = vrot.slane %v624, 1
        %v660 = vsel %vm488, %v658, %v659
        %v661 = vrot.slane %v625, 1
        %v662 = vrot.slane %v626, 1
        %v663 = vsel %vm488, %v661, %v662
        %v664 = vrot.slane %v627, 1
        %v665 = vrot.slane %v628, 1
        %v666 = vsel %vm488, %v664, %v665
        %v667 = vrot.slane %v629, 1
        %v668 = vrot.slane %v630, 1
        %v669 = vsel %vm488, %v667, %v668
        %v670 = vrot.slane %v631, 1
        %v671 = vrot.slane %v632, 1
        %v672 = vsel %vm488, %v670, %v671
        %v681 = vadd.f32 %v601, %v651
        %v682 = vadd.f32 %v602, %v654
        %v683 = vadd.f32 %v603, %v657
        %v684 = vadd.f32 %v604, %v660
        %v685 = vadd.f32 %v605, %v663
        %v686 = vadd.f32 %v606, %v666
        %v687 = vadd.f32 %v607, %v669
        %v688 = vadd.f32 %v608, %v672
        %s689 = scalar_lea.vmem %s241, 22
        %v690 = vld [vmem:[%s689] sm:$0x1]
        %v692 = vlaneseq
        %v693 = vshrl.u32 %v692, 7
        %v694 = vsub.s32 0, %v693
        %v695 = vrot.slane %v690, %v694
        %v697 = vmul.f32 %v252, %v695
        %v698 = vmul.f32 %v253, %v695
        %v699 = vmul.f32 %v254, %v695
        %v700 = vmul.f32 %v255, %v695
        %v701 = vmul.f32 %v256, %v695
        %v702 = vmul.f32 %v257, %v695
        %v703 = vmul.f32 %v258, %v695
        %v704 = vmul.f32 %v259, %v695
        %v705 = vmul.f32 %v260, %v695
        %v706 = vmul.f32 %v261, %v695
        %v707 = vmul.f32 %v262, %v695
        %v708 = vmul.f32 %v263, %v695
        %v709 = vmul.f32 %v264, %v695
        %v710 = vmul.f32 %v265, %v695
        %v711 = vmul.f32 %v266, %v695
        %v712 = vmul.f32 %v267, %v695
        %v729 = vrot.slane %v697, 1
        %v730 = vrot.slane %v698, 1
        %v731 = vsel %vm488, %v729, %v730
        %v732 = vrot.slane %v699, 1
        %v733 = vrot.slane %v700, 1
        %v734 = vsel %vm488, %v732, %v733
        %v735 = vrot.slane %v701, 1
        %v736 = vrot.slane %v702, 1
        %v737 = vsel %vm488, %v735, %v736
        %v738 = vrot.slane %v703, 1
        %v739 = vrot.slane %v704, 1
        %v740 = vsel %vm488, %v738, %v739
        %v741 = vrot.slane %v705, 1
        %v742 = vrot.slane %v706, 1
        %v743 = vsel %vm488, %v741, %v742
        %v744 = vrot.slane %v707, 1
        %v745 = vrot.slane %v708, 1
        %v746 = vsel %vm488, %v744, %v745
        %v747 = vrot.slane %v709, 1
        %v748 = vrot.slane %v710, 1
        %v749 = vsel %vm488, %v747, %v748
        %v750 = vrot.slane %v711, 1
        %v751 = vrot.slane %v712, 1
        %v752 = vsel %vm488, %v750, %v751
        %v761 = vadd.f32 %v681, %v731
        %v762 = vadd.f32 %v682, %v734
        %v763 = vadd.f32 %v683, %v737
        %v764 = vadd.f32 %v684, %v740
        %v765 = vadd.f32 %v685, %v743
        %v766 = vadd.f32 %v686, %v746
        %v767 = vadd.f32 %v687, %v749
        %v768 = vadd.f32 %v688, %v752
        %s769 = scalar_lea.vmem %s241, 29
        %v770 = vld [vmem:[%s769] sm:$0x1]
        %v772 = vlaneseq
        %v773 = vshrl.u32 %v772, 7
        %v774 = vsub.s32 0, %v773
        %v775 = vrot.slane %v770, %v774
        %v777 = vmul.f32 %v254, %v775
        %v778 = vmul.f32 %v255, %v775
        %v779 = vmul.f32 %v256, %v775
        %v780 = vmul.f32 %v257, %v775
        %v781 = vmul.f32 %v258, %v775
        %v782 = vmul.f32 %v259, %v775
        %v783 = vmul.f32 %v260, %v775
        %v784 = vmul.f32 %v261, %v775
        %v785 = vmul.f32 %v262, %v775
        %v786 = vmul.f32 %v263, %v775
        %v787 = vmul.f32 %v264, %v775
        %v788 = vmul.f32 %v265, %v775
        %v789 = vmul.f32 %v266, %v775
        %v790 = vmul.f32 %v267, %v775
        %v791 = vmul.f32 %v268, %v775
        %v792 = vmul.f32 %v269, %v775
        %v809 = vrot.slane %v777, 1
        %v810 = vrot.slane %v778, 1
        %v811 = vsel %vm488, %v809, %v810
        %v812 = vrot.slane %v779, 1
        %v813 = vrot.slane %v780, 1
        %v814 = vsel %vm488, %v812, %v813
        %v815 = vrot.slane %v781, 1
        %v816 = vrot.slane %v782, 1
        %v817 = vsel %vm488, %v815, %v816
        %v818 = vrot.slane %v783, 1
        %v819 = vrot.slane %v784, 1
        %v820 = vsel %vm488, %v818, %v819
        %v821 = vrot.slane %v785, 1
        %v822 = vrot.slane %v786, 1
        %v823 = vsel %vm488, %v821, %v822
        %v824 = vrot.slane %v787, 1
        %v825 = vrot.slane %v788, 1
        %v826 = vsel %vm488, %v824, %v825
        %v827 = vrot.slane %v789, 1
        %v828 = vrot.slane %v790, 1
        %v829 = vsel %vm488, %v827, %v828
        %v830 = vrot.slane %v791, 1
        %v831 = vrot.slane %v792, 1
        %v832 = vsel %vm488, %v830, %v831
        %v841 = vadd.f32 %v761, %v811
        %v842 = vadd.f32 %v762, %v814
        %v843 = vadd.f32 %v763, %v817
        %v844 = vadd.f32 %v764, %v820
        %v845 = vadd.f32 %v765, %v823
        %v846 = vadd.f32 %v766, %v826
        %v847 = vadd.f32 %v767, %v829
        %v848 = vadd.f32 %v768, %v832
        %s849 = scalar_lea.vmem %s241, 36
        %v850 = vld [vmem:[%s849] sm:$0x1]
        %v852 = vlaneseq
        %v853 = vshrl.u32 %v852, 7
        %v854 = vsub.s32 0, %v853
        %v855 = vrot.slane %v850, %v854
        %v857 = vmul.f32 %v256, %v855
        %v858 = vmul.f32 %v257, %v855
        %v859 = vmul.f32 %v258, %v855
        %v860 = vmul.f32 %v259, %v855
        %v861 = vmul.f32 %v260, %v855
        %v862 = vmul.f32 %v261, %v855
        %v863 = vmul.f32 %v262, %v855
        %v864 = vmul.f32 %v263, %v855
        %v865 = vmul.f32 %v264, %v855
        %v866 = vmul.f32 %v265, %v855
        %v867 = vmul.f32 %v266, %v855
        %v868 = vmul.f32 %v267, %v855
        %v869 = vmul.f32 %v268, %v855
        %v870 = vmul.f32 %v269, %v855
        %v871 = vmul.f32 %v270, %v855
        %v872 = vmul.f32 %v271, %v855
        %v889 = vrot.slane %v857, 1
        %v890 = vrot.slane %v858, 1
        %v891 = vsel %vm488, %v889, %v890
        %v892 = vrot.slane %v859, 1
        %v893 = vrot.slane %v860, 1
        %v894 = vsel %vm488, %v892, %v893
        %v895 = vrot.slane %v861, 1
        %v896 = vrot.slane %v862, 1
        %v897 = vsel %vm488, %v895, %v896
        %v898 = vrot.slane %v863, 1
        %v899 = vrot.slane %v864, 1
        %v900 = vsel %vm488, %v898, %v899
        %v901 = vrot.slane %v865, 1
        %v902 = vrot.slane %v866, 1
        %v903 = vsel %vm488, %v901, %v902
        %v904 = vrot.slane %v867, 1
        %v905 = vrot.slane %v868, 1
        %v906 = vsel %vm488, %v904, %v905
        %v907 = vrot.slane %v869, 1
        %v908 = vrot.slane %v870, 1
        %v909 = vsel %vm488, %v907, %v908
        %v910 = vrot.slane %v871, 1
        %v911 = vrot.slane %v872, 1
        %v912 = vsel %vm488, %v910, %v911
        %v921 = vadd.f32 %v841, %v891
        %v922 = vadd.f32 %v842, %v894
        %v923 = vadd.f32 %v843, %v897
        %v924 = vadd.f32 %v844, %v900
        %v925 = vadd.f32 %v845, %v903
        %v926 = vadd.f32 %v846, %v906
        %v927 = vadd.f32 %v847, %v909
        %v928 = vadd.f32 %v848, %v912
        %s929 = scalar_lea.vmem %s241, 43
        %v930 = vld [vmem:[%s929] sm:$0x1]
        %v932 = vlaneseq
        %v933 = vshrl.u32 %v932, 7
        %v934 = vsub.s32 0, %v933
        %v935 = vrot.slane %v930, %v934
        %v937 = vmul.f32 %v258, %v935
        %v938 = vmul.f32 %v259, %v935
        %v939 = vmul.f32 %v260, %v935
        %v940 = vmul.f32 %v261, %v935
        %v941 = vmul.f32 %v262, %v935
        %v942 = vmul.f32 %v263, %v935
        %v943 = vmul.f32 %v264, %v935
        %v944 = vmul.f32 %v265, %v935
        %v945 = vmul.f32 %v266, %v935
        %v946 = vmul.f32 %v267, %v935
        %v947 = vmul.f32 %v268, %v935
        %v948 = vmul.f32 %v269, %v935
        %v949 = vmul.f32 %v270, %v935
        %v950 = vmul.f32 %v271, %v935
        %v951 = vmul.f32 %v272, %v935
        %v952 = vmul.f32 %v273, %v935
        %v969 = vrot.slane %v937, 1
        %v970 = vrot.slane %v938, 1
        %v971 = vsel %vm488, %v969, %v970
        %v972 = vrot.slane %v939, 1
        %v973 = vrot.slane %v940, 1
        %v974 = vsel %vm488, %v972, %v973
        %v975 = vrot.slane %v941, 1
        %v976 = vrot.slane %v942, 1
        %v977 = vsel %vm488, %v975, %v976
        %v978 = vrot.slane %v943, 1
        %v979 = vrot.slane %v944, 1
        %v980 = vsel %vm488, %v978, %v979
        %v981 = vrot.slane %v945, 1
        %v982 = vrot.slane %v946, 1
        %v983 = vsel %vm488, %v981, %v982
        %v984 = vrot.slane %v947, 1
        %v985 = vrot.slane %v948, 1
        %v986 = vsel %vm488, %v984, %v985
        %v987 = vrot.slane %v949, 1
        %v988 = vrot.slane %v950, 1
        %v989 = vsel %vm488, %v987, %v988
        %v990 = vrot.slane %v951, 1
        %v991 = vrot.slane %v952, 1
        %v992 = vsel %vm488, %v990, %v991
        %v1001 = vadd.f32 %v921, %v971
        %v1002 = vadd.f32 %v922, %v974
        %v1003 = vadd.f32 %v923, %v977
        %v1004 = vadd.f32 %v924, %v980
        %v1005 = vadd.f32 %v925, %v983
        %v1006 = vadd.f32 %v926, %v986
        %v1007 = vadd.f32 %v927, %v989
        %v1008 = vadd.f32 %v928, %v992
        %s1009 = scalar_lea.vmem %s241, 2
        %v1010 = vld [vmem:[%s1009] sm:$0x1]
        %v1012 = vlaneseq
        %v1013 = vshrl.u32 %v1012, 7
        %v1014 = vsub.s32 0, %v1013
        %v1015 = vrot.slane %v1010, %v1014
        %v1017 = vmul.f32 %v246, %v1015
        %v1018 = vmul.f32 %v247, %v1015
        %v1019 = vmul.f32 %v248, %v1015
        %v1020 = vmul.f32 %v249, %v1015
        %v1021 = vmul.f32 %v250, %v1015
        %v1022 = vmul.f32 %v251, %v1015
        %v1023 = vmul.f32 %v252, %v1015
        %v1024 = vmul.f32 %v253, %v1015
        %v1025 = vmul.f32 %v254, %v1015
        %v1026 = vmul.f32 %v255, %v1015
        %v1027 = vmul.f32 %v256, %v1015
        %v1028 = vmul.f32 %v257, %v1015
        %v1029 = vmul.f32 %v258, %v1015
        %v1030 = vmul.f32 %v259, %v1015
        %v1031 = vmul.f32 %v260, %v1015
        %v1032 = vmul.f32 %v261, %v1015
        %vm1049 = vcmask 1045504
        %v1050 = vrot.slane %v1017, 2
        %v1051 = vrot.slane %v1018, 2
        %v1052 = vsel %vm1049, %v1050, %v1051
        %v1053 = vrot.slane %v1019, 2
        %v1054 = vrot.slane %v1020, 2
        %v1055 = vsel %vm1049, %v1053, %v1054
        %v1056 = vrot.slane %v1021, 2
        %v1057 = vrot.slane %v1022, 2
        %v1058 = vsel %vm1049, %v1056, %v1057
        %v1059 = vrot.slane %v1023, 2
        %v1060 = vrot.slane %v1024, 2
        %v1061 = vsel %vm1049, %v1059, %v1060
        %v1062 = vrot.slane %v1025, 2
        %v1063 = vrot.slane %v1026, 2
        %v1064 = vsel %vm1049, %v1062, %v1063
        %v1065 = vrot.slane %v1027, 2
        %v1066 = vrot.slane %v1028, 2
        %v1067 = vsel %vm1049, %v1065, %v1066
        %v1068 = vrot.slane %v1029, 2
        %v1069 = vrot.slane %v1030, 2
        %v1070 = vsel %vm1049, %v1068, %v1069
        %v1071 = vrot.slane %v1031, 2
        %v1072 = vrot.slane %v1032, 2
        %v1073 = vsel %vm1049, %v1071, %v1072
        %v1082 = vadd.f32 %v1001, %v1052
        %v1083 = vadd.f32 %v1002, %v1055
        %v1084 = vadd.f32 %v1003, %v1058
        %v1085 = vadd.f32 %v1004, %v1061
        %v1086 = vadd.f32 %v1005, %v1064
        %v1087 = vadd.f32 %v1006, %v1067
        %v1088 = vadd.f32 %v1007, %v1070
        %v1089 = vadd.f32 %v1008, %v1073
        %s1090 = scalar_lea.vmem %s241, 9
        %v1091 = vld [vmem:[%s1090] sm:$0x1]
        %v1093 = vlaneseq
        %v1094 = vshrl.u32 %v1093, 7
        %v1095 = vsub.s32 0, %v1094
        %v1096 = vrot.slane %v1091, %v1095
        %v1098 = vmul.f32 %v248, %v1096
        %v1099 = vmul.f32 %v249, %v1096
        %v1100 = vmul.f32 %v250, %v1096
        %v1101 = vmul.f32 %v251, %v1096
        %v1102 = vmul.f32 %v252, %v1096
        %v1103 = vmul.f32 %v253, %v1096
        %v1104 = vmul.f32 %v254, %v1096
        %v1105 = vmul.f32 %v255, %v1096
        %v1106 = vmul.f32 %v256, %v1096
        %v1107 = vmul.f32 %v257, %v1096
        %v1108 = vmul.f32 %v258, %v1096
        %v1109 = vmul.f32 %v259, %v1096
        %v1110 = vmul.f32 %v260, %v1096
        %v1111 = vmul.f32 %v261, %v1096
        %v1112 = vmul.f32 %v262, %v1096
        %v1113 = vmul.f32 %v263, %v1096
        %v1130 = vrot.slane %v1098, 2
        %v1131 = vrot.slane %v1099, 2
        %v1132 = vsel %vm1049, %v1130, %v1131
        %v1133 = vrot.slane %v1100, 2
        %v1134 = vrot.slane %v1101, 2
        %v1135 = vsel %vm1049, %v1133, %v1134
        %v1136 = vrot.slane %v1102, 2
        %v1137 = vrot.slane %v1103, 2
        %v1138 = vsel %vm1049, %v1136, %v1137
        %v1139 = vrot.slane %v1104, 2
        %v1140 = vrot.slane %v1105, 2
        %v1141 = vsel %vm1049, %v1139, %v1140
        %v1142 = vrot.slane %v1106, 2
        %v1143 = vrot.slane %v1107, 2
        %v1144 = vsel %vm1049, %v1142, %v1143
        %v1145 = vrot.slane %v1108, 2
        %v1146 = vrot.slane %v1109, 2
        %v1147 = vsel %vm1049, %v1145, %v1146
        %v1148 = vrot.slane %v1110, 2
        %v1149 = vrot.slane %v1111, 2
        %v1150 = vsel %vm1049, %v1148, %v1149
        %v1151 = vrot.slane %v1112, 2
        %v1152 = vrot.slane %v1113, 2
        %v1153 = vsel %vm1049, %v1151, %v1152
        %v1162 = vadd.f32 %v1082, %v1132
        %v1163 = vadd.f32 %v1083, %v1135
        %v1164 = vadd.f32 %v1084, %v1138
        %v1165 = vadd.f32 %v1085, %v1141
        %v1166 = vadd.f32 %v1086, %v1144
        %v1167 = vadd.f32 %v1087, %v1147
        %v1168 = vadd.f32 %v1088, %v1150
        %v1169 = vadd.f32 %v1089, %v1153
        %s1170 = scalar_lea.vmem %s241, 16
        %v1171 = vld [vmem:[%s1170] sm:$0x1]
        %v1173 = vlaneseq
        %v1174 = vshrl.u32 %v1173, 7
        %v1175 = vsub.s32 0, %v1174
        %v1176 = vrot.slane %v1171, %v1175
        %v1178 = vmul.f32 %v250, %v1176
        %v1179 = vmul.f32 %v251, %v1176
        %v1180 = vmul.f32 %v252, %v1176
        %v1181 = vmul.f32 %v253, %v1176
        %v1182 = vmul.f32 %v254, %v1176
        %v1183 = vmul.f32 %v255, %v1176
        %v1184 = vmul.f32 %v256, %v1176
        %v1185 = vmul.f32 %v257, %v1176
        %v1186 = vmul.f32 %v258, %v1176
        %v1187 = vmul.f32 %v259, %v1176
        %v1188 = vmul.f32 %v260, %v1176
        %v1189 = vmul.f32 %v261, %v1176
        %v1190 = vmul.f32 %v262, %v1176
        %v1191 = vmul.f32 %v263, %v1176
        %v1192 = vmul.f32 %v264, %v1176
        %v1193 = vmul.f32 %v265, %v1176
        %v1210 = vrot.slane %v1178, 2
        %v1211 = vrot.slane %v1179, 2
        %v1212 = vsel %vm1049, %v1210, %v1211
        %v1213 = vrot.slane %v1180, 2
        %v1214 = vrot.slane %v1181, 2
        %v1215 = vsel %vm1049, %v1213, %v1214
        %v1216 = vrot.slane %v1182, 2
        %v1217 = vrot.slane %v1183, 2
        %v1218 = vsel %vm1049, %v1216, %v1217
        %v1219 = vrot.slane %v1184, 2
        %v1220 = vrot.slane %v1185, 2
        %v1221 = vsel %vm1049, %v1219, %v1220
        %v1222 = vrot.slane %v1186, 2
        %v1223 = vrot.slane %v1187, 2
        %v1224 = vsel %vm1049, %v1222, %v1223
        %v1225 = vrot.slane %v1188, 2
        %v1226 = vrot.slane %v1189, 2
        %v1227 = vsel %vm1049, %v1225, %v1226
        %v1228 = vrot.slane %v1190, 2
        %v1229 = vrot.slane %v1191, 2
        %v1230 = vsel %vm1049, %v1228, %v1229
        %v1231 = vrot.slane %v1192, 2
        %v1232 = vrot.slane %v1193, 2
        %v1233 = vsel %vm1049, %v1231, %v1232
        %v1242 = vadd.f32 %v1162, %v1212
        %v1243 = vadd.f32 %v1163, %v1215
        %v1244 = vadd.f32 %v1164, %v1218
        %v1245 = vadd.f32 %v1165, %v1221
        %v1246 = vadd.f32 %v1166, %v1224
        %v1247 = vadd.f32 %v1167, %v1227
        %v1248 = vadd.f32 %v1168, %v1230
        %v1249 = vadd.f32 %v1169, %v1233
        %s1250 = scalar_lea.vmem %s241, 23
        %v1251 = vld [vmem:[%s1250] sm:$0x1]
        %v1253 = vlaneseq
        %v1254 = vshrl.u32 %v1253, 7
        %v1255 = vsub.s32 0, %v1254
        %v1256 = vrot.slane %v1251, %v1255
        %v1258 = vmul.f32 %v252, %v1256
        %v1259 = vmul.f32 %v253, %v1256
        %v1260 = vmul.f32 %v254, %v1256
        %v1261 = vmul.f32 %v255, %v1256
        %v1262 = vmul.f32 %v256, %v1256
        %v1263 = vmul.f32 %v257, %v1256
        %v1264 = vmul.f32 %v258, %v1256
        %v1265 = vmul.f32 %v259, %v1256
        %v1266 = vmul.f32 %v260, %v1256
        %v1267 = vmul.f32 %v261, %v1256
        %v1268 = vmul.f32 %v262, %v1256
        %v1269 = vmul.f32 %v263, %v1256
        %v1270 = vmul.f32 %v264, %v1256
        %v1271 = vmul.f32 %v265, %v1256
        %v1272 = vmul.f32 %v266, %v1256
        %v1273 = vmul.f32 %v267, %v1256
        %v1290 = vrot.slane %v1258, 2
        %v1291 = vrot.slane %v1259, 2
        %v1292 = vsel %vm1049, %v1290, %v1291
        %v1293 = vrot.slane %v1260, 2
        %v1294 = vrot.slane %v1261, 2
        %v1295 = vsel %vm1049, %v1293, %v1294
        %v1296 = vrot.slane %v1262, 2
        %v1297 = vrot.slane %v1263, 2
        %v1298 = vsel %vm1049, %v1296, %v1297
        %v1299 = vrot.slane %v1264, 2
        %v1300 = vrot.slane %v1265, 2
        %v1301 = vsel %vm1049, %v1299, %v1300
        %v1302 = vrot.slane %v1266, 2
        %v1303 = vrot.slane %v1267, 2
        %v1304 = vsel %vm1049, %v1302, %v1303
        %v1305 = vrot.slane %v1268, 2
        %v1306 = vrot.slane %v1269, 2
        %v1307 = vsel %vm1049, %v1305, %v1306
        %v1308 = vrot.slane %v1270, 2
        %v1309 = vrot.slane %v1271, 2
        %v1310 = vsel %vm1049, %v1308, %v1309
        %v1311 = vrot.slane %v1272, 2
        %v1312 = vrot.slane %v1273, 2
        %v1313 = vsel %vm1049, %v1311, %v1312
        %v1322 = vadd.f32 %v1242, %v1292
        %v1323 = vadd.f32 %v1243, %v1295
        %v1324 = vadd.f32 %v1244, %v1298
        %v1325 = vadd.f32 %v1245, %v1301
        %v1326 = vadd.f32 %v1246, %v1304
        %v1327 = vadd.f32 %v1247, %v1307
        %v1328 = vadd.f32 %v1248, %v1310
        %v1329 = vadd.f32 %v1249, %v1313
        %s1330 = scalar_lea.vmem %s241, 30
        %v1331 = vld [vmem:[%s1330] sm:$0x1]
        %v1333 = vlaneseq
        %v1334 = vshrl.u32 %v1333, 7
        %v1335 = vsub.s32 0, %v1334
        %v1336 = vrot.slane %v1331, %v1335
        %v1338 = vmul.f32 %v254, %v1336
        %v1339 = vmul.f32 %v255, %v1336
        %v1340 = vmul.f32 %v256, %v1336
        %v1341 = vmul.f32 %v257, %v1336
        %v1342 = vmul.f32 %v258, %v1336
        %v1343 = vmul.f32 %v259, %v1336
        %v1344 = vmul.f32 %v260, %v1336
        %v1345 = vmul.f32 %v261, %v1336
        %v1346 = vmul.f32 %v262, %v1336
        %v1347 = vmul.f32 %v263, %v1336
        %v1348 = vmul.f32 %v264, %v1336
        %v1349 = vmul.f32 %v265, %v1336
        %v1350 = vmul.f32 %v266, %v1336
        %v1351 = vmul.f32 %v267, %v1336
        %v1352 = vmul.f32 %v268, %v1336
        %v1353 = vmul.f32 %v269, %v1336
        %v1370 = vrot.slane %v1338, 2
        %v1371 = vrot.slane %v1339, 2
        %v1372 = vsel %vm1049, %v1370, %v1371
        %v1373 = vrot.slane %v1340, 2
        %v1374 = vrot.slane %v1341, 2
        %v1375 = vsel %vm1049, %v1373, %v1374
        %v1376 = vrot.slane %v1342, 2
        %v1377 = vrot.slane %v1343, 2
        %v1378 = vsel %vm1049, %v1376, %v1377
        %v1379 = vrot.slane %v1344, 2
        %v1380 = vrot.slane %v1345, 2
        %v1381 = vsel %vm1049, %v1379, %v1380
        %v1382 = vrot.slane %v1346, 2
        %v1383 = vrot.slane %v1347, 2
        %v1384 = vsel %vm1049, %v1382, %v1383
        %v1385 = vrot.slane %v1348, 2
        %v1386 = vrot.slane %v1349, 2
        %v1387 = vsel %vm1049, %v1385, %v1386
        %v1388 = vrot.slane %v1350, 2
        %v1389 = vrot.slane %v1351, 2
        %v1390 = vsel %vm1049, %v1388, %v1389
        %v1391 = vrot.slane %v1352, 2
        %v1392 = vrot.slane %v1353, 2
        %v1393 = vsel %vm1049, %v1391, %v1392
        %v1402 = vadd.f32 %v1322, %v1372
        %v1403 = vadd.f32 %v1323, %v1375
        %v1404 = vadd.f32 %v1324, %v1378
        %v1405 = vadd.f32 %v1325, %v1381
        %v1406 = vadd.f32 %v1326, %v1384
        %v1407 = vadd.f32 %v1327, %v1387
        %v1408 = vadd.f32 %v1328, %v1390
        %v1409 = vadd.f32 %v1329, %v1393
        %s1410 = scalar_lea.vmem %s241, 37
        %v1411 = vld [vmem:[%s1410] sm:$0x1]
        %v1413 = vlaneseq
        %v1414 = vshrl.u32 %v1413, 7
        %v1415 = vsub.s32 0, %v1414
        %v1416 = vrot.slane %v1411, %v1415
        %v1418 = vmul.f32 %v256, %v1416
        %v1419 = vmul.f32 %v257, %v1416
        %v1420 = vmul.f32 %v258, %v1416
        %v1421 = vmul.f32 %v259, %v1416
        %v1422 = vmul.f32 %v260, %v1416
        %v1423 = vmul.f32 %v261, %v1416
        %v1424 = vmul.f32 %v262, %v1416
        %v1425 = vmul.f32 %v263, %v1416
        %v1426 = vmul.f32 %v264, %v1416
        %v1427 = vmul.f32 %v265, %v1416
        %v1428 = vmul.f32 %v266, %v1416
        %v1429 = vmul.f32 %v267, %v1416
        %v1430 = vmul.f32 %v268, %v1416
        %v1431 = vmul.f32 %v269, %v1416
        %v1432 = vmul.f32 %v270, %v1416
        %v1433 = vmul.f32 %v271, %v1416
        %v1450 = vrot.slane %v1418, 2
        %v1451 = vrot.slane %v1419, 2
        %v1452 = vsel %vm1049, %v1450, %v1451
        %v1453 = vrot.slane %v1420, 2
        %v1454 = vrot.slane %v1421, 2
        %v1455 = vsel %vm1049, %v1453, %v1454
        %v1456 = vrot.slane %v1422, 2
        %v1457 = vrot.slane %v1423, 2
        %v1458 = vsel %vm1049, %v1456, %v1457
        %v1459 = vrot.slane %v1424, 2
        %v1460 = vrot.slane %v1425, 2
        %v1461 = vsel %vm1049, %v1459, %v1460
        %v1462 = vrot.slane %v1426, 2
        %v1463 = vrot.slane %v1427, 2
        %v1464 = vsel %vm1049, %v1462, %v1463
        %v1465 = vrot.slane %v1428, 2
        %v1466 = vrot.slane %v1429, 2
        %v1467 = vsel %vm1049, %v1465, %v1466
        %v1468 = vrot.slane %v1430, 2
        %v1469 = vrot.slane %v1431, 2
        %v1470 = vsel %vm1049, %v1468, %v1469
        %v1471 = vrot.slane %v1432, 2
        %v1472 = vrot.slane %v1433, 2
        %v1473 = vsel %vm1049, %v1471, %v1472
        %v1482 = vadd.f32 %v1402, %v1452
        %v1483 = vadd.f32 %v1403, %v1455
        %v1484 = vadd.f32 %v1404, %v1458
        %v1485 = vadd.f32 %v1405, %v1461
        %v1486 = vadd.f32 %v1406, %v1464
        %v1487 = vadd.f32 %v1407, %v1467
        %v1488 = vadd.f32 %v1408, %v1470
        %v1489 = vadd.f32 %v1409, %v1473
        %s1490 = scalar_lea.vmem %s241, 44
        %v1491 = vld [vmem:[%s1490] sm:$0x1]
        %v1493 = vlaneseq
        %v1494 = vshrl.u32 %v1493, 7
        %v1495 = vsub.s32 0, %v1494
        %v1496 = vrot.slane %v1491, %v1495
        %v1498 = vmul.f32 %v258, %v1496
        %v1499 = vmul.f32 %v259, %v1496
        %v1500 = vmul.f32 %v260, %v1496
        %v1501 = vmul.f32 %v261, %v1496
        %v1502 = vmul.f32 %v262, %v1496
        %v1503 = vmul.f32 %v263, %v1496
        %v1504 = vmul.f32 %v264, %v1496
        %v1505 = vmul.f32 %v265, %v1496
        %v1506 = vmul.f32 %v266, %v1496
        %v1507 = vmul.f32 %v267, %v1496
        %v1508 = vmul.f32 %v268, %v1496
        %v1509 = vmul.f32 %v269, %v1496
        %v1510 = vmul.f32 %v270, %v1496
        %v1511 = vmul.f32 %v271, %v1496
        %v1512 = vmul.f32 %v272, %v1496
        %v1513 = vmul.f32 %v273, %v1496
        %v1530 = vrot.slane %v1498, 2
        %v1531 = vrot.slane %v1499, 2
        %v1532 = vsel %vm1049, %v1530, %v1531
        %v1533 = vrot.slane %v1500, 2
        %v1534 = vrot.slane %v1501, 2
        %v1535 = vsel %vm1049, %v1533, %v1534
        %v1536 = vrot.slane %v1502, 2
        %v1537 = vrot.slane %v1503, 2
        %v1538 = vsel %vm1049, %v1536, %v1537
        %v1539 = vrot.slane %v1504, 2
        %v1540 = vrot.slane %v1505, 2
        %v1541 = vsel %vm1049, %v1539, %v1540
        %v1542 = vrot.slane %v1506, 2
        %v1543 = vrot.slane %v1507, 2
        %v1544 = vsel %vm1049, %v1542, %v1543
        %v1545 = vrot.slane %v1508, 2
        %v1546 = vrot.slane %v1509, 2
        %v1547 = vsel %vm1049, %v1545, %v1546
        %v1548 = vrot.slane %v1510, 2
        %v1549 = vrot.slane %v1511, 2
        %v1550 = vsel %vm1049, %v1548, %v1549
        %v1551 = vrot.slane %v1512, 2
        %v1552 = vrot.slane %v1513, 2
        %v1553 = vsel %vm1049, %v1551, %v1552
        %v1562 = vadd.f32 %v1482, %v1532
        %v1563 = vadd.f32 %v1483, %v1535
        %v1564 = vadd.f32 %v1484, %v1538
        %v1565 = vadd.f32 %v1485, %v1541
        %v1566 = vadd.f32 %v1486, %v1544
        %v1567 = vadd.f32 %v1487, %v1547
        %v1568 = vadd.f32 %v1488, %v1550
        %v1569 = vadd.f32 %v1489, %v1553
        %s1570 = scalar_lea.vmem %s241, 3
        %v1571 = vld [vmem:[%s1570] sm:$0x1]
        %v1573 = vlaneseq
        %v1574 = vshrl.u32 %v1573, 7
        %v1575 = vsub.s32 0, %v1574
        %v1576 = vrot.slane %v1571, %v1575
        %v1578 = vmul.f32 %v246, %v1576
        %v1579 = vmul.f32 %v247, %v1576
        %v1580 = vmul.f32 %v248, %v1576
        %v1581 = vmul.f32 %v249, %v1576
        %v1582 = vmul.f32 %v250, %v1576
        %v1583 = vmul.f32 %v251, %v1576
        %v1584 = vmul.f32 %v252, %v1576
        %v1585 = vmul.f32 %v253, %v1576
        %v1586 = vmul.f32 %v254, %v1576
        %v1587 = vmul.f32 %v255, %v1576
        %v1588 = vmul.f32 %v256, %v1576
        %v1589 = vmul.f32 %v257, %v1576
        %v1590 = vmul.f32 %v258, %v1576
        %v1591 = vmul.f32 %v259, %v1576
        %v1592 = vmul.f32 %v260, %v1576
        %v1593 = vmul.f32 %v261, %v1576
        %vm1610 = vcmask 1044480
        %v1611 = vrot.slane %v1578, 3
        %v1612 = vrot.slane %v1579, 3
        %v1613 = vsel %vm1610, %v1611, %v1612
        %v1614 = vrot.slane %v1580, 3
        %v1615 = vrot.slane %v1581, 3
        %v1616 = vsel %vm1610, %v1614, %v1615
        %v1617 = vrot.slane %v1582, 3
        %v1618 = vrot.slane %v1583, 3
        %v1619 = vsel %vm1610, %v1617, %v1618
        %v1620 = vrot.slane %v1584, 3
        %v1621 = vrot.slane %v1585, 3
        %v1622 = vsel %vm1610, %v1620, %v1621
        %v1623 = vrot.slane %v1586, 3
        %v1624 = vrot.slane %v1587, 3
        %v1625 = vsel %vm1610, %v1623, %v1624
        %v1626 = vrot.slane %v1588, 3
        %v1627 = vrot.slane %v1589, 3
        %v1628 = vsel %vm1610, %v1626, %v1627
        %v1629 = vrot.slane %v1590, 3
        %v1630 = vrot.slane %v1591, 3
        %v1631 = vsel %vm1610, %v1629, %v1630
        %v1632 = vrot.slane %v1592, 3
        %v1633 = vrot.slane %v1593, 3
        %v1634 = vsel %vm1610, %v1632, %v1633
        %v1643 = vadd.f32 %v1562, %v1613
        %v1644 = vadd.f32 %v1563, %v1616
        %v1645 = vadd.f32 %v1564, %v1619
        %v1646 = vadd.f32 %v1565, %v1622
        %v1647 = vadd.f32 %v1566, %v1625
        %v1648 = vadd.f32 %v1567, %v1628
        %v1649 = vadd.f32 %v1568, %v1631
        %v1650 = vadd.f32 %v1569, %v1634
        %s1651 = scalar_lea.vmem %s241, 10
        %v1652 = vld [vmem:[%s1651] sm:$0x1]
        %v1654 = vlaneseq
        %v1655 = vshrl.u32 %v1654, 7
        %v1656 = vsub.s32 0, %v1655
        %v1657 = vrot.slane %v1652, %v1656
        %v1659 = vmul.f32 %v248, %v1657
        %v1660 = vmul.f32 %v249, %v1657
        %v1661 = vmul.f32 %v250, %v1657
        %v1662 = vmul.f32 %v251, %v1657
        %v1663 = vmul.f32 %v252, %v1657
        %v1664 = vmul.f32 %v253, %v1657
        %v1665 = vmul.f32 %v254, %v1657
        %v1666 = vmul.f32 %v255, %v1657
        %v1667 = vmul.f32 %v256, %v1657
        %v1668 = vmul.f32 %v257, %v1657
        %v1669 = vmul.f32 %v258, %v1657
        %v1670 = vmul.f32 %v259, %v1657
        %v1671 = vmul.f32 %v260, %v1657
        %v1672 = vmul.f32 %v261, %v1657
        %v1673 = vmul.f32 %v262, %v1657
        %v1674 = vmul.f32 %v263, %v1657
        %v1691 = vrot.slane %v1659, 3
        %v1692 = vrot.slane %v1660, 3
        %v1693 = vsel %vm1610, %v1691, %v1692
        %v1694 = vrot.slane %v1661, 3
        %v1695 = vrot.slane %v1662, 3
        %v1696 = vsel %vm1610, %v1694, %v1695
        %v1697 = vrot.slane %v1663, 3
        %v1698 = vrot.slane %v1664, 3
        %v1699 = vsel %vm1610, %v1697, %v1698
        %v1700 = vrot.slane %v1665, 3
        %v1701 = vrot.slane %v1666, 3
        %v1702 = vsel %vm1610, %v1700, %v1701
        %v1703 = vrot.slane %v1667, 3
        %v1704 = vrot.slane %v1668, 3
        %v1705 = vsel %vm1610, %v1703, %v1704
        %v1706 = vrot.slane %v1669, 3
        %v1707 = vrot.slane %v1670, 3
        %v1708 = vsel %vm1610, %v1706, %v1707
        %v1709 = vrot.slane %v1671, 3
        %v1710 = vrot.slane %v1672, 3
        %v1711 = vsel %vm1610, %v1709, %v1710
        %v1712 = vrot.slane %v1673, 3
        %v1713 = vrot.slane %v1674, 3
        %v1714 = vsel %vm1610, %v1712, %v1713
        %v1723 = vadd.f32 %v1643, %v1693
        %v1724 = vadd.f32 %v1644, %v1696
        %v1725 = vadd.f32 %v1645, %v1699
        %v1726 = vadd.f32 %v1646, %v1702
        %v1727 = vadd.f32 %v1647, %v1705
        %v1728 = vadd.f32 %v1648, %v1708
        %v1729 = vadd.f32 %v1649, %v1711
        %v1730 = vadd.f32 %v1650, %v1714
        %s1731 = scalar_lea.vmem %s241, 17
        %v1732 = vld [vmem:[%s1731] sm:$0x1]
        %v1734 = vlaneseq
        %v1735 = vshrl.u32 %v1734, 7
        %v1736 = vsub.s32 0, %v1735
        %v1737 = vrot.slane %v1732, %v1736
        %v1739 = vmul.f32 %v250, %v1737
        %v1740 = vmul.f32 %v251, %v1737
        %v1741 = vmul.f32 %v252, %v1737
        %v1742 = vmul.f32 %v253, %v1737
        %v1743 = vmul.f32 %v254, %v1737
        %v1744 = vmul.f32 %v255, %v1737
        %v1745 = vmul.f32 %v256, %v1737
        %v1746 = vmul.f32 %v257, %v1737
        %v1747 = vmul.f32 %v258, %v1737
        %v1748 = vmul.f32 %v259, %v1737
        %v1749 = vmul.f32 %v260, %v1737
        %v1750 = vmul.f32 %v261, %v1737
        %v1751 = vmul.f32 %v262, %v1737
        %v1752 = vmul.f32 %v263, %v1737
        %v1753 = vmul.f32 %v264, %v1737
        %v1754 = vmul.f32 %v265, %v1737
        %v1771 = vrot.slane %v1739, 3
        %v1772 = vrot.slane %v1740, 3
        %v1773 = vsel %vm1610, %v1771, %v1772
        %v1774 = vrot.slane %v1741, 3
        %v1775 = vrot.slane %v1742, 3
        %v1776 = vsel %vm1610, %v1774, %v1775
        %v1777 = vrot.slane %v1743, 3
        %v1778 = vrot.slane %v1744, 3
        %v1779 = vsel %vm1610, %v1777, %v1778
        %v1780 = vrot.slane %v1745, 3
        %v1781 = vrot.slane %v1746, 3
        %v1782 = vsel %vm1610, %v1780, %v1781
        %v1783 = vrot.slane %v1747, 3
        %v1784 = vrot.slane %v1748, 3
        %v1785 = vsel %vm1610, %v1783, %v1784
        %v1786 = vrot.slane %v1749, 3
        %v1787 = vrot.slane %v1750, 3
        %v1788 = vsel %vm1610, %v1786, %v1787
        %v1789 = vrot.slane %v1751, 3
        %v1790 = vrot.slane %v1752, 3
        %v1791 = vsel %vm1610, %v1789, %v1790
        %v1792 = vrot.slane %v1753, 3
        %v1793 = vrot.slane %v1754, 3
        %v1794 = vsel %vm1610, %v1792, %v1793
        %v1803 = vadd.f32 %v1723, %v1773
        %v1804 = vadd.f32 %v1724, %v1776
        %v1805 = vadd.f32 %v1725, %v1779
        %v1806 = vadd.f32 %v1726, %v1782
        %v1807 = vadd.f32 %v1727, %v1785
        %v1808 = vadd.f32 %v1728, %v1788
        %v1809 = vadd.f32 %v1729, %v1791
        %v1810 = vadd.f32 %v1730, %v1794
        %s1811 = scalar_lea.vmem %s241, 24
        %v1812 = vld [vmem:[%s1811] sm:$0x1]
        %v1814 = vlaneseq
        %v1815 = vshrl.u32 %v1814, 7
        %v1816 = vsub.s32 0, %v1815
        %v1817 = vrot.slane %v1812, %v1816
        %v1819 = vmul.f32 %v252, %v1817
        %v1820 = vmul.f32 %v253, %v1817
        %v1821 = vmul.f32 %v254, %v1817
        %v1822 = vmul.f32 %v255, %v1817
        %v1823 = vmul.f32 %v256, %v1817
        %v1824 = vmul.f32 %v257, %v1817
        %v1825 = vmul.f32 %v258, %v1817
        %v1826 = vmul.f32 %v259, %v1817
        %v1827 = vmul.f32 %v260, %v1817
        %v1828 = vmul.f32 %v261, %v1817
        %v1829 = vmul.f32 %v262, %v1817
        %v1830 = vmul.f32 %v263, %v1817
        %v1831 = vmul.f32 %v264, %v1817
        %v1832 = vmul.f32 %v265, %v1817
        %v1833 = vmul.f32 %v266, %v1817
        %v1834 = vmul.f32 %v267, %v1817
        %v1851 = vrot.slane %v1819, 3
        %v1852 = vrot.slane %v1820, 3
        %v1853 = vsel %vm1610, %v1851, %v1852
        %v1854 = vrot.slane %v1821, 3
        %v1855 = vrot.slane %v1822, 3
        %v1856 = vsel %vm1610, %v1854, %v1855
        %v1857 = vrot.slane %v1823, 3
        %v1858 = vrot.slane %v1824, 3
        %v1859 = vsel %vm1610, %v1857, %v1858
        %v1860 = vrot.slane %v1825, 3
        %v1861 = vrot.slane %v1826, 3
        %v1862 = vsel %vm1610, %v1860, %v1861
        %v1863 = vrot.slane %v1827, 3
        %v1864 = vrot.slane %v1828, 3
        %v1865 = vsel %vm1610, %v1863, %v1864
        %v1866 = vrot.slane %v1829, 3
        %v1867 = vrot.slane %v1830, 3
        %v1868 = vsel %vm1610, %v1866, %v1867
        %v1869 = vrot.slane %v1831, 3
        %v1870 = vrot.slane %v1832, 3
        %v1871 = vsel %vm1610, %v1869, %v1870
        %v1872 = vrot.slane %v1833, 3
        %v1873 = vrot.slane %v1834, 3
        %v1874 = vsel %vm1610, %v1872, %v1873
        %v1883 = vadd.f32 %v1803, %v1853
        %v1884 = vadd.f32 %v1804, %v1856
        %v1885 = vadd.f32 %v1805, %v1859
        %v1886 = vadd.f32 %v1806, %v1862
        %v1887 = vadd.f32 %v1807, %v1865
        %v1888 = vadd.f32 %v1808, %v1868
        %v1889 = vadd.f32 %v1809, %v1871
        %v1890 = vadd.f32 %v1810, %v1874
        %s1891 = scalar_lea.vmem %s241, 31
        %v1892 = vld [vmem:[%s1891] sm:$0x1]
        %v1894 = vlaneseq
        %v1895 = vshrl.u32 %v1894, 7
        %v1896 = vsub.s32 0, %v1895
        %v1897 = vrot.slane %v1892, %v1896
        %v1899 = vmul.f32 %v254, %v1897
        %v1900 = vmul.f32 %v255, %v1897
        %v1901 = vmul.f32 %v256, %v1897
        %v1902 = vmul.f32 %v257, %v1897
        %v1903 = vmul.f32 %v258, %v1897
        %v1904 = vmul.f32 %v259, %v1897
        %v1905 = vmul.f32 %v260, %v1897
        %v1906 = vmul.f32 %v261, %v1897
        %v1907 = vmul.f32 %v262, %v1897
        %v1908 = vmul.f32 %v263, %v1897
        %v1909 = vmul.f32 %v264, %v1897
        %v1910 = vmul.f32 %v265, %v1897
        %v1911 = vmul.f32 %v266, %v1897
        %v1912 = vmul.f32 %v267, %v1897
        %v1913 = vmul.f32 %v268, %v1897
        %v1914 = vmul.f32 %v269, %v1897
        %v1931 = vrot.slane %v1899, 3
        %v1932 = vrot.slane %v1900, 3
        %v1933 = vsel %vm1610, %v1931, %v1932
        %v1934 = vrot.slane %v1901, 3
        %v1935 = vrot.slane %v1902, 3
        %v1936 = vsel %vm1610, %v1934, %v1935
        %v1937 = vrot.slane %v1903, 3
        %v1938 = vrot.slane %v1904, 3
        %v1939 = vsel %vm1610, %v1937, %v1938
        %v1940 = vrot.slane %v1905, 3
        %v1941 = vrot.slane %v1906, 3
        %v1942 = vsel %vm1610, %v1940, %v1941
        %v1943 = vrot.slane %v1907, 3
        %v1944 = vrot.slane %v1908, 3
        %v1945 = vsel %vm1610, %v1943, %v1944
        %v1946 = vrot.slane %v1909, 3
        %v1947 = vrot.slane %v1910, 3
        %v1948 = vsel %vm1610, %v1946, %v1947
        %v1949 = vrot.slane %v1911, 3
        %v1950 = vrot.slane %v1912, 3
        %v1951 = vsel %vm1610, %v1949, %v1950
        %v1952 = vrot.slane %v1913, 3
        %v1953 = vrot.slane %v1914, 3
        %v1954 = vsel %vm1610, %v1952, %v1953
        %v1963 = vadd.f32 %v1883, %v1933
        %v1964 = vadd.f32 %v1884, %v1936
        %v1965 = vadd.f32 %v1885, %v1939
        %v1966 = vadd.f32 %v1886, %v1942
        %v1967 = vadd.f32 %v1887, %v1945
        %v1968 = vadd.f32 %v1888, %v1948
        %v1969 = vadd.f32 %v1889, %v1951
        %v1970 = vadd.f32 %v1890, %v1954
        %s1971 = scalar_lea.vmem %s241, 38
        %v1972 = vld [vmem:[%s1971] sm:$0x1]
        %v1974 = vlaneseq
        %v1975 = vshrl.u32 %v1974, 7
        %v1976 = vsub.s32 0, %v1975
        %v1977 = vrot.slane %v1972, %v1976
        %v1979 = vmul.f32 %v256, %v1977
        %v1980 = vmul.f32 %v257, %v1977
        %v1981 = vmul.f32 %v258, %v1977
        %v1982 = vmul.f32 %v259, %v1977
        %v1983 = vmul.f32 %v260, %v1977
        %v1984 = vmul.f32 %v261, %v1977
        %v1985 = vmul.f32 %v262, %v1977
        %v1986 = vmul.f32 %v263, %v1977
        %v1987 = vmul.f32 %v264, %v1977
        %v1988 = vmul.f32 %v265, %v1977
        %v1989 = vmul.f32 %v266, %v1977
        %v1990 = vmul.f32 %v267, %v1977
        %v1991 = vmul.f32 %v268, %v1977
        %v1992 = vmul.f32 %v269, %v1977
        %v1993 = vmul.f32 %v270, %v1977
        %v1994 = vmul.f32 %v271, %v1977
        %v2011 = vrot.slane %v1979, 3
        %v2012 = vrot.slane %v1980, 3
        %v2013 = vsel %vm1610, %v2011, %v2012
        %v2014 = vrot.slane %v1981, 3
        %v2015 = vrot.slane %v1982, 3
        %v2016 = vsel %vm1610, %v2014, %v2015
        %v2017 = vrot.slane %v1983, 3
        %v2018 = vrot.slane %v1984, 3
        %v2019 = vsel %vm1610, %v2017, %v2018
        %v2020 = vrot.slane %v1985, 3
        %v2021 = vrot.slane %v1986, 3
        %v2022 = vsel %vm1610, %v2020, %v2021
        %v2023 = vrot.slane %v1987, 3
        %v2024 = vrot.slane %v1988, 3
        %v2025 = vsel %vm1610, %v2023, %v2024
        %v2026 = vrot.slane %v1989, 3
        %v2027 = vrot.slane %v1990, 3
        %v2028 = vsel %vm1610, %v2026, %v2027
        %v2029 = vrot.slane %v1991, 3
        %v2030 = vrot.slane %v1992, 3
        %v2031 = vsel %vm1610, %v2029, %v2030
        %v2032 = vrot.slane %v1993, 3
        %v2033 = vrot.slane %v1994, 3
        %v2034 = vsel %vm1610, %v2032, %v2033
        %v2043 = vadd.f32 %v1963, %v2013
        %v2044 = vadd.f32 %v1964, %v2016
        %v2045 = vadd.f32 %v1965, %v2019
        %v2046 = vadd.f32 %v1966, %v2022
        %v2047 = vadd.f32 %v1967, %v2025
        %v2048 = vadd.f32 %v1968, %v2028
        %v2049 = vadd.f32 %v1969, %v2031
        %v2050 = vadd.f32 %v1970, %v2034
        %s2051 = scalar_lea.vmem %s241, 45
        %v2052 = vld [vmem:[%s2051] sm:$0x1]
        %v2054 = vlaneseq
        %v2055 = vshrl.u32 %v2054, 7
        %v2056 = vsub.s32 0, %v2055
        %v2057 = vrot.slane %v2052, %v2056
        %v2059 = vmul.f32 %v258, %v2057
        %v2060 = vmul.f32 %v259, %v2057
        %v2061 = vmul.f32 %v260, %v2057
        %v2062 = vmul.f32 %v261, %v2057
        %v2063 = vmul.f32 %v262, %v2057
        %v2064 = vmul.f32 %v263, %v2057
        %v2065 = vmul.f32 %v264, %v2057
        %v2066 = vmul.f32 %v265, %v2057
        %v2067 = vmul.f32 %v266, %v2057
        %v2068 = vmul.f32 %v267, %v2057
        %v2069 = vmul.f32 %v268, %v2057
        %v2070 = vmul.f32 %v269, %v2057
        %v2071 = vmul.f32 %v270, %v2057
        %v2072 = vmul.f32 %v271, %v2057
        %v2073 = vmul.f32 %v272, %v2057
        %v2074 = vmul.f32 %v273, %v2057
        %v2091 = vrot.slane %v2059, 3
        %v2092 = vrot.slane %v2060, 3
        %v2093 = vsel %vm1610, %v2091, %v2092
        %v2094 = vrot.slane %v2061, 3
        %v2095 = vrot.slane %v2062, 3
        %v2096 = vsel %vm1610, %v2094, %v2095
        %v2097 = vrot.slane %v2063, 3
        %v2098 = vrot.slane %v2064, 3
        %v2099 = vsel %vm1610, %v2097, %v2098
        %v2100 = vrot.slane %v2065, 3
        %v2101 = vrot.slane %v2066, 3
        %v2102 = vsel %vm1610, %v2100, %v2101
        %v2103 = vrot.slane %v2067, 3
        %v2104 = vrot.slane %v2068, 3
        %v2105 = vsel %vm1610, %v2103, %v2104
        %v2106 = vrot.slane %v2069, 3
        %v2107 = vrot.slane %v2070, 3
        %v2108 = vsel %vm1610, %v2106, %v2107
        %v2109 = vrot.slane %v2071, 3
        %v2110 = vrot.slane %v2072, 3
        %v2111 = vsel %vm1610, %v2109, %v2110
        %v2112 = vrot.slane %v2073, 3
        %v2113 = vrot.slane %v2074, 3
        %v2114 = vsel %vm1610, %v2112, %v2113
        %v2123 = vadd.f32 %v2043, %v2093
        %v2124 = vadd.f32 %v2044, %v2096
        %v2125 = vadd.f32 %v2045, %v2099
        %v2126 = vadd.f32 %v2046, %v2102
        %v2127 = vadd.f32 %v2047, %v2105
        %v2128 = vadd.f32 %v2048, %v2108
        %v2129 = vadd.f32 %v2049, %v2111
        %v2130 = vadd.f32 %v2050, %v2114
        %s2131 = scalar_lea.vmem %s241, 4
        %v2132 = vld [vmem:[%s2131] sm:$0x1]
        %v2134 = vlaneseq
        %v2135 = vshrl.u32 %v2134, 7
        %v2136 = vsub.s32 0, %v2135
        %v2137 = vrot.slane %v2132, %v2136
        %v2139 = vmul.f32 %v246, %v2137
        %v2140 = vmul.f32 %v247, %v2137
        %v2141 = vmul.f32 %v248, %v2137
        %v2142 = vmul.f32 %v249, %v2137
        %v2143 = vmul.f32 %v250, %v2137
        %v2144 = vmul.f32 %v251, %v2137
        %v2145 = vmul.f32 %v252, %v2137
        %v2146 = vmul.f32 %v253, %v2137
        %v2147 = vmul.f32 %v254, %v2137
        %v2148 = vmul.f32 %v255, %v2137
        %v2149 = vmul.f32 %v256, %v2137
        %v2150 = vmul.f32 %v257, %v2137
        %v2151 = vmul.f32 %v258, %v2137
        %v2152 = vmul.f32 %v259, %v2137
        %v2153 = vmul.f32 %v260, %v2137
        %v2154 = vmul.f32 %v261, %v2137
        %vm2171 = vcmask 1043456
        %v2172 = vrot.slane %v2139, 4
        %v2173 = vrot.slane %v2140, 4
        %v2174 = vsel %vm2171, %v2172, %v2173
        %v2175 = vrot.slane %v2141, 4
        %v2176 = vrot.slane %v2142, 4
        %v2177 = vsel %vm2171, %v2175, %v2176
        %v2178 = vrot.slane %v2143, 4
        %v2179 = vrot.slane %v2144, 4
        %v2180 = vsel %vm2171, %v2178, %v2179
        %v2181 = vrot.slane %v2145, 4
        %v2182 = vrot.slane %v2146, 4
        %v2183 = vsel %vm2171, %v2181, %v2182
        %v2184 = vrot.slane %v2147, 4
        %v2185 = vrot.slane %v2148, 4
        %v2186 = vsel %vm2171, %v2184, %v2185
        %v2187 = vrot.slane %v2149, 4
        %v2188 = vrot.slane %v2150, 4
        %v2189 = vsel %vm2171, %v2187, %v2188
        %v2190 = vrot.slane %v2151, 4
        %v2191 = vrot.slane %v2152, 4
        %v2192 = vsel %vm2171, %v2190, %v2191
        %v2193 = vrot.slane %v2153, 4
        %v2194 = vrot.slane %v2154, 4
        %v2195 = vsel %vm2171, %v2193, %v2194
        %v2204 = vadd.f32 %v2123, %v2174
        %v2205 = vadd.f32 %v2124, %v2177
        %v2206 = vadd.f32 %v2125, %v2180
        %v2207 = vadd.f32 %v2126, %v2183
        %v2208 = vadd.f32 %v2127, %v2186
        %v2209 = vadd.f32 %v2128, %v2189
        %v2210 = vadd.f32 %v2129, %v2192
        %v2211 = vadd.f32 %v2130, %v2195
        %s2212 = scalar_lea.vmem %s241, 11
        %v2213 = vld [vmem:[%s2212] sm:$0x1]
        %v2215 = vlaneseq
        %v2216 = vshrl.u32 %v2215, 7
        %v2217 = vsub.s32 0, %v2216
        %v2218 = vrot.slane %v2213, %v2217
        %v2220 = vmul.f32 %v248, %v2218
        %v2221 = vmul.f32 %v249, %v2218
        %v2222 = vmul.f32 %v250, %v2218
        %v2223 = vmul.f32 %v251, %v2218
        %v2224 = vmul.f32 %v252, %v2218
        %v2225 = vmul.f32 %v253, %v2218
        %v2226 = vmul.f32 %v254, %v2218
        %v2227 = vmul.f32 %v255, %v2218
        %v2228 = vmul.f32 %v256, %v2218
        %v2229 = vmul.f32 %v257, %v2218
        %v2230 = vmul.f32 %v258, %v2218
        %v2231 = vmul.f32 %v259, %v2218
        %v2232 = vmul.f32 %v260, %v2218
        %v2233 = vmul.f32 %v261, %v2218
        %v2234 = vmul.f32 %v262, %v2218
        %v2235 = vmul.f32 %v263, %v2218
        %v2252 = vrot.slane %v2220, 4
        %v2253 = vrot.slane %v2221, 4
        %v2254 = vsel %vm2171, %v2252, %v2253
        %v2255 = vrot.slane %v2222, 4
        %v2256 = vrot.slane %v2223, 4
        %v2257 = vsel %vm2171, %v2255, %v2256
        %v2258 = vrot.slane %v2224, 4
        %v2259 = vrot.slane %v2225, 4
        %v2260 = vsel %vm2171, %v2258, %v2259
        %v2261 = vrot.slane %v2226, 4
        %v2262 = vrot.slane %v2227, 4
        %v2263 = vsel %vm2171, %v2261, %v2262
        %v2264 = vrot.slane %v2228, 4
        %v2265 = vrot.slane %v2229, 4
        %v2266 = vsel %vm2171, %v2264, %v2265
        %v2267 = vrot.slane %v2230, 4
        %v2268 = vrot.slane %v2231, 4
        %v2269 = vsel %vm2171, %v2267, %v2268
        %v2270 = vrot.slane %v2232, 4
        %v2271 = vrot.slane %v2233, 4
        %v2272 = vsel %vm2171, %v2270, %v2271
        %v2273 = vrot.slane %v2234, 4
        %v2274 = vrot.slane %v2235, 4
        %v2275 = vsel %vm2171, %v2273, %v2274
        %v2284 = vadd.f32 %v2204, %v2254
        %v2285 = vadd.f32 %v2205, %v2257
        %v2286 = vadd.f32 %v2206, %v2260
        %v2287 = vadd.f32 %v2207, %v2263
        %v2288 = vadd.f32 %v2208, %v2266
        %v2289 = vadd.f32 %v2209, %v2269
        %v2290 = vadd.f32 %v2210, %v2272
        %v2291 = vadd.f32 %v2211, %v2275
        %s2292 = scalar_lea.vmem %s241, 18
        %v2293 = vld [vmem:[%s2292] sm:$0x1]
        %v2295 = vlaneseq
        %v2296 = vshrl.u32 %v2295, 7
        %v2297 = vsub.s32 0, %v2296
        %v2298 = vrot.slane %v2293, %v2297
        %v2300 = vmul.f32 %v250, %v2298
        %v2301 = vmul.f32 %v251, %v2298
        %v2302 = vmul.f32 %v252, %v2298
        %v2303 = vmul.f32 %v253, %v2298
        %v2304 = vmul.f32 %v254, %v2298
        %v2305 = vmul.f32 %v255, %v2298
        %v2306 = vmul.f32 %v256, %v2298
        %v2307 = vmul.f32 %v257, %v2298
        %v2308 = vmul.f32 %v258, %v2298
        %v2309 = vmul.f32 %v259, %v2298
        %v2310 = vmul.f32 %v260, %v2298
        %v2311 = vmul.f32 %v261, %v2298
        %v2312 = vmul.f32 %v262, %v2298
        %v2313 = vmul.f32 %v263, %v2298
        %v2314 = vmul.f32 %v264, %v2298
        %v2315 = vmul.f32 %v265, %v2298
        %v2332 = vrot.slane %v2300, 4
        %v2333 = vrot.slane %v2301, 4
        %v2334 = vsel %vm2171, %v2332, %v2333
        %v2335 = vrot.slane %v2302, 4
        %v2336 = vrot.slane %v2303, 4
        %v2337 = vsel %vm2171, %v2335, %v2336
        %v2338 = vrot.slane %v2304, 4
        %v2339 = vrot.slane %v2305, 4
        %v2340 = vsel %vm2171, %v2338, %v2339
        %v2341 = vrot.slane %v2306, 4
        %v2342 = vrot.slane %v2307, 4
        %v2343 = vsel %vm2171, %v2341, %v2342
        %v2344 = vrot.slane %v2308, 4
        %v2345 = vrot.slane %v2309, 4
        %v2346 = vsel %vm2171, %v2344, %v2345
        %v2347 = vrot.slane %v2310, 4
        %v2348 = vrot.slane %v2311, 4
        %v2349 = vsel %vm2171, %v2347, %v2348
        %v2350 = vrot.slane %v2312, 4
        %v2351 = vrot.slane %v2313, 4
        %v2352 = vsel %vm2171, %v2350, %v2351
        %v2353 = vrot.slane %v2314, 4
        %v2354 = vrot.slane %v2315, 4
        %v2355 = vsel %vm2171, %v2353, %v2354
        %v2364 = vadd.f32 %v2284, %v2334
        %v2365 = vadd.f32 %v2285, %v2337
        %v2366 = vadd.f32 %v2286, %v2340
        %v2367 = vadd.f32 %v2287, %v2343
        %v2368 = vadd.f32 %v2288, %v2346
        %v2369 = vadd.f32 %v2289, %v2349
        %v2370 = vadd.f32 %v2290, %v2352
        %v2371 = vadd.f32 %v2291, %v2355
        %s2372 = scalar_lea.vmem %s241, 25
        %v2373 = vld [vmem:[%s2372] sm:$0x1]
        %v2375 = vlaneseq
        %v2376 = vshrl.u32 %v2375, 7
        %v2377 = vsub.s32 0, %v2376
        %v2378 = vrot.slane %v2373, %v2377
        %v2380 = vmul.f32 %v252, %v2378
        %v2381 = vmul.f32 %v253, %v2378
        %v2382 = vmul.f32 %v254, %v2378
        %v2383 = vmul.f32 %v255, %v2378
        %v2384 = vmul.f32 %v256, %v2378
        %v2385 = vmul.f32 %v257, %v2378
        %v2386 = vmul.f32 %v258, %v2378
        %v2387 = vmul.f32 %v259, %v2378
        %v2388 = vmul.f32 %v260, %v2378
        %v2389 = vmul.f32 %v261, %v2378
        %v2390 = vmul.f32 %v262, %v2378
        %v2391 = vmul.f32 %v263, %v2378
        %v2392 = vmul.f32 %v264, %v2378
        %v2393 = vmul.f32 %v265, %v2378
        %v2394 = vmul.f32 %v266, %v2378
        %v2395 = vmul.f32 %v267, %v2378
        %v2412 = vrot.slane %v2380, 4
        %v2413 = vrot.slane %v2381, 4
        %v2414 = vsel %vm2171, %v2412, %v2413
        %v2415 = vrot.slane %v2382, 4
        %v2416 = vrot.slane %v2383, 4
        %v2417 = vsel %vm2171, %v2415, %v2416
        %v2418 = vrot.slane %v2384, 4
        %v2419 = vrot.slane %v2385, 4
        %v2420 = vsel %vm2171, %v2418, %v2419
        %v2421 = vrot.slane %v2386, 4
        %v2422 = vrot.slane %v2387, 4
        %v2423 = vsel %vm2171, %v2421, %v2422
        %v2424 = vrot.slane %v2388, 4
        %v2425 = vrot.slane %v2389, 4
        %v2426 = vsel %vm2171, %v2424, %v2425
        %v2427 = vrot.slane %v2390, 4
        %v2428 = vrot.slane %v2391, 4
        %v2429 = vsel %vm2171, %v2427, %v2428
        %v2430 = vrot.slane %v2392, 4
        %v2431 = vrot.slane %v2393, 4
        %v2432 = vsel %vm2171, %v2430, %v2431
        %v2433 = vrot.slane %v2394, 4
        %v2434 = vrot.slane %v2395, 4
        %v2435 = vsel %vm2171, %v2433, %v2434
        %v2444 = vadd.f32 %v2364, %v2414
        %v2445 = vadd.f32 %v2365, %v2417
        %v2446 = vadd.f32 %v2366, %v2420
        %v2447 = vadd.f32 %v2367, %v2423
        %v2448 = vadd.f32 %v2368, %v2426
        %v2449 = vadd.f32 %v2369, %v2429
        %v2450 = vadd.f32 %v2370, %v2432
        %v2451 = vadd.f32 %v2371, %v2435
        %s2452 = scalar_lea.vmem %s241, 32
        %v2453 = vld [vmem:[%s2452] sm:$0x1]
        %v2455 = vlaneseq
        %v2456 = vshrl.u32 %v2455, 7
        %v2457 = vsub.s32 0, %v2456
        %v2458 = vrot.slane %v2453, %v2457
        %v2460 = vmul.f32 %v254, %v2458
        %v2461 = vmul.f32 %v255, %v2458
        %v2462 = vmul.f32 %v256, %v2458
        %v2463 = vmul.f32 %v257, %v2458
        %v2464 = vmul.f32 %v258, %v2458
        %v2465 = vmul.f32 %v259, %v2458
        %v2466 = vmul.f32 %v260, %v2458
        %v2467 = vmul.f32 %v261, %v2458
        %v2468 = vmul.f32 %v262, %v2458
        %v2469 = vmul.f32 %v263, %v2458
        %v2470 = vmul.f32 %v264, %v2458
        %v2471 = vmul.f32 %v265, %v2458
        %v2472 = vmul.f32 %v266, %v2458
        %v2473 = vmul.f32 %v267, %v2458
        %v2474 = vmul.f32 %v268, %v2458
        %v2475 = vmul.f32 %v269, %v2458
        %v2492 = vrot.slane %v2460, 4
        %v2493 = vrot.slane %v2461, 4
        %v2494 = vsel %vm2171, %v2492, %v2493
        %v2495 = vrot.slane %v2462, 4
        %v2496 = vrot.slane %v2463, 4
        %v2497 = vsel %vm2171, %v2495, %v2496
        %v2498 = vrot.slane %v2464, 4
        %v2499 = vrot.slane %v2465, 4
        %v2500 = vsel %vm2171, %v2498, %v2499
        %v2501 = vrot.slane %v2466, 4
        %v2502 = vrot.slane %v2467, 4
        %v2503 = vsel %vm2171, %v2501, %v2502
        %v2504 = vrot.slane %v2468, 4
        %v2505 = vrot.slane %v2469, 4
        %v2506 = vsel %vm2171, %v2504, %v2505
        %v2507 = vrot.slane %v2470, 4
        %v2508 = vrot.slane %v2471, 4
        %v2509 = vsel %vm2171, %v2507, %v2508
        %v2510 = vrot.slane %v2472, 4
        %v2511 = vrot.slane %v2473, 4
        %v2512 = vsel %vm2171, %v2510, %v2511
        %v2513 = vrot.slane %v2474, 4
        %v2514 = vrot.slane %v2475, 4
        %v2515 = vsel %vm2171, %v2513, %v2514
        %v2524 = vadd.f32 %v2444, %v2494
        %v2525 = vadd.f32 %v2445, %v2497
        %v2526 = vadd.f32 %v2446, %v2500
        %v2527 = vadd.f32 %v2447, %v2503
        %v2528 = vadd.f32 %v2448, %v2506
        %v2529 = vadd.f32 %v2449, %v2509
        %v2530 = vadd.f32 %v2450, %v2512
        %v2531 = vadd.f32 %v2451, %v2515
        %s2532 = scalar_lea.vmem %s241, 39
        %v2533 = vld [vmem:[%s2532] sm:$0x1]
        %v2535 = vlaneseq
        %v2536 = vshrl.u32 %v2535, 7
        %v2537 = vsub.s32 0, %v2536
        %v2538 = vrot.slane %v2533, %v2537
        %v2540 = vmul.f32 %v256, %v2538
        %v2541 = vmul.f32 %v257, %v2538
        %v2542 = vmul.f32 %v258, %v2538
        %v2543 = vmul.f32 %v259, %v2538
        %v2544 = vmul.f32 %v260, %v2538
        %v2545 = vmul.f32 %v261, %v2538
        %v2546 = vmul.f32 %v262, %v2538
        %v2547 = vmul.f32 %v263, %v2538
        %v2548 = vmul.f32 %v264, %v2538
        %v2549 = vmul.f32 %v265, %v2538
        %v2550 = vmul.f32 %v266, %v2538
        %v2551 = vmul.f32 %v267, %v2538
        %v2552 = vmul.f32 %v268, %v2538
        %v2553 = vmul.f32 %v269, %v2538
        %v2554 = vmul.f32 %v270, %v2538
        %v2555 = vmul.f32 %v271, %v2538
        %v2572 = vrot.slane %v2540, 4
        %v2573 = vrot.slane %v2541, 4
        %v2574 = vsel %vm2171, %v2572, %v2573
        %v2575 = vrot.slane %v2542, 4
        %v2576 = vrot.slane %v2543, 4
        %v2577 = vsel %vm2171, %v2575, %v2576
        %v2578 = vrot.slane %v2544, 4
        %v2579 = vrot.slane %v2545, 4
        %v2580 = vsel %vm2171, %v2578, %v2579
        %v2581 = vrot.slane %v2546, 4
        %v2582 = vrot.slane %v2547, 4
        %v2583 = vsel %vm2171, %v2581, %v2582
        %v2584 = vrot.slane %v2548, 4
        %v2585 = vrot.slane %v2549, 4
        %v2586 = vsel %vm2171, %v2584, %v2585
        %v2587 = vrot.slane %v2550, 4
        %v2588 = vrot.slane %v2551, 4
        %v2589 = vsel %vm2171, %v2587, %v2588
        %v2590 = vrot.slane %v2552, 4
        %v2591 = vrot.slane %v2553, 4
        %v2592 = vsel %vm2171, %v2590, %v2591
        %v2593 = vrot.slane %v2554, 4
        %v2594 = vrot.slane %v2555, 4
        %v2595 = vsel %vm2171, %v2593, %v2594
        %v2604 = vadd.f32 %v2524, %v2574
        %v2605 = vadd.f32 %v2525, %v2577
        %v2606 = vadd.f32 %v2526, %v2580
        %v2607 = vadd.f32 %v2527, %v2583
        %v2608 = vadd.f32 %v2528, %v2586
        %v2609 = vadd.f32 %v2529, %v2589
        %v2610 = vadd.f32 %v2530, %v2592
        %v2611 = vadd.f32 %v2531, %v2595
        %s2612 = scalar_lea.vmem %s241, 46
        %v2613 = vld [vmem:[%s2612] sm:$0x1]
        %v2615 = vlaneseq
        %v2616 = vshrl.u32 %v2615, 7
        %v2617 = vsub.s32 0, %v2616
        %v2618 = vrot.slane %v2613, %v2617
        %v2620 = vmul.f32 %v258, %v2618
        %v2621 = vmul.f32 %v259, %v2618
        %v2622 = vmul.f32 %v260, %v2618
        %v2623 = vmul.f32 %v261, %v2618
        %v2624 = vmul.f32 %v262, %v2618
        %v2625 = vmul.f32 %v263, %v2618
        %v2626 = vmul.f32 %v264, %v2618
        %v2627 = vmul.f32 %v265, %v2618
        %v2628 = vmul.f32 %v266, %v2618
        %v2629 = vmul.f32 %v267, %v2618
        %v2630 = vmul.f32 %v268, %v2618
        %v2631 = vmul.f32 %v269, %v2618
        %v2632 = vmul.f32 %v270, %v2618
        %v2633 = vmul.f32 %v271, %v2618
        %v2634 = vmul.f32 %v272, %v2618
        %v2635 = vmul.f32 %v273, %v2618
        %v2652 = vrot.slane %v2620, 4
        %v2653 = vrot.slane %v2621, 4
        %v2654 = vsel %vm2171, %v2652, %v2653
        %v2655 = vrot.slane %v2622, 4
        %v2656 = vrot.slane %v2623, 4
        %v2657 = vsel %vm2171, %v2655, %v2656
        %v2658 = vrot.slane %v2624, 4
        %v2659 = vrot.slane %v2625, 4
        %v2660 = vsel %vm2171, %v2658, %v2659
        %v2661 = vrot.slane %v2626, 4
        %v2662 = vrot.slane %v2627, 4
        %v2663 = vsel %vm2171, %v2661, %v2662
        %v2664 = vrot.slane %v2628, 4
        %v2665 = vrot.slane %v2629, 4
        %v2666 = vsel %vm2171, %v2664, %v2665
        %v2667 = vrot.slane %v2630, 4
        %v2668 = vrot.slane %v2631, 4
        %v2669 = vsel %vm2171, %v2667, %v2668
        %v2670 = vrot.slane %v2632, 4
        %v2671 = vrot.slane %v2633, 4
        %v2672 = vsel %vm2171, %v2670, %v2671
        %v2673 = vrot.slane %v2634, 4
        %v2674 = vrot.slane %v2635, 4
        %v2675 = vsel %vm2171, %v2673, %v2674
        %v2684 = vadd.f32 %v2604, %v2654
        %v2685 = vadd.f32 %v2605, %v2657
        %v2686 = vadd.f32 %v2606, %v2660
        %v2687 = vadd.f32 %v2607, %v2663
        %v2688 = vadd.f32 %v2608, %v2666
        %v2689 = vadd.f32 %v2609, %v2669
        %v2690 = vadd.f32 %v2610, %v2672
        %v2691 = vadd.f32 %v2611, %v2675
        %s2692 = scalar_lea.vmem %s241, 5
        %v2693 = vld [vmem:[%s2692] sm:$0x1]
        %v2695 = vlaneseq
        %v2696 = vshrl.u32 %v2695, 7
        %v2697 = vsub.s32 0, %v2696
        %v2698 = vrot.slane %v2693, %v2697
        %v2700 = vmul.f32 %v246, %v2698
        %v2701 = vmul.f32 %v247, %v2698
        %v2702 = vmul.f32 %v248, %v2698
        %v2703 = vmul.f32 %v249, %v2698
        %v2704 = vmul.f32 %v250, %v2698
        %v2705 = vmul.f32 %v251, %v2698
        %v2706 = vmul.f32 %v252, %v2698
        %v2707 = vmul.f32 %v253, %v2698
        %v2708 = vmul.f32 %v254, %v2698
        %v2709 = vmul.f32 %v255, %v2698
        %v2710 = vmul.f32 %v256, %v2698
        %v2711 = vmul.f32 %v257, %v2698
        %v2712 = vmul.f32 %v258, %v2698
        %v2713 = vmul.f32 %v259, %v2698
        %v2714 = vmul.f32 %v260, %v2698
        %v2715 = vmul.f32 %v261, %v2698
        %vm2732 = vcmask 1042432
        %v2733 = vrot.slane %v2700, 5
        %v2734 = vrot.slane %v2701, 5
        %v2735 = vsel %vm2732, %v2733, %v2734
        %v2736 = vrot.slane %v2702, 5
        %v2737 = vrot.slane %v2703, 5
        %v2738 = vsel %vm2732, %v2736, %v2737
        %v2739 = vrot.slane %v2704, 5
        %v2740 = vrot.slane %v2705, 5
        %v2741 = vsel %vm2732, %v2739, %v2740
        %v2742 = vrot.slane %v2706, 5
        %v2743 = vrot.slane %v2707, 5
        %v2744 = vsel %vm2732, %v2742, %v2743
        %v2745 = vrot.slane %v2708, 5
        %v2746 = vrot.slane %v2709, 5
        %v2747 = vsel %vm2732, %v2745, %v2746
        %v2748 = vrot.slane %v2710, 5
        %v2749 = vrot.slane %v2711, 5
        %v2750 = vsel %vm2732, %v2748, %v2749
        %v2751 = vrot.slane %v2712, 5
        %v2752 = vrot.slane %v2713, 5
        %v2753 = vsel %vm2732, %v2751, %v2752
        %v2754 = vrot.slane %v2714, 5
        %v2755 = vrot.slane %v2715, 5
        %v2756 = vsel %vm2732, %v2754, %v2755
        %v2765 = vadd.f32 %v2684, %v2735
        %v2766 = vadd.f32 %v2685, %v2738
        %v2767 = vadd.f32 %v2686, %v2741
        %v2768 = vadd.f32 %v2687, %v2744
        %v2769 = vadd.f32 %v2688, %v2747
        %v2770 = vadd.f32 %v2689, %v2750
        %v2771 = vadd.f32 %v2690, %v2753
        %v2772 = vadd.f32 %v2691, %v2756
        %s2773 = scalar_lea.vmem %s241, 12
        %v2774 = vld [vmem:[%s2773] sm:$0x1]
        %v2776 = vlaneseq
        %v2777 = vshrl.u32 %v2776, 7
        %v2778 = vsub.s32 0, %v2777
        %v2779 = vrot.slane %v2774, %v2778
        %v2781 = vmul.f32 %v248, %v2779
        %v2782 = vmul.f32 %v249, %v2779
        %v2783 = vmul.f32 %v250, %v2779
        %v2784 = vmul.f32 %v251, %v2779
        %v2785 = vmul.f32 %v252, %v2779
        %v2786 = vmul.f32 %v253, %v2779
        %v2787 = vmul.f32 %v254, %v2779
        %v2788 = vmul.f32 %v255, %v2779
        %v2789 = vmul.f32 %v256, %v2779
        %v2790 = vmul.f32 %v257, %v2779
        %v2791 = vmul.f32 %v258, %v2779
        %v2792 = vmul.f32 %v259, %v2779
        %v2793 = vmul.f32 %v260, %v2779
        %v2794 = vmul.f32 %v261, %v2779
        %v2795 = vmul.f32 %v262, %v2779
        %v2796 = vmul.f32 %v263, %v2779
        %v2813 = vrot.slane %v2781, 5
        %v2814 = vrot.slane %v2782, 5
        %v2815 = vsel %vm2732, %v2813, %v2814
        %v2816 = vrot.slane %v2783, 5
        %v2817 = vrot.slane %v2784, 5
        %v2818 = vsel %vm2732, %v2816, %v2817
        %v2819 = vrot.slane %v2785, 5
        %v2820 = vrot.slane %v2786, 5
        %v2821 = vsel %vm2732, %v2819, %v2820
        %v2822 = vrot.slane %v2787, 5
        %v2823 = vrot.slane %v2788, 5
        %v2824 = vsel %vm2732, %v2822, %v2823
        %v2825 = vrot.slane %v2789, 5
        %v2826 = vrot.slane %v2790, 5
        %v2827 = vsel %vm2732, %v2825, %v2826
        %v2828 = vrot.slane %v2791, 5
        %v2829 = vrot.slane %v2792, 5
        %v2830 = vsel %vm2732, %v2828, %v2829
        %v2831 = vrot.slane %v2793, 5
        %v2832 = vrot.slane %v2794, 5
        %v2833 = vsel %vm2732, %v2831, %v2832
        %v2834 = vrot.slane %v2795, 5
        %v2835 = vrot.slane %v2796, 5
        %v2836 = vsel %vm2732, %v2834, %v2835
        %v2845 = vadd.f32 %v2765, %v2815
        %v2846 = vadd.f32 %v2766, %v2818
        %v2847 = vadd.f32 %v2767, %v2821
        %v2848 = vadd.f32 %v2768, %v2824
        %v2849 = vadd.f32 %v2769, %v2827
        %v2850 = vadd.f32 %v2770, %v2830
        %v2851 = vadd.f32 %v2771, %v2833
        %v2852 = vadd.f32 %v2772, %v2836
        %s2853 = scalar_lea.vmem %s241, 19
        %v2854 = vld [vmem:[%s2853] sm:$0x1]
        %v2856 = vlaneseq
        %v2857 = vshrl.u32 %v2856, 7
        %v2858 = vsub.s32 0, %v2857
        %v2859 = vrot.slane %v2854, %v2858
        %v2861 = vmul.f32 %v250, %v2859
        %v2862 = vmul.f32 %v251, %v2859
        %v2863 = vmul.f32 %v252, %v2859
        %v2864 = vmul.f32 %v253, %v2859
        %v2865 = vmul.f32 %v254, %v2859
        %v2866 = vmul.f32 %v255, %v2859
        %v2867 = vmul.f32 %v256, %v2859
        %v2868 = vmul.f32 %v257, %v2859
        %v2869 = vmul.f32 %v258, %v2859
        %v2870 = vmul.f32 %v259, %v2859
        %v2871 = vmul.f32 %v260, %v2859
        %v2872 = vmul.f32 %v261, %v2859
        %v2873 = vmul.f32 %v262, %v2859
        %v2874 = vmul.f32 %v263, %v2859
        %v2875 = vmul.f32 %v264, %v2859
        %v2876 = vmul.f32 %v265, %v2859
        %v2893 = vrot.slane %v2861, 5
        %v2894 = vrot.slane %v2862, 5
        %v2895 = vsel %vm2732, %v2893, %v2894
        %v2896 = vrot.slane %v2863, 5
        %v2897 = vrot.slane %v2864, 5
        %v2898 = vsel %vm2732, %v2896, %v2897
        %v2899 = vrot.slane %v2865, 5
        %v2900 = vrot.slane %v2866, 5
        %v2901 = vsel %vm2732, %v2899, %v2900
        %v2902 = vrot.slane %v2867, 5
        %v2903 = vrot.slane %v2868, 5
        %v2904 = vsel %vm2732, %v2902, %v2903
        %v2905 = vrot.slane %v2869, 5
        %v2906 = vrot.slane %v2870, 5
        %v2907 = vsel %vm2732, %v2905, %v2906
        %v2908 = vrot.slane %v2871, 5
        %v2909 = vrot.slane %v2872, 5
        %v2910 = vsel %vm2732, %v2908, %v2909
        %v2911 = vrot.slane %v2873, 5
        %v2912 = vrot.slane %v2874, 5
        %v2913 = vsel %vm2732, %v2911, %v2912
        %v2914 = vrot.slane %v2875, 5
        %v2915 = vrot.slane %v2876, 5
        %v2916 = vsel %vm2732, %v2914, %v2915
        %v2925 = vadd.f32 %v2845, %v2895
        %v2926 = vadd.f32 %v2846, %v2898
        %v2927 = vadd.f32 %v2847, %v2901
        %v2928 = vadd.f32 %v2848, %v2904
        %v2929 = vadd.f32 %v2849, %v2907
        %v2930 = vadd.f32 %v2850, %v2910
        %v2931 = vadd.f32 %v2851, %v2913
        %v2932 = vadd.f32 %v2852, %v2916
        %s2933 = scalar_lea.vmem %s241, 26
        %v2934 = vld [vmem:[%s2933] sm:$0x1]
        %v2936 = vlaneseq
        %v2937 = vshrl.u32 %v2936, 7
        %v2938 = vsub.s32 0, %v2937
        %v2939 = vrot.slane %v2934, %v2938
        %v2941 = vmul.f32 %v252, %v2939
        %v2942 = vmul.f32 %v253, %v2939
        %v2943 = vmul.f32 %v254, %v2939
        %v2944 = vmul.f32 %v255, %v2939
        %v2945 = vmul.f32 %v256, %v2939
        %v2946 = vmul.f32 %v257, %v2939
        %v2947 = vmul.f32 %v258, %v2939
        %v2948 = vmul.f32 %v259, %v2939
        %v2949 = vmul.f32 %v260, %v2939
        %v2950 = vmul.f32 %v261, %v2939
        %v2951 = vmul.f32 %v262, %v2939
        %v2952 = vmul.f32 %v263, %v2939
        %v2953 = vmul.f32 %v264, %v2939
        %v2954 = vmul.f32 %v265, %v2939
        %v2955 = vmul.f32 %v266, %v2939
        %v2956 = vmul.f32 %v267, %v2939
        %v2973 = vrot.slane %v2941, 5
        %v2974 = vrot.slane %v2942, 5
        %v2975 = vsel %vm2732, %v2973, %v2974
        %v2976 = vrot.slane %v2943, 5
        %v2977 = vrot.slane %v2944, 5
        %v2978 = vsel %vm2732, %v2976, %v2977
        %v2979 = vrot.slane %v2945, 5
        %v2980 = vrot.slane %v2946, 5
        %v2981 = vsel %vm2732, %v2979, %v2980
        %v2982 = vrot.slane %v2947, 5
        %v2983 = vrot.slane %v2948, 5
        %v2984 = vsel %vm2732, %v2982, %v2983
        %v2985 = vrot.slane %v2949, 5
        %v2986 = vrot.slane %v2950, 5
        %v2987 = vsel %vm2732, %v2985, %v2986
        %v2988 = vrot.slane %v2951, 5
        %v2989 = vrot.slane %v2952, 5
        %v2990 = vsel %vm2732, %v2988, %v2989
        %v2991 = vrot.slane %v2953, 5
        %v2992 = vrot.slane %v2954, 5
        %v2993 = vsel %vm2732, %v2991, %v2992
        %v2994 = vrot.slane %v2955, 5
        %v2995 = vrot.slane %v2956, 5
        %v2996 = vsel %vm2732, %v2994, %v2995
        %v3005 = vadd.f32 %v2925, %v2975
        %v3006 = vadd.f32 %v2926, %v2978
        %v3007 = vadd.f32 %v2927, %v2981
        %v3008 = vadd.f32 %v2928, %v2984
        %v3009 = vadd.f32 %v2929, %v2987
        %v3010 = vadd.f32 %v2930, %v2990
        %v3011 = vadd.f32 %v2931, %v2993
        %v3012 = vadd.f32 %v2932, %v2996
        %s3013 = scalar_lea.vmem %s241, 33
        %v3014 = vld [vmem:[%s3013] sm:$0x1]
        %v3016 = vlaneseq
        %v3017 = vshrl.u32 %v3016, 7
        %v3018 = vsub.s32 0, %v3017
        %v3019 = vrot.slane %v3014, %v3018
        %v3021 = vmul.f32 %v254, %v3019
        %v3022 = vmul.f32 %v255, %v3019
        %v3023 = vmul.f32 %v256, %v3019
        %v3024 = vmul.f32 %v257, %v3019
        %v3025 = vmul.f32 %v258, %v3019
        %v3026 = vmul.f32 %v259, %v3019
        %v3027 = vmul.f32 %v260, %v3019
        %v3028 = vmul.f32 %v261, %v3019
        %v3029 = vmul.f32 %v262, %v3019
        %v3030 = vmul.f32 %v263, %v3019
        %v3031 = vmul.f32 %v264, %v3019
        %v3032 = vmul.f32 %v265, %v3019
        %v3033 = vmul.f32 %v266, %v3019
        %v3034 = vmul.f32 %v267, %v3019
        %v3035 = vmul.f32 %v268, %v3019
        %v3036 = vmul.f32 %v269, %v3019
        %v3053 = vrot.slane %v3021, 5
        %v3054 = vrot.slane %v3022, 5
        %v3055 = vsel %vm2732, %v3053, %v3054
        %v3056 = vrot.slane %v3023, 5
        %v3057 = vrot.slane %v3024, 5
        %v3058 = vsel %vm2732, %v3056, %v3057
        %v3059 = vrot.slane %v3025, 5
        %v3060 = vrot.slane %v3026, 5
        %v3061 = vsel %vm2732, %v3059, %v3060
        %v3062 = vrot.slane %v3027, 5
        %v3063 = vrot.slane %v3028, 5
        %v3064 = vsel %vm2732, %v3062, %v3063
        %v3065 = vrot.slane %v3029, 5
        %v3066 = vrot.slane %v3030, 5
        %v3067 = vsel %vm2732, %v3065, %v3066
        %v3068 = vrot.slane %v3031, 5
        %v3069 = vrot.slane %v3032, 5
        %v3070 = vsel %vm2732, %v3068, %v3069
        %v3071 = vrot.slane %v3033, 5
        %v3072 = vrot.slane %v3034, 5
        %v3073 = vsel %vm2732, %v3071, %v3072
        %v3074 = vrot.slane %v3035, 5
        %v3075 = vrot.slane %v3036, 5
        %v3076 = vsel %vm2732, %v3074, %v3075
        %v3085 = vadd.f32 %v3005, %v3055
        %v3086 = vadd.f32 %v3006, %v3058
        %v3087 = vadd.f32 %v3007, %v3061
        %v3088 = vadd.f32 %v3008, %v3064
        %v3089 = vadd.f32 %v3009, %v3067
        %v3090 = vadd.f32 %v3010, %v3070
        %v3091 = vadd.f32 %v3011, %v3073
        %v3092 = vadd.f32 %v3012, %v3076
        %s3093 = scalar_lea.vmem %s241, 40
        %v3094 = vld [vmem:[%s3093] sm:$0x1]
        %v3096 = vlaneseq
        %v3097 = vshrl.u32 %v3096, 7
        %v3098 = vsub.s32 0, %v3097
        %v3099 = vrot.slane %v3094, %v3098
        %v3101 = vmul.f32 %v256, %v3099
        %v3102 = vmul.f32 %v257, %v3099
        %v3103 = vmul.f32 %v258, %v3099
        %v3104 = vmul.f32 %v259, %v3099
        %v3105 = vmul.f32 %v260, %v3099
        %v3106 = vmul.f32 %v261, %v3099
        %v3107 = vmul.f32 %v262, %v3099
        %v3108 = vmul.f32 %v263, %v3099
        %v3109 = vmul.f32 %v264, %v3099
        %v3110 = vmul.f32 %v265, %v3099
        %v3111 = vmul.f32 %v266, %v3099
        %v3112 = vmul.f32 %v267, %v3099
        %v3113 = vmul.f32 %v268, %v3099
        %v3114 = vmul.f32 %v269, %v3099
        %v3115 = vmul.f32 %v270, %v3099
        %v3116 = vmul.f32 %v271, %v3099
        %v3133 = vrot.slane %v3101, 5
        %v3134 = vrot.slane %v3102, 5
        %v3135 = vsel %vm2732, %v3133, %v3134
        %v3136 = vrot.slane %v3103, 5
        %v3137 = vrot.slane %v3104, 5
        %v3138 = vsel %vm2732, %v3136, %v3137
        %v3139 = vrot.slane %v3105, 5
        %v3140 = vrot.slane %v3106, 5
        %v3141 = vsel %vm2732, %v3139, %v3140
        %v3142 = vrot.slane %v3107, 5
        %v3143 = vrot.slane %v3108, 5
        %v3144 = vsel %vm2732, %v3142, %v3143
        %v3145 = vrot.slane %v3109, 5
        %v3146 = vrot.slane %v3110, 5
        %v3147 = vsel %vm2732, %v3145, %v3146
        %v3148 = vrot.slane %v3111, 5
        %v3149 = vrot.slane %v3112, 5
        %v3150 = vsel %vm2732, %v3148, %v3149
        %v3151 = vrot.slane %v3113, 5
        %v3152 = vrot.slane %v3114, 5
        %v3153 = vsel %vm2732, %v3151, %v3152
        %v3154 = vrot.slane %v3115, 5
        %v3155 = vrot.slane %v3116, 5
        %v3156 = vsel %vm2732, %v3154, %v3155
        %v3165 = vadd.f32 %v3085, %v3135
        %v3166 = vadd.f32 %v3086, %v3138
        %v3167 = vadd.f32 %v3087, %v3141
        %v3168 = vadd.f32 %v3088, %v3144
        %v3169 = vadd.f32 %v3089, %v3147
        %v3170 = vadd.f32 %v3090, %v3150
        %v3171 = vadd.f32 %v3091, %v3153
        %v3172 = vadd.f32 %v3092, %v3156
        %s3173 = scalar_lea.vmem %s241, 47
        %v3174 = vld [vmem:[%s3173] sm:$0x1]
        %v3176 = vlaneseq
        %v3177 = vshrl.u32 %v3176, 7
        %v3178 = vsub.s32 0, %v3177
        %v3179 = vrot.slane %v3174, %v3178
        %v3181 = vmul.f32 %v258, %v3179
        %v3182 = vmul.f32 %v259, %v3179
        %v3183 = vmul.f32 %v260, %v3179
        %v3184 = vmul.f32 %v261, %v3179
        %v3185 = vmul.f32 %v262, %v3179
        %v3186 = vmul.f32 %v263, %v3179
        %v3187 = vmul.f32 %v264, %v3179
        %v3188 = vmul.f32 %v265, %v3179
        %v3189 = vmul.f32 %v266, %v3179
        %v3190 = vmul.f32 %v267, %v3179
        %v3191 = vmul.f32 %v268, %v3179
        %v3192 = vmul.f32 %v269, %v3179
        %v3193 = vmul.f32 %v270, %v3179
        %v3194 = vmul.f32 %v271, %v3179
        %v3195 = vmul.f32 %v272, %v3179
        %v3196 = vmul.f32 %v273, %v3179
        %v3213 = vrot.slane %v3181, 5
        %v3214 = vrot.slane %v3182, 5
        %v3215 = vsel %vm2732, %v3213, %v3214
        %v3216 = vrot.slane %v3183, 5
        %v3217 = vrot.slane %v3184, 5
        %v3218 = vsel %vm2732, %v3216, %v3217
        %v3219 = vrot.slane %v3185, 5
        %v3220 = vrot.slane %v3186, 5
        %v3221 = vsel %vm2732, %v3219, %v3220
        %v3222 = vrot.slane %v3187, 5
        %v3223 = vrot.slane %v3188, 5
        %v3224 = vsel %vm2732, %v3222, %v3223
        %v3225 = vrot.slane %v3189, 5
        %v3226 = vrot.slane %v3190, 5
        %v3227 = vsel %vm2732, %v3225, %v3226
        %v3228 = vrot.slane %v3191, 5
        %v3229 = vrot.slane %v3192, 5
        %v3230 = vsel %vm2732, %v3228, %v3229
        %v3231 = vrot.slane %v3193, 5
        %v3232 = vrot.slane %v3194, 5
        %v3233 = vsel %vm2732, %v3231, %v3232
        %v3234 = vrot.slane %v3195, 5
        %v3235 = vrot.slane %v3196, 5
        %v3236 = vsel %vm2732, %v3234, %v3235
        %v3245 = vadd.f32 %v3165, %v3215
        %v3246 = vadd.f32 %v3166, %v3218
        %v3247 = vadd.f32 %v3167, %v3221
        %v3248 = vadd.f32 %v3168, %v3224
        %v3249 = vadd.f32 %v3169, %v3227
        %v3250 = vadd.f32 %v3170, %v3230
        %v3251 = vadd.f32 %v3171, %v3233
        %v3252 = vadd.f32 %v3172, %v3236
        %s3253 = scalar_lea.vmem %s241, 6
        %v3254 = vld [vmem:[%s3253] sm:$0x1]
        %v3256 = vlaneseq
        %v3257 = vshrl.u32 %v3256, 7
        %v3258 = vsub.s32 0, %v3257
        %v3259 = vrot.slane %v3254, %v3258
        %v3261 = vmul.f32 %v246, %v3259
        %v3262 = vmul.f32 %v247, %v3259
        %v3263 = vmul.f32 %v248, %v3259
        %v3264 = vmul.f32 %v249, %v3259
        %v3265 = vmul.f32 %v250, %v3259
        %v3266 = vmul.f32 %v251, %v3259
        %v3267 = vmul.f32 %v252, %v3259
        %v3268 = vmul.f32 %v253, %v3259
        %v3269 = vmul.f32 %v254, %v3259
        %v3270 = vmul.f32 %v255, %v3259
        %v3271 = vmul.f32 %v256, %v3259
        %v3272 = vmul.f32 %v257, %v3259
        %v3273 = vmul.f32 %v258, %v3259
        %v3274 = vmul.f32 %v259, %v3259
        %v3275 = vmul.f32 %v260, %v3259
        %v3276 = vmul.f32 %v261, %v3259
        %vm3293 = vcmask 1041408
        %v3294 = vrot.slane %v3261, 6
        %v3295 = vrot.slane %v3262, 6
        %v3296 = vsel %vm3293, %v3294, %v3295
        %v3297 = vrot.slane %v3263, 6
        %v3298 = vrot.slane %v3264, 6
        %v3299 = vsel %vm3293, %v3297, %v3298
        %v3300 = vrot.slane %v3265, 6
        %v3301 = vrot.slane %v3266, 6
        %v3302 = vsel %vm3293, %v3300, %v3301
        %v3303 = vrot.slane %v3267, 6
        %v3304 = vrot.slane %v3268, 6
        %v3305 = vsel %vm3293, %v3303, %v3304
        %v3306 = vrot.slane %v3269, 6
        %v3307 = vrot.slane %v3270, 6
        %v3308 = vsel %vm3293, %v3306, %v3307
        %v3309 = vrot.slane %v3271, 6
        %v3310 = vrot.slane %v3272, 6
        %v3311 = vsel %vm3293, %v3309, %v3310
        %v3312 = vrot.slane %v3273, 6
        %v3313 = vrot.slane %v3274, 6
        %v3314 = vsel %vm3293, %v3312, %v3313
        %v3315 = vrot.slane %v3275, 6
        %v3316 = vrot.slane %v3276, 6
        %v3317 = vsel %vm3293, %v3315, %v3316
        %v3326 = vadd.f32 %v3245, %v3296
        %v3327 = vadd.f32 %v3246, %v3299
        %v3328 = vadd.f32 %v3247, %v3302
        %v3329 = vadd.f32 %v3248, %v3305
        %v3330 = vadd.f32 %v3249, %v3308
        %v3331 = vadd.f32 %v3250, %v3311
        %v3332 = vadd.f32 %v3251, %v3314
        %v3333 = vadd.f32 %v3252, %v3317
        %s3334 = scalar_lea.vmem %s241, 13
        %v3335 = vld [vmem:[%s3334] sm:$0x1]
        %v3337 = vlaneseq
        %v3338 = vshrl.u32 %v3337, 7
        %v3339 = vsub.s32 0, %v3338
        %v3340 = vrot.slane %v3335, %v3339
        %v3342 = vmul.f32 %v248, %v3340
        %v3343 = vmul.f32 %v249, %v3340
        %v3344 = vmul.f32 %v250, %v3340
        %v3345 = vmul.f32 %v251, %v3340
        %v3346 = vmul.f32 %v252, %v3340
        %v3347 = vmul.f32 %v253, %v3340
        %v3348 = vmul.f32 %v254, %v3340
        %v3349 = vmul.f32 %v255, %v3340
        %v3350 = vmul.f32 %v256, %v3340
        %v3351 = vmul.f32 %v257, %v3340
        %v3352 = vmul.f32 %v258, %v3340
        %v3353 = vmul.f32 %v259, %v3340
        %v3354 = vmul.f32 %v260, %v3340
        %v3355 = vmul.f32 %v261, %v3340
        %v3356 = vmul.f32 %v262, %v3340
        %v3357 = vmul.f32 %v263, %v3340
        %v3374 = vrot.slane %v3342, 6
        %v3375 = vrot.slane %v3343, 6
        %v3376 = vsel %vm3293, %v3374, %v3375
        %v3377 = vrot.slane %v3344, 6
        %v3378 = vrot.slane %v3345, 6
        %v3379 = vsel %vm3293, %v3377, %v3378
        %v3380 = vrot.slane %v3346, 6
        %v3381 = vrot.slane %v3347, 6
        %v3382 = vsel %vm3293, %v3380, %v3381
        %v3383 = vrot.slane %v3348, 6
        %v3384 = vrot.slane %v3349, 6
        %v3385 = vsel %vm3293, %v3383, %v3384
        %v3386 = vrot.slane %v3350, 6
        %v3387 = vrot.slane %v3351, 6
        %v3388 = vsel %vm3293, %v3386, %v3387
        %v3389 = vrot.slane %v3352, 6
        %v3390 = vrot.slane %v3353, 6
        %v3391 = vsel %vm3293, %v3389, %v3390
        %v3392 = vrot.slane %v3354, 6
        %v3393 = vrot.slane %v3355, 6
        %v3394 = vsel %vm3293, %v3392, %v3393
        %v3395 = vrot.slane %v3356, 6
        %v3396 = vrot.slane %v3357, 6
        %v3397 = vsel %vm3293, %v3395, %v3396
        %v3406 = vadd.f32 %v3326, %v3376
        %v3407 = vadd.f32 %v3327, %v3379
        %v3408 = vadd.f32 %v3328, %v3382
        %v3409 = vadd.f32 %v3329, %v3385
        %v3410 = vadd.f32 %v3330, %v3388
        %v3411 = vadd.f32 %v3331, %v3391
        %v3412 = vadd.f32 %v3332, %v3394
        %v3413 = vadd.f32 %v3333, %v3397
        %s3414 = scalar_lea.vmem %s241, 20
        %v3415 = vld [vmem:[%s3414] sm:$0x1]
        %v3417 = vlaneseq
        %v3418 = vshrl.u32 %v3417, 7
        %v3419 = vsub.s32 0, %v3418
        %v3420 = vrot.slane %v3415, %v3419
        %v3422 = vmul.f32 %v250, %v3420
        %v3423 = vmul.f32 %v251, %v3420
        %v3424 = vmul.f32 %v252, %v3420
        %v3425 = vmul.f32 %v253, %v3420
        %v3426 = vmul.f32 %v254, %v3420
        %v3427 = vmul.f32 %v255, %v3420
        %v3428 = vmul.f32 %v256, %v3420
        %v3429 = vmul.f32 %v257, %v3420
        %v3430 = vmul.f32 %v258, %v3420
        %v3431 = vmul.f32 %v259, %v3420
        %v3432 = vmul.f32 %v260, %v3420
        %v3433 = vmul.f32 %v261, %v3420
        %v3434 = vmul.f32 %v262, %v3420
        %v3435 = vmul.f32 %v263, %v3420
        %v3436 = vmul.f32 %v264, %v3420
        %v3437 = vmul.f32 %v265, %v3420
        %v3454 = vrot.slane %v3422, 6
        %v3455 = vrot.slane %v3423, 6
        %v3456 = vsel %vm3293, %v3454, %v3455
        %v3457 = vrot.slane %v3424, 6
        %v3458 = vrot.slane %v3425, 6
        %v3459 = vsel %vm3293, %v3457, %v3458
        %v3460 = vrot.slane %v3426, 6
        %v3461 = vrot.slane %v3427, 6
        %v3462 = vsel %vm3293, %v3460, %v3461
        %v3463 = vrot.slane %v3428, 6
        %v3464 = vrot.slane %v3429, 6
        %v3465 = vsel %vm3293, %v3463, %v3464
        %v3466 = vrot.slane %v3430, 6
        %v3467 = vrot.slane %v3431, 6
        %v3468 = vsel %vm3293, %v3466, %v3467
        %v3469 = vrot.slane %v3432, 6
        %v3470 = vrot.slane %v3433, 6
        %v3471 = vsel %vm3293, %v3469, %v3470
        %v3472 = vrot.slane %v3434, 6
        %v3473 = vrot.slane %v3435, 6
        %v3474 = vsel %vm3293, %v3472, %v3473
        %v3475 = vrot.slane %v3436, 6
        %v3476 = vrot.slane %v3437, 6
        %v3477 = vsel %vm3293, %v3475, %v3476
        %v3486 = vadd.f32 %v3406, %v3456
        %v3487 = vadd.f32 %v3407, %v3459
        %v3488 = vadd.f32 %v3408, %v3462
        %v3489 = vadd.f32 %v3409, %v3465
        %v3490 = vadd.f32 %v3410, %v3468
        %v3491 = vadd.f32 %v3411, %v3471
        %v3492 = vadd.f32 %v3412, %v3474
        %v3493 = vadd.f32 %v3413, %v3477
        %s3494 = scalar_lea.vmem %s241, 27
        %v3495 = vld [vmem:[%s3494] sm:$0x1]
        %v3497 = vlaneseq
        %v3498 = vshrl.u32 %v3497, 7
        %v3499 = vsub.s32 0, %v3498
        %v3500 = vrot.slane %v3495, %v3499
        %v3502 = vmul.f32 %v252, %v3500
        %v3503 = vmul.f32 %v253, %v3500
        %v3504 = vmul.f32 %v254, %v3500
        %v3505 = vmul.f32 %v255, %v3500
        %v3506 = vmul.f32 %v256, %v3500
        %v3507 = vmul.f32 %v257, %v3500
        %v3508 = vmul.f32 %v258, %v3500
        %v3509 = vmul.f32 %v259, %v3500
        %v3510 = vmul.f32 %v260, %v3500
        %v3511 = vmul.f32 %v261, %v3500
        %v3512 = vmul.f32 %v262, %v3500
        %v3513 = vmul.f32 %v263, %v3500
        %v3514 = vmul.f32 %v264, %v3500
        %v3515 = vmul.f32 %v265, %v3500
        %v3516 = vmul.f32 %v266, %v3500
        %v3517 = vmul.f32 %v267, %v3500
        %v3534 = vrot.slane %v3502, 6
        %v3535 = vrot.slane %v3503, 6
        %v3536 = vsel %vm3293, %v3534, %v3535
        %v3537 = vrot.slane %v3504, 6
        %v3538 = vrot.slane %v3505, 6
        %v3539 = vsel %vm3293, %v3537, %v3538
        %v3540 = vrot.slane %v3506, 6
        %v3541 = vrot.slane %v3507, 6
        %v3542 = vsel %vm3293, %v3540, %v3541
        %v3543 = vrot.slane %v3508, 6
        %v3544 = vrot.slane %v3509, 6
        %v3545 = vsel %vm3293, %v3543, %v3544
        %v3546 = vrot.slane %v3510, 6
        %v3547 = vrot.slane %v3511, 6
        %v3548 = vsel %vm3293, %v3546, %v3547
        %v3549 = vrot.slane %v3512, 6
        %v3550 = vrot.slane %v3513, 6
        %v3551 = vsel %vm3293, %v3549, %v3550
        %v3552 = vrot.slane %v3514, 6
        %v3553 = vrot.slane %v3515, 6
        %v3554 = vsel %vm3293, %v3552, %v3553
        %v3555 = vrot.slane %v3516, 6
        %v3556 = vrot.slane %v3517, 6
        %v3557 = vsel %vm3293, %v3555, %v3556
        %v3566 = vadd.f32 %v3486, %v3536
        %v3567 = vadd.f32 %v3487, %v3539
        %v3568 = vadd.f32 %v3488, %v3542
        %v3569 = vadd.f32 %v3489, %v3545
        %v3570 = vadd.f32 %v3490, %v3548
        %v3571 = vadd.f32 %v3491, %v3551
        %v3572 = vadd.f32 %v3492, %v3554
        %v3573 = vadd.f32 %v3493, %v3557
        %s3574 = scalar_lea.vmem %s241, 34
        %v3575 = vld [vmem:[%s3574] sm:$0x1]
        %v3577 = vlaneseq
        %v3578 = vshrl.u32 %v3577, 7
        %v3579 = vsub.s32 0, %v3578
        %v3580 = vrot.slane %v3575, %v3579
        %v3582 = vmul.f32 %v254, %v3580
        %v3583 = vmul.f32 %v255, %v3580
        %v3584 = vmul.f32 %v256, %v3580
        %v3585 = vmul.f32 %v257, %v3580
        %v3586 = vmul.f32 %v258, %v3580
        %v3587 = vmul.f32 %v259, %v3580
        %v3588 = vmul.f32 %v260, %v3580
        %v3589 = vmul.f32 %v261, %v3580
        %v3590 = vmul.f32 %v262, %v3580
        %v3591 = vmul.f32 %v263, %v3580
        %v3592 = vmul.f32 %v264, %v3580
        %v3593 = vmul.f32 %v265, %v3580
        %v3594 = vmul.f32 %v266, %v3580
        %v3595 = vmul.f32 %v267, %v3580
        %v3596 = vmul.f32 %v268, %v3580
        %v3597 = vmul.f32 %v269, %v3580
        %v3614 = vrot.slane %v3582, 6
        %v3615 = vrot.slane %v3583, 6
        %v3616 = vsel %vm3293, %v3614, %v3615
        %v3617 = vrot.slane %v3584, 6
        %v3618 = vrot.slane %v3585, 6
        %v3619 = vsel %vm3293, %v3617, %v3618
        %v3620 = vrot.slane %v3586, 6
        %v3621 = vrot.slane %v3587, 6
        %v3622 = vsel %vm3293, %v3620, %v3621
        %v3623 = vrot.slane %v3588, 6
        %v3624 = vrot.slane %v3589, 6
        %v3625 = vsel %vm3293, %v3623, %v3624
        %v3626 = vrot.slane %v3590, 6
        %v3627 = vrot.slane %v3591, 6
        %v3628 = vsel %vm3293, %v3626, %v3627
        %v3629 = vrot.slane %v3592, 6
        %v3630 = vrot.slane %v3593, 6
        %v3631 = vsel %vm3293, %v3629, %v3630
        %v3632 = vrot.slane %v3594, 6
        %v3633 = vrot.slane %v3595, 6
        %v3634 = vsel %vm3293, %v3632, %v3633
        %v3635 = vrot.slane %v3596, 6
        %v3636 = vrot.slane %v3597, 6
        %v3637 = vsel %vm3293, %v3635, %v3636
        %v3646 = vadd.f32 %v3566, %v3616
        %v3647 = vadd.f32 %v3567, %v3619
        %v3648 = vadd.f32 %v3568, %v3622
        %v3649 = vadd.f32 %v3569, %v3625
        %v3650 = vadd.f32 %v3570, %v3628
        %v3651 = vadd.f32 %v3571, %v3631
        %v3652 = vadd.f32 %v3572, %v3634
        %v3653 = vadd.f32 %v3573, %v3637
        %s3654 = scalar_lea.vmem %s241, 41
        %v3655 = vld [vmem:[%s3654] sm:$0x1]
        %v3657 = vlaneseq
        %v3658 = vshrl.u32 %v3657, 7
        %v3659 = vsub.s32 0, %v3658
        %v3660 = vrot.slane %v3655, %v3659
        %v3662 = vmul.f32 %v256, %v3660
        %v3663 = vmul.f32 %v257, %v3660
        %v3664 = vmul.f32 %v258, %v3660
        %v3665 = vmul.f32 %v259, %v3660
        %v3666 = vmul.f32 %v260, %v3660
        %v3667 = vmul.f32 %v261, %v3660
        %v3668 = vmul.f32 %v262, %v3660
        %v3669 = vmul.f32 %v263, %v3660
        %v3670 = vmul.f32 %v264, %v3660
        %v3671 = vmul.f32 %v265, %v3660
        %v3672 = vmul.f32 %v266, %v3660
        %v3673 = vmul.f32 %v267, %v3660
        %v3674 = vmul.f32 %v268, %v3660
        %v3675 = vmul.f32 %v269, %v3660
        %v3676 = vmul.f32 %v270, %v3660
        %v3677 = vmul.f32 %v271, %v3660
        %v3694 = vrot.slane %v3662, 6
        %v3695 = vrot.slane %v3663, 6
        %v3696 = vsel %vm3293, %v3694, %v3695
        %v3697 = vrot.slane %v3664, 6
        %v3698 = vrot.slane %v3665, 6
        %v3699 = vsel %vm3293, %v3697, %v3698
        %v3700 = vrot.slane %v3666, 6
        %v3701 = vrot.slane %v3667, 6
        %v3702 = vsel %vm3293, %v3700, %v3701
        %v3703 = vrot.slane %v3668, 6
        %v3704 = vrot.slane %v3669, 6
        %v3705 = vsel %vm3293, %v3703, %v3704
        %v3706 = vrot.slane %v3670, 6
        %v3707 = vrot.slane %v3671, 6
        %v3708 = vsel %vm3293, %v3706, %v3707
        %v3709 = vrot.slane %v3672, 6
        %v3710 = vrot.slane %v3673, 6
        %v3711 = vsel %vm3293, %v3709, %v3710
        %v3712 = vrot.slane %v3674, 6
        %v3713 = vrot.slane %v3675, 6
        %v3714 = vsel %vm3293, %v3712, %v3713
        %v3715 = vrot.slane %v3676, 6
        %v3716 = vrot.slane %v3677, 6
        %v3717 = vsel %vm3293, %v3715, %v3716
        %v3726 = vadd.f32 %v3646, %v3696
        %v3727 = vadd.f32 %v3647, %v3699
        %v3728 = vadd.f32 %v3648, %v3702
        %v3729 = vadd.f32 %v3649, %v3705
        %v3730 = vadd.f32 %v3650, %v3708
        %v3731 = vadd.f32 %v3651, %v3711
        %v3732 = vadd.f32 %v3652, %v3714
        %v3733 = vadd.f32 %v3653, %v3717
        %s3734 = scalar_lea.vmem %s241, 48
        %v3735 = vld [vmem:[%s3734] sm:$0x1]
        %v3737 = vlaneseq
        %v3738 = vshrl.u32 %v3737, 7
        %v3739 = vsub.s32 0, %v3738
        %v3740 = vrot.slane %v3735, %v3739
        %v3742 = vmul.f32 %v258, %v3740
        %v3743 = vmul.f32 %v259, %v3740
        %v3744 = vmul.f32 %v260, %v3740
        %v3745 = vmul.f32 %v261, %v3740
        %v3746 = vmul.f32 %v262, %v3740
        %v3747 = vmul.f32 %v263, %v3740
        %v3748 = vmul.f32 %v264, %v3740
        %v3749 = vmul.f32 %v265, %v3740
        %v3750 = vmul.f32 %v266, %v3740
        %v3751 = vmul.f32 %v267, %v3740
        %v3752 = vmul.f32 %v268, %v3740
        %v3753 = vmul.f32 %v269, %v3740
        %v3754 = vmul.f32 %v270, %v3740
        %v3755 = vmul.f32 %v271, %v3740
        %v3756 = vmul.f32 %v272, %v3740
        %v3757 = vmul.f32 %v273, %v3740
        %v3774 = vrot.slane %v3742, 6
        %v3775 = vrot.slane %v3743, 6
        %v3776 = vsel %vm3293, %v3774, %v3775
        %v3777 = vrot.slane %v3744, 6
        %v3778 = vrot.slane %v3745, 6
        %v3779 = vsel %vm3293, %v3777, %v3778
        %v3780 = vrot.slane %v3746, 6
        %v3781 = vrot.slane %v3747, 6
        %v3782 = vsel %vm3293, %v3780, %v3781
        %v3783 = vrot.slane %v3748, 6
        %v3784 = vrot.slane %v3749, 6
        %v3785 = vsel %vm3293, %v3783, %v3784
        %v3786 = vrot.slane %v3750, 6
        %v3787 = vrot.slane %v3751, 6
        %v3788 = vsel %vm3293, %v3786, %v3787
        %v3789 = vrot.slane %v3752, 6
        %v3790 = vrot.slane %v3753, 6
        %v3791 = vsel %vm3293, %v3789, %v3790
        %v3792 = vrot.slane %v3754, 6
        %v3793 = vrot.slane %v3755, 6
        %v3794 = vsel %vm3293, %v3792, %v3793
        %v3795 = vrot.slane %v3756, 6
        %v3796 = vrot.slane %v3757, 6
        %v3797 = vsel %vm3293, %v3795, %v3796
        %v3806 = vadd.f32 %v3726, %v3776
        %v3807 = vadd.f32 %v3727, %v3779
        %v3808 = vadd.f32 %v3728, %v3782
        %v3809 = vadd.f32 %v3729, %v3785
        %v3810 = vadd.f32 %v3730, %v3788
        %v3811 = vadd.f32 %v3731, %v3791
        %v3812 = vadd.f32 %v3732, %v3794
        %v3813 = vadd.f32 %v3733, %v3797
        %3814 = vst [vmem:[%s226] sm:$0xff] %v3806
        %3815 = vst [vmem:[%s226 + $0x8] sm:$0xff] %v3807
        %3816 = vst [vmem:[%s226 + $0x10] sm:$0xff] %v3808
        %3817 = vst [vmem:[%s226 + $0x18] sm:$0xff] %v3809
        %3818 = vst [vmem:[%s226 + $0x20] sm:$0xff] %v3810
        %3819 = vst [vmem:[%s226 + $0x28] sm:$0xff] %v3811
        %3820 = vst [vmem:[%s226 + $0x30] sm:$0xff] %v3812
        %3821 = vst [vmem:[%s226 + $0x38] sm:$0xff] %v3813
        %s3822 = sand.u32 %s130, 1
        %s3823 = scalar_lea.sflag [#allocation3], %s3822
        %s3824 = sand.u32 %s130, 1
        %s3825 = smul.addr %s3824, 64
        %s3826 = scalar_lea.vmem [#allocation2], %s3825
        // Predicated region
        $region33: #{tpu_custom_call.1} parent=31 // pred_check
          %p3827 = pneg %p140
        $region34: #{tpu_custom_call.1} parent=31 // pred_check_branch
          %3829 = sbr.rel (%p3827) target = $region36
        $region35: #{tpu_custom_call.1} parent=31 // pred_region
          %s3830 = smul.u32 8, %s23
          %s3832 = ssub.s32 1024, 1024
          %3833 = vsyncadd %s3823, %s3832
          %s3834 = sadd.s32 %s24, %s3830
          %s3835 = smul.addr %s22, 8
          %s3836 = sadd.s32 %s3834, %s3835
          %s3837 = smul.addr %s3836, 128
          %s3838 = scalar_lea.hbm %s3, %s3837
          %s3839 = sshll.u32 %s3826, 4
          %s3840 = int_to_ptr.vmem [resolvable:$true] %s3839
          %3845 = dma.vmem_to_hbm [thread:$0]  %s3840, 1024, %s3838, %s3823, 128, 128, 8
        $region36: #{tpu_custom_call.1} parent=31 // pred_fallthru
          _
      $region32: #{tpu_custom_call.1} parent=5 // pred_fallthru
        _
      %p3846 = scmp.le.s32.totalorder 2, %s12
      // Predicated region
      $region37: #{tpu_custom_call.1} parent=5 // pred_check
        %p3847 = pneg %p3846
      $region38: #{tpu_custom_call.1} parent=5 // pred_check_branch
        %3849 = sbr.rel (%p3847) target = $region40
      $region39: #{tpu_custom_call.1} parent=5 // pred_region
        %s3850 = ssub.s32 %s12, 2
        // Predicated region
        $region41: #{tpu_custom_call.1} parent=39 // pred_check
          %p3851 = pneg %p146
        $region42: #{tpu_custom_call.1} parent=39 // pred_check_branch
          %3853 = sbr.rel (%p3851) target = $region44
        $region43: #{tpu_custom_call.1} parent=39 // pred_region
          %s3854 = sand.u32 %s131, 1
          %s3855 = scalar_lea.sflag [#allocation3], %s3854
          %s3856 = sand.u32 %s131, 1
          %s3857 = smul.addr %s3856, 64
          %s3858 = scalar_lea.vmem [#allocation2], %s3857
          %3859 = dma.done %s3855, 1024
        $region44: #{tpu_custom_call.1} parent=39 // pred_fallthru
          _
      $region40: #{tpu_custom_call.1} parent=5 // pred_fallthru
        _
    $region6: #{tpu_custom_call.1} parent=1 // loop_footer
      %s16 = sadd.s32 1, %s12
    $region7: #{tpu_custom_call.1} parent=1 // loop_footer_branch
      %11 = sbr.rel target = $region3
    $region8: #{tpu_custom_call.1} parent=1 // loop_exit
      _
    %3860 = vsyncpa [#allocation3], 1
    %s3861 = scalar_lea.sflag [#allocation3], 1
    %3862 = vsyncpa %s3861, 1

</llo_original>
